<compile_context>
chip_gen: v5e
topology: v5e:2x2
jax: 0.10.0
libtpu: 0.0.40
codegen_flags: <defaults>
</compile_context>

<pallas_src>
import jax
import jax.numpy as jnp
from jax import lax
from jax.experimental import pallas as pl
from jax.experimental.pallas import tpu as pltpu


def basic_block_kernel(x_ref, w1_ref, w2_ref, out_ref, s_ref, patch_ref):
    """Fused: conv1 -> relu -> conv2 -> (+x) -> relu, for one batch element.

    x_ref    : (1, H, W, Cp)       channel-padded input block (lane-dense)
    w1_ref   : (9*Cp, Cp)          conv1 weights, im2col layout (tap-major)
    w2_ref   : (9*Cp, Cp)          conv2 weights, im2col layout
    out_ref  : (1, H, W, Cp)       result block (lane-dense)
    s_ref    : (H+2, W+2, Cp)      VMEM scratch: spatially padded activation
    patch_ref: (H*W, 9*Cp)         VMEM scratch: im2col patch matrix
    """
    Hp, Wp, Cp = s_ref.shape
    H, W = Hp - 2, Wp - 2

    # Zero only the 1-pixel border of the padded scratch (the interior is fully
    # rewritten below).  Done every grid step so it stays correct when the
    # batch axis is sharded across TensorCores (per-core scratch).
    s_ref[0:1, :, :] = jnp.zeros((1, Wp, Cp), jnp.float32)
    s_ref[Hp - 1:Hp, :, :] = jnp.zeros((1, Wp, Cp), jnp.float32)
    s_ref[:, 0:1, :] = jnp.zeros((Hp, 1, Cp), jnp.float32)
    s_ref[:, Wp - 1:Wp, :] = jnp.zeros((Hp, 1, Cp), jnp.float32)

    # Stage the input into the padded-scratch interior.
    s_ref[1:1 + H, 1:1 + W, :] = x_ref[0]

    def im2col():
        # Build the (H*W, 9*Cp) patch matrix from the padded activation.
        for k in range(9):
            dy, dx = divmod(k, 3)
            patch_ref[:, k * Cp:(k + 1) * Cp] = (
                s_ref[dy:dy + H, dx:dx + W, :].reshape(H * W, Cp))

    # ---- conv1 (3x3, stride 1, pad 1) as a single MXU matmul + relu ----
    im2col()
    h1 = jnp.maximum(
        jnp.dot(patch_ref[...], w1_ref[...],
                preferred_element_type=jnp.float32),
        0.0)
    # Write relu(conv1) back into the padded-scratch interior for conv2.
    s_ref[1:1 + H, 1:1 + W, :] = h1.reshape(H, W, Cp)

    # ---- conv2 (3x3, stride 1, pad 1) ----
    im2col()
    h2 = jnp.dot(patch_ref[...], w2_ref[...],
                 preferred_element_type=jnp.float32)

    # ---- identity shortcut (aligned read of the original block) + relu ----
    out_ref[0] = jnp.maximum(h2.reshape(H, W, Cp) + x_ref[0], 0.0)


def basic_block_pallas(x_nchw, w1_oihw, w2_oihw):
    """x_nchw: (N, C, H, W) f32; w*_oihw: (C, C, 3, 3) f32 (PyTorch layout)."""
    N, C, H, W = x_nchw.shape
    # Guard the implemented config (stride=1, 3x3, in_planes == planes).
    assert w1_oihw.shape == (C, C, 3, 3), w1_oihw.shape
    assert w2_oihw.shape == (C, C, 3, 3), w2_oihw.shape

    # Pad channels to a multiple of 128 so the lane axis is fully used.
    Cp = ((C + 127) // 128) * 128

    x_nhwc = jnp.transpose(x_nchw, (0, 2, 3, 1))
    xpad = jnp.pad(x_nhwc, ((0, 0), (0, 0), (0, 0), (0, Cp - C)))

    def prep_w(w_oihw):
        # OIHW -> (ky, kx, Cin, Cout) -> channel-pad -> (9*Cp, Cp)
        wt = jnp.transpose(w_oihw, (2, 3, 1, 0))
        wt = jnp.pad(wt, ((0, 0), (0, 0), (0, Cp - C), (0, Cp - C)))
        return wt.reshape(9 * Cp, Cp)

    w1m = prep_w(w1_oihw)
    w2m = prep_w(w2_oihw)

    out_nhwc = pl.pallas_call(
        basic_block_kernel,
        out_shape=jax.ShapeDtypeStruct((N, H, W, Cp), jnp.float32),
        grid_spec=pltpu.PrefetchScalarGridSpec(
            num_scalar_prefetch=0,
            grid=(N,),
            in_specs=[
                pl.BlockSpec((1, H, W, Cp), lambda n: (n, 0, 0, 0)),
                pl.BlockSpec((9 * Cp, Cp), lambda n: (0, 0)),
                pl.BlockSpec((9 * Cp, Cp), lambda n: (0, 0)),
            ],
            out_specs=pl.BlockSpec((1, H, W, Cp), lambda n: (n, 0, 0, 0)),
            scratch_shapes=[
                pltpu.VMEM((H + 2, W + 2, Cp), jnp.float32),
                pltpu.VMEM((H * W, 9 * Cp), jnp.float32),
            ],
        ),
        compiler_params=pltpu.CompilerParams(
            dimension_semantics=("parallel",),
            # ~5 MiB actually used; plenty of headroom, within v7x's 64 MiB.
            vmem_limit_bytes=32 * 1024 * 1024,
        ),
    )(xpad, w1m, w2m)

    return jnp.transpose(out_nhwc[..., :C], (0, 3, 1, 2))


def basic_block_reference(x_nchw, w1_oihw, w2_oihw):
    """Pure-JAX reference matching the PyTorch forward (group_norm=False, stride=1)."""
    dn = lax.conv_dimension_numbers(x_nchw.shape, w1_oihw.shape,
                                    ("NCHW", "OIHW", "NCHW"))
    conv = lambda x, w: lax.conv_general_dilated(
        x, w, window_strides=(1, 1), padding=((1, 1), (1, 1)),
        dimension_numbers=dn)
    out = jnp.maximum(conv(x_nchw, w1_oihw), 0.0)
    out = conv(out, w2_oihw)
    out = out + x_nchw
    return jnp.maximum(out, 0.0)


if __name__ == "__main__":
    N, C, H, W = 2, 4, 16, 16

    key = jax.random.PRNGKey(0)
    kx, k1, k2 = jax.random.split(key, 3)
    x = jax.random.normal(kx, (N, C, H, W), dtype=jnp.float32)
    # Deterministic synthetic conv weights (PyTorch OIHW layout), 3x3, no bias.
    w1 = 0.1 * jax.random.normal(k1, (C, C, 3, 3), dtype=jnp.float32)
    w2 = 0.1 * jax.random.normal(k2, (C, C, 3, 3), dtype=jnp.float32)

    out = jax.block_until_ready(basic_block_pallas(x, w1, w2))
    ref = jax.block_until_ready(basic_block_reference(x, w1, w2))

    assert out.shape == (N, C, H, W), out.shape
    err = float(jnp.max(jnp.abs(out - ref)))
    assert jnp.allclose(out, ref, atol=1e-4, rtol=1e-4), err
    print("KERNEL_OK")
</pallas_src>

<mosaic_0001>
module attributes {stable_mosaic.version = 11 : i64} {
  func.func @basic_block_kernel(%arg0: i32, %arg1: memref<1x16x16x128xf32, #tpu.memory_space<vmem>>, %arg2: memref<1152x128xf32, #tpu.memory_space<vmem>>, %arg3: memref<1152x128xf32, #tpu.memory_space<vmem>>, %arg4: memref<1x16x16x128xf32, #tpu.memory_space<vmem>>, %arg5: memref<18x18x128xf32, #tpu.memory_space<vmem>>, %arg6: memref<256x1152xf32, #tpu.memory_space<vmem>>) attributes {dimension_semantics = [#tpu.dimension_semantics<parallel>], iteration_bounds = array<i64: 2>, scalar_prefetch = 0 : i64, scratch_operands = 2 : i64, tpu.core_type = #tpu.core_type<tc>, window_params = [{transform_indices = @transform_0, window_bounds = array<i64: 1, 16, 16, 128>}, {pipeline_mode = #tpu.pipeline_mode<synchronous>, transform_indices = @transform_1, window_bounds = array<i64: 1152, 128>}, {pipeline_mode = #tpu.pipeline_mode<synchronous>, transform_indices = @transform_2, window_bounds = array<i64: 1152, 128>}, {transform_indices = @transform_3, window_bounds = array<i64: 1, 16, 16, 128>}]} {
    %cst = arith.constant 0.000000e+00 : f32
    %0 = vector.broadcast %cst : f32 to vector<1x18x128xf32>
    %c0 = arith.constant 0 : index
    %c0_0 = arith.constant 0 : index
    %c0_1 = arith.constant 0 : index
    %1 = vector.load %arg5[%c0, %c0_0, %c0_1] : memref<18x18x128xf32, #tpu.memory_space<vmem>>, vector<1x18x128xf32>
    tpu.vector_store %arg5[%c0, %c0_0, %c0_1], %0 {strides = array<i32>} : memref<18x18x128xf32, #tpu.memory_space<vmem>>, vector<1x18x128xf32>,
    %cst_2 = arith.constant 0.000000e+00 : f32
    %2 = vector.broadcast %cst_2 : f32 to vector<1x18x128xf32>
    %c17 = arith.constant 17 : index
    %c0_3 = arith.constant 0 : index
    %c0_4 = arith.constant 0 : index
    %3 = vector.load %arg5[%c17, %c0_3, %c0_4] : memref<18x18x128xf32, #tpu.memory_space<vmem>>, vector<1x18x128xf32>
    tpu.vector_store %arg5[%c17, %c0_3, %c0_4], %2 {strides = array<i32>} : memref<18x18x128xf32, #tpu.memory_space<vmem>>, vector<1x18x128xf32>,
    %cst_5 = arith.constant 0.000000e+00 : f32
    %4 = vector.broadcast %cst_5 : f32 to vector<18x1x128xf32>
    %c0_6 = arith.constant 0 : index
    %c0_7 = arith.constant 0 : index
    %c0_8 = arith.constant 0 : index
    %5 = vector.load %arg5[%c0_6, %c0_7, %c0_8] : memref<18x18x128xf32, #tpu.memory_space<vmem>>, vector<18x1x128xf32>
    tpu.vector_store %arg5[%c0_6, %c0_7, %c0_8], %4 {strides = array<i32>} : memref<18x18x128xf32, #tpu.memory_space<vmem>>, vector<18x1x128xf32>,
    %cst_9 = arith.constant 0.000000e+00 : f32
    %6 = vector.broadcast %cst_9 : f32 to vector<18x1x128xf32>
    %c0_10 = arith.constant 0 : index
    %c17_11 = arith.constant 17 : index
    %c0_12 = arith.constant 0 : index
    %7 = vector.load %arg5[%c0_10, %c17_11, %c0_12] : memref<18x18x128xf32, #tpu.memory_space<vmem>>, vector<18x1x128xf32>
    tpu.vector_store %arg5[%c0_10, %c17_11, %c0_12], %6 {strides = array<i32>} : memref<18x18x128xf32, #tpu.memory_space<vmem>>, vector<18x1x128xf32>,
    %c0_13 = arith.constant 0 : index
    %c0_14 = arith.constant 0 : index
    %c0_15 = arith.constant 0 : index
    %c0_16 = arith.constant 0 : index
    %8 = vector.load %arg1[%c0_13, %c0_14, %c0_15, %c0_16] : memref<1x16x16x128xf32, #tpu.memory_space<vmem>>, vector<1x16x16x128xf32>
    %9 = vector.shape_cast %8 : vector<1x16x16x128xf32> to vector<16x16x128xf32>
    %c1 = arith.constant 1 : index
    %c1_17 = arith.constant 1 : index
    %c0_18 = arith.constant 0 : index
    %10 = vector.load %arg5[%c1, %c1_17, %c0_18] : memref<18x18x128xf32, #tpu.memory_space<vmem>>, vector<16x16x128xf32>
    tpu.vector_store %arg5[%c1, %c1_17, %c0_18], %9 {strides = array<i32>} : memref<18x18x128xf32, #tpu.memory_space<vmem>>, vector<16x16x128xf32>,
    %c0_19 = arith.constant 0 : index
    %c0_20 = arith.constant 0 : index
    %c0_21 = arith.constant 0 : index
    %11 = vector.load %arg5[%c0_19, %c0_20, %c0_21] : memref<18x18x128xf32, #tpu.memory_space<vmem>>, vector<16x16x128xf32>
    %12 = vector.shape_cast %11 : vector<16x16x128xf32> to vector<256x128xf32>
    %c0_22 = arith.constant 0 : index
    %c0_23 = arith.constant 0 : index
    %13 = vector.load %arg6[%c0_22, %c0_23] : memref<256x1152xf32, #tpu.memory_space<vmem>>, vector<256x128xf32>
    tpu.vector_store %arg6[%c0_22, %c0_23], %12 {strides = array<i32>} : memref<256x1152xf32, #tpu.memory_space<vmem>>, vector<256x128xf32>,
    %c0_24 = arith.constant 0 : index
    %c1_25 = arith.constant 1 : index
    %c0_26 = arith.constant 0 : index
    %14 = vector.load %arg5[%c0_24, %c1_25, %c0_26] : memref<18x18x128xf32, #tpu.memory_space<vmem>>, vector<16x16x128xf32>
    %15 = vector.shape_cast %14 : vector<16x16x128xf32> to vector<256x128xf32>
    %c0_27 = arith.constant 0 : index
    %c128 = arith.constant 128 : index
    %16 = vector.load %arg6[%c0_27, %c128] : memref<256x1152xf32, #tpu.memory_space<vmem>>, vector<256x128xf32>
    tpu.vector_store %arg6[%c0_27, %c128], %15 {strides = array<i32>} : memref<256x1152xf32, #tpu.memory_space<vmem>>, vector<256x128xf32>,
    %c0_28 = arith.constant 0 : index
    %c2 = arith.constant 2 : index
    %c0_29 = arith.constant 0 : index
    %17 = vector.load %arg5[%c0_28, %c2, %c0_29] : memref<18x18x128xf32, #tpu.memory_space<vmem>>, vector<16x16x128xf32>
    %18 = vector.shape_cast %17 : vector<16x16x128xf32> to vector<256x128xf32>
    %c0_30 = arith.constant 0 : index
    %c256 = arith.constant 256 : index
    %19 = vector.load %arg6[%c0_30, %c256] : memref<256x1152xf32, #tpu.memory_space<vmem>>, vector<256x128xf32>
    tpu.vector_store %arg6[%c0_30, %c256], %18 {strides = array<i32>} : memref<256x1152xf32, #tpu.memory_space<vmem>>, vector<256x128xf32>,
    %c1_31 = arith.constant 1 : index
    %c0_32 = arith.constant 0 : index
    %c0_33 = arith.constant 0 : index
    %20 = vector.load %arg5[%c1_31, %c0_32, %c0_33] : memref<18x18x128xf32, #tpu.memory_space<vmem>>, vector<16x16x128xf32>
    %21 = vector.shape_cast %20 : vector<16x16x128xf32> to vector<256x128xf32>
    %c0_34 = arith.constant 0 : index
    %c384 = arith.constant 384 : index
    %22 = vector.load %arg6[%c0_34, %c384] : memref<256x1152xf32, #tpu.memory_space<vmem>>, vector<256x128xf32>
    tpu.vector_store %arg6[%c0_34, %c384], %21 {strides = array<i32>} : memref<256x1152xf32, #tpu.memory_space<vmem>>, vector<256x128xf32>,
    %c1_35 = arith.constant 1 : index
    %c1_36 = arith.constant 1 : index
    %c0_37 = arith.constant 0 : index
    %23 = vector.load %arg5[%c1_35, %c1_36, %c0_37] : memref<18x18x128xf32, #tpu.memory_space<vmem>>, vector<16x16x128xf32>
    %24 = vector.shape_cast %23 : vector<16x16x128xf32> to vector<256x128xf32>
    %c0_38 = arith.constant 0 : index
    %c512 = arith.constant 512 : index
    %25 = vector.load %arg6[%c0_38, %c512] : memref<256x1152xf32, #tpu.memory_space<vmem>>, vector<256x128xf32>
    tpu.vector_store %arg6[%c0_38, %c512], %24 {strides = array<i32>} : memref<256x1152xf32, #tpu.memory_space<vmem>>, vector<256x128xf32>,
    %c1_39 = arith.constant 1 : index
    %c2_40 = arith.constant 2 : index
    %c0_41 = arith.constant 0 : index
    %26 = vector.load %arg5[%c1_39, %c2_40, %c0_41] : memref<18x18x128xf32, #tpu.memory_space<vmem>>, vector<16x16x128xf32>
    %27 = vector.shape_cast %26 : vector<16x16x128xf32> to vector<256x128xf32>
    %c0_42 = arith.constant 0 : index
    %c640 = arith.constant 640 : index
    %28 = vector.load %arg6[%c0_42, %c640] : memref<256x1152xf32, #tpu.memory_space<vmem>>, vector<256x128xf32>
    tpu.vector_store %arg6[%c0_42, %c640], %27 {strides = array<i32>} : memref<256x1152xf32, #tpu.memory_space<vmem>>, vector<256x128xf32>,
    %c2_43 = arith.constant 2 : index
    %c0_44 = arith.constant 0 : index
    %c0_45 = arith.constant 0 : index
    %29 = vector.load %arg5[%c2_43, %c0_44, %c0_45] : memref<18x18x128xf32, #tpu.memory_space<vmem>>, vector<16x16x128xf32>
    %30 = vector.shape_cast %29 : vector<16x16x128xf32> to vector<256x128xf32>
    %c0_46 = arith.constant 0 : index
    %c768 = arith.constant 768 : index
    %31 = vector.load %arg6[%c0_46, %c768] : memref<256x1152xf32, #tpu.memory_space<vmem>>, vector<256x128xf32>
    tpu.vector_store %arg6[%c0_46, %c768], %30 {strides = array<i32>} : memref<256x1152xf32, #tpu.memory_space<vmem>>, vector<256x128xf32>,
    %c2_47 = arith.constant 2 : index
    %c1_48 = arith.constant 1 : index
    %c0_49 = arith.constant 0 : index
    %32 = vector.load %arg5[%c2_47, %c1_48, %c0_49] : memref<18x18x128xf32, #tpu.memory_space<vmem>>, vector<16x16x128xf32>
    %33 = vector.shape_cast %32 : vector<16x16x128xf32> to vector<256x128xf32>
    %c0_50 = arith.constant 0 : index
    %c896 = arith.constant 896 : index
    %34 = vector.load %arg6[%c0_50, %c896] : memref<256x1152xf32, #tpu.memory_space<vmem>>, vector<256x128xf32>
    tpu.vector_store %arg6[%c0_50, %c896], %33 {strides = array<i32>} : memref<256x1152xf32, #tpu.memory_space<vmem>>, vector<256x128xf32>,
    %c2_51 = arith.constant 2 : index
    %c2_52 = arith.constant 2 : index
    %c0_53 = arith.constant 0 : index
    %35 = vector.load %arg5[%c2_51, %c2_52, %c0_53] : memref<18x18x128xf32, #tpu.memory_space<vmem>>, vector<16x16x128xf32>
    %36 = vector.shape_cast %35 : vector<16x16x128xf32> to vector<256x128xf32>
    %c0_54 = arith.constant 0 : index
    %c1024 = arith.constant 1024 : index
    %37 = vector.load %arg6[%c0_54, %c1024] : memref<256x1152xf32, #tpu.memory_space<vmem>>, vector<256x128xf32>
    tpu.vector_store %arg6[%c0_54, %c1024], %36 {strides = array<i32>} : memref<256x1152xf32, #tpu.memory_space<vmem>>, vector<256x128xf32>,
    %c0_55 = arith.constant 0 : index
    %c0_56 = arith.constant 0 : index
    %38 = vector.load %arg6[%c0_55, %c0_56] : memref<256x1152xf32, #tpu.memory_space<vmem>>, vector<256x1152xf32>
    %c0_57 = arith.constant 0 : index
    %c0_58 = arith.constant 0 : index
    %39 = vector.load %arg2[%c0_57, %c0_58] : memref<1152x128xf32, #tpu.memory_space<vmem>>, vector<1152x128xf32>
    %cst_59 = arith.constant dense<0.000000e+00> : vector<256x128xf32>
    %40 = tpu.matmul %38, %39, %cst_59 {dimension_numbers = #tpu.dot_dimension_numbers<[1], [0], [0], [1], [0, 0, 1, 1], [], []>} : vector<256x1152xf32>, vector<1152x128xf32>, vector<256x128xf32> -> vector<256x128xf32>
    %cst_60 = arith.constant 0.000000e+00 : f32
    %41 = vector.broadcast %cst_60 : f32 to vector<256x128xf32>
    %42 = arith.maximumf %40, %41 : vector<256x128xf32>
    %43 = vector.shape_cast %42 : vector<256x128xf32> to vector<16x16x128xf32>
    %c1_61 = arith.constant 1 : index
    %c1_62 = arith.constant 1 : index
    %c0_63 = arith.constant 0 : index
    %44 = vector.load %arg5[%c1_61, %c1_62, %c0_63] : memref<18x18x128xf32, #tpu.memory_space<vmem>>, vector<16x16x128xf32>
    tpu.vector_store %arg5[%c1_61, %c1_62, %c0_63], %43 {strides = array<i32>} : memref<18x18x128xf32, #tpu.memory_space<vmem>>, vector<16x16x128xf32>,
    %c0_64 = arith.constant 0 : index
    %c0_65 = arith.constant 0 : index
    %c0_66 = arith.constant 0 : index
    %45 = vector.load %arg5[%c0_64, %c0_65, %c0_66] : memref<18x18x128xf32, #tpu.memory_space<vmem>>, vector<16x16x128xf32>
    %46 = vector.shape_cast %45 : vector<16x16x128xf32> to vector<256x128xf32>
    %c0_67 = arith.constant 0 : index
    %c0_68 = arith.constant 0 : index
    %47 = vector.load %arg6[%c0_67, %c0_68] : memref<256x1152xf32, #tpu.memory_space<vmem>>, vector<256x128xf32>
    tpu.vector_store %arg6[%c0_67, %c0_68], %46 {strides = array<i32>} : memref<256x1152xf32, #tpu.memory_space<vmem>>, vector<256x128xf32>,
    %c0_69 = arith.constant 0 : index
    %c1_70 = arith.constant 1 : index
    %c0_71 = arith.constant 0 : index
    %48 = vector.load %arg5[%c0_69, %c1_70, %c0_71] : memref<18x18x128xf32, #tpu.memory_space<vmem>>, vector<16x16x128xf32>
    %49 = vector.shape_cast %48 : vector<16x16x128xf32> to vector<256x128xf32>
    %c0_72 = arith.constant 0 : index
    %c128_73 = arith.constant 128 : index
    %50 = vector.load %arg6[%c0_72, %c128_73] : memref<256x1152xf32, #tpu.memory_space<vmem>>, vector<256x128xf32>
    tpu.vector_store %arg6[%c0_72, %c128_73], %49 {strides = array<i32>} : memref<256x1152xf32, #tpu.memory_space<vmem>>, vector<256x128xf32>,
    %c0_74 = arith.constant 0 : index
    %c2_75 = arith.constant 2 : index
    %c0_76 = arith.constant 0 : index
    %51 = vector.load %arg5[%c0_74, %c2_75, %c0_76] : memref<18x18x128xf32, #tpu.memory_space<vmem>>, vector<16x16x128xf32>
    %52 = vector.shape_cast %51 : vector<16x16x128xf32> to vector<256x128xf32>
    %c0_77 = arith.constant 0 : index
    %c256_78 = arith.constant 256 : index
    %53 = vector.load %arg6[%c0_77, %c256_78] : memref<256x1152xf32, #tpu.memory_space<vmem>>, vector<256x128xf32>
    tpu.vector_store %arg6[%c0_77, %c256_78], %52 {strides = array<i32>} : memref<256x1152xf32, #tpu.memory_space<vmem>>, vector<256x128xf32>,
    %c1_79 = arith.constant 1 : index
    %c0_80 = arith.constant 0 : index
    %c0_81 = arith.constant 0 : index
    %54 = vector.load %arg5[%c1_79, %c0_80, %c0_81] : memref<18x18x128xf32, #tpu.memory_space<vmem>>, vector<16x16x128xf32>
    %55 = vector.shape_cast %54 : vector<16x16x128xf32> to vector<256x128xf32>
    %c0_82 = arith.constant 0 : index
    %c384_83 = arith.constant 384 : index
    %56 = vector.load %arg6[%c0_82, %c384_83] : memref<256x1152xf32, #tpu.memory_space<vmem>>, vector<256x128xf32>
    tpu.vector_store %arg6[%c0_82, %c384_83], %55 {strides = array<i32>} : memref<256x1152xf32, #tpu.memory_space<vmem>>, vector<256x128xf32>,
    %c1_84 = arith.constant 1 : index
    %c1_85 = arith.constant 1 : index
    %c0_86 = arith.constant 0 : index
    %57 = vector.load %arg5[%c1_84, %c1_85, %c0_86] : memref<18x18x128xf32, #tpu.memory_space<vmem>>, vector<16x16x128xf32>
    %58 = vector.shape_cast %57 : vector<16x16x128xf32> to vector<256x128xf32>
    %c0_87 = arith.constant 0 : index
    %c512_88 = arith.constant 512 : index
    %59 = vector.load %arg6[%c0_87, %c512_88] : memref<256x1152xf32, #tpu.memory_space<vmem>>, vector<256x128xf32>
    tpu.vector_store %arg6[%c0_87, %c512_88], %58 {strides = array<i32>} : memref<256x1152xf32, #tpu.memory_space<vmem>>, vector<256x128xf32>,
    %c1_89 = arith.constant 1 : index
    %c2_90 = arith.constant 2 : index
    %c0_91 = arith.constant 0 : index
    %60 = vector.load %arg5[%c1_89, %c2_90, %c0_91] : memref<18x18x128xf32, #tpu.memory_space<vmem>>, vector<16x16x128xf32>
    %61 = vector.shape_cast %60 : vector<16x16x128xf32> to vector<256x128xf32>
    %c0_92 = arith.constant 0 : index
    %c640_93 = arith.constant 640 : index
    %62 = vector.load %arg6[%c0_92, %c640_93] : memref<256x1152xf32, #tpu.memory_space<vmem>>, vector<256x128xf32>
    tpu.vector_store %arg6[%c0_92, %c640_93], %61 {strides = array<i32>} : memref<256x1152xf32, #tpu.memory_space<vmem>>, vector<256x128xf32>,
    %c2_94 = arith.constant 2 : index
    %c0_95 = arith.constant 0 : index
    %c0_96 = arith.constant 0 : index
    %63 = vector.load %arg5[%c2_94, %c0_95, %c0_96] : memref<18x18x128xf32, #tpu.memory_space<vmem>>, vector<16x16x128xf32>
    %64 = vector.shape_cast %63 : vector<16x16x128xf32> to vector<256x128xf32>
    %c0_97 = arith.constant 0 : index
    %c768_98 = arith.constant 768 : index
    %65 = vector.load %arg6[%c0_97, %c768_98] : memref<256x1152xf32, #tpu.memory_space<vmem>>, vector<256x128xf32>
    tpu.vector_store %arg6[%c0_97, %c768_98], %64 {strides = array<i32>} : memref<256x1152xf32, #tpu.memory_space<vmem>>, vector<256x128xf32>,
    %c2_99 = arith.constant 2 : index
    %c1_100 = arith.constant 1 : index
    %c0_101 = arith.constant 0 : index
    %66 = vector.load %arg5[%c2_99, %c1_100, %c0_101] : memref<18x18x128xf32, #tpu.memory_space<vmem>>, vector<16x16x128xf32>
    %67 = vector.shape_cast %66 : vector<16x16x128xf32> to vector<256x128xf32>
    %c0_102 = arith.constant 0 : index
    %c896_103 = arith.constant 896 : index
    %68 = vector.load %arg6[%c0_102, %c896_103] : memref<256x1152xf32, #tpu.memory_space<vmem>>, vector<256x128xf32>
    tpu.vector_store %arg6[%c0_102, %c896_103], %67 {strides = array<i32>} : memref<256x1152xf32, #tpu.memory_space<vmem>>, vector<256x128xf32>,
    %c2_104 = arith.constant 2 : index
    %c2_105 = arith.constant 2 : index
    %c0_106 = arith.constant 0 : index
    %69 = vector.load %arg5[%c2_104, %c2_105, %c0_106] : memref<18x18x128xf32, #tpu.memory_space<vmem>>, vector<16x16x128xf32>
    %70 = vector.shape_cast %69 : vector<16x16x128xf32> to vector<256x128xf32>
    %c0_107 = arith.constant 0 : index
    %c1024_108 = arith.constant 1024 : index
    %71 = vector.load %arg6[%c0_107, %c1024_108] : memref<256x1152xf32, #tpu.memory_space<vmem>>, vector<256x128xf32>
    tpu.vector_store %arg6[%c0_107, %c1024_108], %70 {strides = array<i32>} : memref<256x1152xf32, #tpu.memory_space<vmem>>, vector<256x128xf32>,
    %c0_109 = arith.constant 0 : index
    %c0_110 = arith.constant 0 : index
    %72 = vector.load %arg6[%c0_109, %c0_110] : memref<256x1152xf32, #tpu.memory_space<vmem>>, vector<256x1152xf32>
    %c0_111 = arith.constant 0 : index
    %c0_112 = arith.constant 0 : index
    %73 = vector.load %arg3[%c0_111, %c0_112] : memref<1152x128xf32, #tpu.memory_space<vmem>>, vector<1152x128xf32>
    %cst_113 = arith.constant dense<0.000000e+00> : vector<256x128xf32>
    %74 = tpu.matmul %72, %73, %cst_113 {dimension_numbers = #tpu.dot_dimension_numbers<[1], [0], [0], [1], [0, 0, 1, 1], [], []>} : vector<256x1152xf32>, vector<1152x128xf32>, vector<256x128xf32> -> vector<256x128xf32>
    %75 = vector.shape_cast %74 : vector<256x128xf32> to vector<16x16x128xf32>
    %c0_114 = arith.constant 0 : index
    %c0_115 = arith.constant 0 : index
    %c0_116 = arith.constant 0 : index
    %c0_117 = arith.constant 0 : index
    %76 = vector.load %arg1[%c0_114, %c0_115, %c0_116, %c0_117] : memref<1x16x16x128xf32, #tpu.memory_space<vmem>>, vector<1x16x16x128xf32>
    %77 = vector.shape_cast %76 : vector<1x16x16x128xf32> to vector<16x16x128xf32>
    %78 = arith.addf %75, %77 : vector<16x16x128xf32>
    %cst_118 = arith.constant 0.000000e+00 : f32
    %79 = vector.broadcast %cst_118 : f32 to vector<16x16x128xf32>
    %80 = arith.maximumf %78, %79 : vector<16x16x128xf32>
    %c0_119 = arith.constant 0 : index
    %c0_120 = arith.constant 0 : index
    %c0_121 = arith.constant 0 : index
    %c0_122 = arith.constant 0 : index
    %81 = vector.load %arg4[%c0_119, %c0_120, %c0_121, %c0_122] : memref<1x16x16x128xf32, #tpu.memory_space<vmem>>, vector<1x16x16x128xf32>
    %82 = vector.shape_cast %81 : vector<1x16x16x128xf32> to vector<16x16x128xf32>
    %83 = vector.shape_cast %80 : vector<16x16x128xf32> to vector<1x16x16x128xf32>
    tpu.vector_store %arg4[%c0_119, %c0_120, %c0_121, %c0_122], %83 {strides = array<i32>} : memref<1x16x16x128xf32, #tpu.memory_space<vmem>>, vector<1x16x16x128xf32>,
    return
  }
  func.func @transform_0(%arg0: i32) -> (i32, i32, i32, i32) {
    %c0_i32 = arith.constant 0 : i32
    %c0_i32_0 = arith.constant 0 : i32
    %c0_i32_1 = arith.constant 0 : i32
    %c0_i32_2 = arith.constant 0 : i32
    return %arg0, %c0_i32, %c0_i32_0, %c0_i32_1 : i32, i32, i32, i32
  }
  func.func @transform_1(%arg0: i32) -> (i32, i32) {
    %c0_i32 = arith.constant 0 : i32
    %c0_i32_0 = arith.constant 0 : i32
    %c0_i32_1 = arith.constant 0 : i32
    return %c0_i32, %c0_i32_0 : i32, i32
  }
  func.func @transform_2(%arg0: i32) -> (i32, i32) {
    %c0_i32 = arith.constant 0 : i32
    %c0_i32_0 = arith.constant 0 : i32
    %c0_i32_1 = arith.constant 0 : i32
    return %c0_i32, %c0_i32_0 : i32, i32
  }
  func.func @transform_3(%arg0: i32) -> (i32, i32, i32, i32) {
    %c0_i32 = arith.constant 0 : i32
    %c0_i32_0 = arith.constant 0 : i32
    %c0_i32_1 = arith.constant 0 : i32
    %c0_i32_2 = arith.constant 0 : i32
    return %arg0, %c0_i32, %c0_i32_0, %c0_i32_1 : i32, i32, i32, i32
  }
}

</mosaic_0001>

<llo_original>
// kernel: tpu_custom_call.1
$region0: #{tpu_custom_call.1}
  #allocation0 [shape = 'u32[]', space=smem, size = 0x4, offset = 0x4, fixed_abs, tag = 'smem constant byte address 0x4 - core index']
  #allocation1 [shape = 'u32[72,128]{1,0:T(1,128)}', space=vmem, size = 0x9000, scoped, tag = 'internal scratch']
  #allocation2 [shape = 'f32[18,18,128]{2,1,0:T(8,128)}', space=vmem, size = 0x36000, scoped, tag = 'scratch operand']
  #allocation3 [shape = 'f32[256,1152]{1,0:T(8,128)}', space=vmem, size = 0x120000, scoped, tag = 'scratch operand']
  %s0 = inlined_call_operand.hbm [shape: f32[2,16,16,128], index: 0, kind: input, shape index: {}]
  %s1 = inlined_call_operand.hbm [shape: f32[1152,128], index: 1, kind: input, shape index: {}]
  %s2 = inlined_call_operand.hbm [shape: f32[1152,128], index: 2, kind: input, shape index: {}]
  %s3 = inlined_call_operand.hbm [shape: f32[2,16,16,128], index: 3, kind: output, shape index: {}]
  %s4 = sld [smem:[#allocation0]]
  $region57: #{tpu_custom_call.1} parent=0
    _
  %s6 = ssub.s32 1, %s4
  %s7 = scalar_select 0, %s6, %s4
  $region1: #{tpu_custom_call.1} parent=0
    #allocation4 [shape = 'u8[262144]{0}', space=vmem, size = 0x40000, scoped, tag = 'input window, operand 0']
    #allocation5 [shape = 's32[2]{0}', space=sflag, size = 0x8, scoped, tag = 'scoped memory for tpu_custom_call.1']
    #allocation6 [shape = 's32[2]{0}', space=sflag, size = 0x8, scoped, tag = 'scoped memory for tpu_custom_call.1']
    #allocation7 [shape = 'u8[589824]{0}', space=vmem, size = 0x90000, scoped, tag = 'input window, operand 1, single buffered']
    #allocation8 [shape = 's32[1]{0}', space=sflag, size = 0x4, scoped, tag = 'scoped memory for tpu_custom_call.1']
    #allocation9 [shape = 'u8[589824]{0}', space=vmem, size = 0x90000, scoped, tag = 'input window, operand 2, single buffered']
    #allocation10 [shape = 'u8[262144]{0}', space=vmem, size = 0x40000, scoped, tag = 'output window, operand 0']
    %8 = vsyncpa [#allocation5], 0
    %s9 = scalar_lea.sflag [#allocation5], 1
    %10 = vsyncpa %s9, 0
    %11 = vsyncpa [#allocation8], 0
    %12 = vsyncpa [#allocation6], 0
    %s13 = scalar_lea.sflag [#allocation6], 1
    %14 = vsyncpa %s13, 0
    loop: start=0, step=1, limit=4
    $region2: #{tpu_custom_call.1} parent=1 // loop_pre_header
      _
    $region3: #{tpu_custom_call.1} parent=1 // loop_header
      %s16 = sphi 0, %s20
      %p17 = scmp.ge.s32.totalorder %s16, 4
      %s26 = sphi 0, %s28
      %s29 = sphi 0, %s26
      %s30 = sphi 0, %s29
      %s46 = sphi 0, %s30
      %s50 = sphi 0, %s50
      %s52 = sphi 0, %s50
      %s53 = sphi 0, %s52
      %s67 = sphi 0, %s53
      %s71 = sphi 0, %s71
      %s73 = sphi 0, %s71
      %s74 = sphi 0, %s73
      %s88 = sphi 0, %s74
      %s94 = sphi 0, %s96
      %s97 = sphi 0, %s94
      %s98 = sphi 0, %s97
      %s114 = sphi 0, %s98
    $region4: #{tpu_custom_call.1} parent=1 // loop_header_branch
      %19 = sbr.rel (%p17) target = $region8
    $region5: #{tpu_custom_call.1} parent=1 // loop_body
      %s21 = ssub.s32 %s16, 1
      %s22 = ssub.s32 %s16, 2
      %s23 = sadd.s32 %s16, 1
      %s24 = ssub.s32 %s16, %s23
      %p25 = scmp.eq.s32.totalorder %s24, 0
      %s27 = sadd.s32 %s26, 1
      %s28 = scalar_select %p25, %s26, %s27
      %p31 = pneg %p25
      %p32 = scmp.eq.s32.totalorder %s16, 1
      %p33 = por %p31, %p32
      %p34 = scmp.ne.s32.totalorder %s26, %s29
      %p35 = scmp.eq.s32.totalorder %s16, 0
      %p36 = por %p34, %p35
      %p37 = scmp.ne.s32.totalorder %s26, %s29
      %p38 = scmp.eq.s32.totalorder %s21, 1
      %p39 = por %p37, %p38
      %p40 = scmp.ne.s32.totalorder %s29, %s30
      %p41 = scmp.eq.s32.totalorder %s21, 0
      %p42 = por %p40, %p41
      %p43 = scmp.ne.s32.totalorder %s29, %s30
      %p44 = scmp.eq.s32.totalorder %s22, 1
      %p45 = por %p43, %p44
      %p47 = scmp.ne.s32.totalorder %s30, %s46
      %p48 = scmp.eq.s32.totalorder %s22, 0
      %p49 = por %p47, %p48
      %s51 = sadd.s32 %s50, 1
      %p54 = scmp.eq.s32.totalorder %s16, 1
      %p55 = scmp.ne.s32.totalorder %s50, %s52
      %p56 = scmp.eq.s32.totalorder %s16, 0
      %p57 = por %p55, %p56
      %p58 = scmp.ne.s32.totalorder %s50, %s52
      %p59 = scmp.eq.s32.totalorder %s21, 1
      %p60 = por %p58, %p59
      %p61 = scmp.ne.s32.totalorder %s52, %s53
      %p62 = scmp.eq.s32.totalorder %s21, 0
      %p63 = por %p61, %p62
      %p64 = scmp.ne.s32.totalorder %s52, %s53
      %p65 = scmp.eq.s32.totalorder %s22, 1
      %p66 = por %p64, %p65
      %p68 = scmp.ne.s32.totalorder %s53, %s67
      %p69 = scmp.eq.s32.totalorder %s22, 0
      %p70 = por %p68, %p69
      %s72 = sadd.s32 %s71, 1
      %p75 = scmp.eq.s32.totalorder %s16, 1
      %p76 = scmp.ne.s32.totalorder %s71, %s73
      %p77 = scmp.eq.s32.totalorder %s16, 0
      %p78 = por %p76, %p77
      %p79 = scmp.ne.s32.totalorder %s71, %s73
      %p80 = scmp.eq.s32.totalorder %s21, 1
      %p81 = por %p79, %p80
      %p82 = scmp.ne.s32.totalorder %s73, %s74
      %p83 = scmp.eq.s32.totalorder %s21, 0
      %p84 = por %p82, %p83
      %p85 = scmp.ne.s32.totalorder %s73, %s74
      %p86 = scmp.eq.s32.totalorder %s22, 1
      %p87 = por %p85, %p86
      %p89 = scmp.ne.s32.totalorder %s74, %s88
      %p90 = scmp.eq.s32.totalorder %s22, 0
      %p91 = por %p89, %p90
      %s92 = ssub.s32 %s16, %s23
      %p93 = scmp.eq.s32.totalorder %s92, 0
      %s95 = sadd.s32 %s94, 1
      %s96 = scalar_select %p93, %s94, %s95
      %p99 = pneg %p93
      %p100 = scmp.eq.s32.totalorder %s16, 1
      %p101 = por %p99, %p100
      %p102 = scmp.ne.s32.totalorder %s94, %s97
      %p103 = scmp.eq.s32.totalorder %s16, 0
      %p104 = por %p102, %p103
      %p105 = scmp.ne.s32.totalorder %s94, %s97
      %p106 = scmp.eq.s32.totalorder %s21, 1
      %p107 = por %p105, %p106
      %p108 = scmp.ne.s32.totalorder %s97, %s98
      %p109 = scmp.eq.s32.totalorder %s21, 0
      %p110 = por %p108, %p109
      %p111 = scmp.ne.s32.totalorder %s97, %s98
      %p112 = scmp.eq.s32.totalorder %s22, 1
      %p113 = por %p111, %p112
      %p115 = scmp.ne.s32.totalorder %s98, %s114
      %p116 = scmp.eq.s32.totalorder %s22, 0
      %p117 = por %p115, %p116
      %p118 = scmp.le.s32.totalorder 1, %s16
      %p119 = scmp.lt.s32.totalorder %s16, 3
      %p120 = pnand %p118, %p119
      %p121 = pneg %p120
      // Predicated region
      $region9: #{tpu_custom_call.1} parent=5 // pred_check
        _
      $region10: #{tpu_custom_call.1} parent=5 // pred_check_branch
        %123 = sbr.rel (%p120) target = $region12
      $region11: #{tpu_custom_call.1} parent=5 // pred_region
        %s124 = ssub.s32 %s16, 1
        // Predicated region
        $region13: #{tpu_custom_call.1} parent=11 // pred_check
          %p125 = pneg %p63
        $region14: #{tpu_custom_call.1} parent=11 // pred_check_branch
          %127 = sbr.rel (%p125) target = $region16
        $region15: #{tpu_custom_call.1} parent=11 // pred_region
          %129 = vsyncadd [#allocation8], 0
          %s130 = sshll.u32 %s1, 4
          %s131 = int_to_ptr.hbm [resolvable:$true] %s130
          %s132 = sshll.u32 [#allocation7], 4
          %s133 = int_to_ptr.vmem [resolvable:$true] %s132
          %138 = dma.hbm_to_vmem [thread:$0]  %s131, 18432, %s133, [#allocation8], 128, 128, 8
        $region16: #{tpu_custom_call.1} parent=11 // pred_fallthru
          _
        // Predicated region
        $region17: #{tpu_custom_call.1} parent=11 // pred_check
          %p139 = pneg %p84
        $region18: #{tpu_custom_call.1} parent=11 // pred_check_branch
          %141 = sbr.rel (%p139) target = $region20
        $region19: #{tpu_custom_call.1} parent=11 // pred_region
          %143 = vsyncadd [#allocation8], 0
          %s144 = sshll.u32 %s2, 4
          %s145 = int_to_ptr.hbm [resolvable:$true] %s144
          %s146 = sshll.u32 [#allocation9], 4
          %s147 = int_to_ptr.vmem [resolvable:$true] %s146
          %152 = dma.hbm_to_vmem [thread:$0]  %s145, 18432, %s147, [#allocation8], 128, 128, 8
        $region20: #{tpu_custom_call.1} parent=11 // pred_fallthru
          _
      $region12: #{tpu_custom_call.1} parent=5 // pred_fallthru
        _
      %p153 = scmp.lt.s32.totalorder %s16, 2
      // Predicated region
      $region21: #{tpu_custom_call.1} parent=5 // pred_check
        %p154 = pneg %p153
      $region22: #{tpu_custom_call.1} parent=5 // pred_check_branch
        %156 = sbr.rel (%p154) target = $region24
      $region23: #{tpu_custom_call.1} parent=5 // pred_region
        // Predicated region
        $region25: #{tpu_custom_call.1} parent=23 // pred_check
          %p157 = pneg %p36
        $region26: #{tpu_custom_call.1} parent=23 // pred_check_branch
          %159 = sbr.rel (%p157) target = $region28
        $region27: #{tpu_custom_call.1} parent=23 // pred_region
          %s160 = sand.u32 %s26, 1
          %s161 = scalar_lea.sflag [#allocation5], %s160
          %s162 = sand.u32 %s26, 1
          %s163 = smul.addr %s162, 256
          %s164 = scalar_lea.vmem [#allocation4], %s163
          %166 = vsyncadd %s161, 0
          %s167 = smul.addr %s16, 32
          %s168 = smul.addr %s167, 8
          %s169 = scalar_lea.hbm %s0, %s168
          %s170 = sshll.u32 %s169, 4
          %s171 = int_to_ptr.hbm [resolvable:$true] %s170
          %s172 = sshll.u32 %s164, 4
          %s173 = int_to_ptr.vmem [resolvable:$true] %s172
          %178 = dma.hbm_to_vmem [thread:$0]  %s171, 4096, %s173, %s161, 128, 128, 8
        $region28: #{tpu_custom_call.1} parent=23 // pred_fallthru
          _
      $region24: #{tpu_custom_call.1} parent=5 // pred_fallthru
        _
      %p179 = scmp.le.s32.totalorder 1, %s16
      %p180 = scmp.lt.s32.totalorder %s16, 3
      %p181 = pnand %p179, %p180
      %p182 = pneg %p181
      // Predicated region
      $region29: #{tpu_custom_call.1} parent=5 // pred_check
        _
      $region30: #{tpu_custom_call.1} parent=5 // pred_check_branch
        %184 = sbr.rel (%p181) target = $region32
      $region31: #{tpu_custom_call.1} parent=5 // pred_region
        %s185 = ssub.s32 %s16, 1
        %s186 = sand.u32 %s29, 1
        %s187 = scalar_lea.sflag [#allocation5], %s186
        %s188 = sand.u32 %s29, 1
        %s189 = smul.addr %s188, 256
        %s190 = scalar_lea.vmem [#allocation4], %s189
        // Predicated region
        $region33: #{tpu_custom_call.1} parent=31 // pred_check
          %p191 = pneg %p42
        $region34: #{tpu_custom_call.1} parent=31 // pred_check_branch
          %193 = sbr.rel (%p191) target = $region36
        $region35: #{tpu_custom_call.1} parent=31 // pred_region
          %195 = dma.done %s187, 4096
        $region36: #{tpu_custom_call.1} parent=31 // pred_fallthru
          _
        // Predicated region
        $region37: #{tpu_custom_call.1} parent=31 // pred_check
          %p196 = pneg %p63
        $region38: #{tpu_custom_call.1} parent=31 // pred_check_branch
          %198 = sbr.rel (%p196) target = $region40
        $region39: #{tpu_custom_call.1} parent=31 // pred_region
          %200 = dma.done [#allocation8], 18432
        $region40: #{tpu_custom_call.1} parent=31 // pred_fallthru
          _
        // Predicated region
        $region41: #{tpu_custom_call.1} parent=31 // pred_check
          %p201 = pneg %p84
        $region42: #{tpu_custom_call.1} parent=31 // pred_check_branch
          %203 = sbr.rel (%p201) target = $region44
        $region43: #{tpu_custom_call.1} parent=31 // pred_region
          %205 = dma.done [#allocation8], 18432
        $region44: #{tpu_custom_call.1} parent=31 // pred_fallthru
          _
        %s206 = sand.u32 %s29, 1
        %s207 = scalar_lea.sflag [#allocation5], %s206
        %s208 = sand.u32 %s29, 1
        %s209 = smul.addr %s208, 256
        %s210 = scalar_lea.vmem [#allocation4], %s209
        %p211 = pneg %p42
        %p212 = pneg %p39
        %p213 = pneg %p63
        %p214 = pneg %p60
        %p215 = pneg %p84
        %p216 = pneg %p81
        %p217 = pneg %p110
        %p218 = pneg %p107
        %s219 = sand.u32 %s97, 1
        %s220 = scalar_lea.sflag [#allocation6], %s219
        %s221 = sand.u32 %s97, 1
        %s222 = smul.addr %s221, 256
        %s223 = scalar_lea.vmem [#allocation10], %s222
        %224 = vst [vmem:[#allocation2] sm:$0xff] 0.0
        %225 = vst [vmem:[#allocation2 + $0x8] sm:$0xff] 0.0
        %226 = vst [vmem:[#allocation2 + $0x10] sm:$0x3] 0.0
        %s227 = scalar_lea.vmem [#allocation2], 408
        %228 = vst [vmem:[%s227] sm:$0xff] 0.0
        %229 = vst [vmem:[%s227 + $0x8] sm:$0xff] 0.0
        %230 = vst [vmem:[%s227 + $0x10] sm:$0x3] 0.0
        %231 = vst [vmem:[#allocation2] sm:$0x1] 0.0
        %232 = vst [vmem:[#allocation2 + $0x18] sm:$0x1] 0.0
        %233 = vst [vmem:[#allocation2 + $0x30] sm:$0x1] 0.0
        %234 = vst [vmem:[#allocation2 + $0x48] sm:$0x1] 0.0
        %235 = vst [vmem:[#allocation2 + $0x60] sm:$0x1] 0.0
        %236 = vst [vmem:[#allocation2 + $0x78] sm:$0x1] 0.0
        %237 = vst [vmem:[#allocation2 + $0x90] sm:$0x1] 0.0
        %238 = vst [vmem:[#allocation2 + $0xa8] sm:$0x1] 0.0
        %239 = vst [vmem:[#allocation2 + $0xc0] sm:$0x1] 0.0
        %240 = vst [vmem:[#allocation2 + $0xd8] sm:$0x1] 0.0
        %241 = vst [vmem:[#allocation2 + $0xf0] sm:$0x1] 0.0
        %242 = vst [vmem:[#allocation2 + $0x108] sm:$0x1] 0.0
        %243 = vst [vmem:[#allocation2 + $0x120] sm:$0x1] 0.0
        %244 = vst [vmem:[#allocation2 + $0x138] sm:$0x1] 0.0
        %245 = vst [vmem:[#allocation2 + $0x150] sm:$0x1] 0.0
        %246 = vst [vmem:[#allocation2 + $0x168] sm:$0x1] 0.0
        %247 = vst [vmem:[#allocation2 + $0x180] sm:$0x1] 0.0
        %248 = vst [vmem:[#allocation2 + $0x198] sm:$0x1] 0.0
        %249 = vst [vmem:[#allocation2 + $0x11] sm:$0x1] 0.0
        %250 = vst [vmem:[#allocation2 + $0x29] sm:$0x1] 0.0
        %251 = vst [vmem:[#allocation2 + $0x41] sm:$0x1] 0.0
        %252 = vst [vmem:[#allocation2 + $0x59] sm:$0x1] 0.0
        %253 = vst [vmem:[#allocation2 + $0x71] sm:$0x1] 0.0
        %254 = vst [vmem:[#allocation2 + $0x89] sm:$0x1] 0.0
        %255 = vst [vmem:[#allocation2 + $0xa1] sm:$0x1] 0.0
        %256 = vst [vmem:[#allocation2 + $0xb9] sm:$0x1] 0.0
        %257 = vst [vmem:[#allocation2 + $0xd1] sm:$0x1] 0.0
        %258 = vst [vmem:[#allocation2 + $0xe9] sm:$0x1] 0.0
        %259 = vst [vmem:[#allocation2 + $0x101] sm:$0x1] 0.0
        %260 = vst [vmem:[#allocation2 + $0x119] sm:$0x1] 0.0
        %261 = vst [vmem:[#allocation2 + $0x131] sm:$0x1] 0.0
        %262 = vst [vmem:[#allocation2 + $0x149] sm:$0x1] 0.0
        %263 = vst [vmem:[#allocation2 + $0x161] sm:$0x1] 0.0
        %264 = vst [vmem:[#allocation2 + $0x179] sm:$0x1] 0.0
        %265 = vst [vmem:[#allocation2 + $0x191] sm:$0x1] 0.0
        %266 = vst [vmem:[#allocation2 + $0x1a9] sm:$0x1] 0.0
        %v267 = vld [vmem:[%s190] sm:$0xff]
        %v268 = vld [vmem:[%s190 + $0x8] sm:$0xff]
        %v269 = vld [vmem:[%s190 + $0x10] sm:$0xff]
        %v270 = vld [vmem:[%s190 + $0x18] sm:$0xff]
        %v271 = vld [vmem:[%s190 + $0x20] sm:$0xff]
        %v272 = vld [vmem:[%s190 + $0x28] sm:$0xff]
        %v273 = vld [vmem:[%s190 + $0x30] sm:$0xff]
        %v274 = vld [vmem:[%s190 + $0x38] sm:$0xff]
        %v275 = vld [vmem:[%s190 + $0x40] sm:$0xff]
        %v276 = vld [vmem:[%s190 + $0x48] sm:$0xff]
        %v277 = vld [vmem:[%s190 + $0x50] sm:$0xff]
        %v278 = vld [vmem:[%s190 + $0x58] sm:$0xff]
        %v279 = vld [vmem:[%s190 + $0x60] sm:$0xff]
        %v280 = vld [vmem:[%s190 + $0x68] sm:$0xff]
        %v281 = vld [vmem:[%s190 + $0x70] sm:$0xff]
        %v282 = vld [vmem:[%s190 + $0x78] sm:$0xff]
        %v283 = vld [vmem:[%s190 + $0x80] sm:$0xff]
        %v284 = vld [vmem:[%s190 + $0x88] sm:$0xff]
        %v285 = vld [vmem:[%s190 + $0x90] sm:$0xff]
        %v286 = vld [vmem:[%s190 + $0x98] sm:$0xff]
        %v287 = vld [vmem:[%s190 + $0xa0] sm:$0xff]
        %v288 = vld [vmem:[%s190 + $0xa8] sm:$0xff]
        %v289 = vld [vmem:[%s190 + $0xb0] sm:$0xff]
        %v290 = vld [vmem:[%s190 + $0xb8] sm:$0xff]
        %v291 = vld [vmem:[%s190 + $0xc0] sm:$0xff]
        %v292 = vld [vmem:[%s190 + $0xc8] sm:$0xff]
        %v293 = vld [vmem:[%s190 + $0xd0] sm:$0xff]
        %v294 = vld [vmem:[%s190 + $0xd8] sm:$0xff]
        %v295 = vld [vmem:[%s190 + $0xe0] sm:$0xff]
        %v296 = vld [vmem:[%s190 + $0xe8] sm:$0xff]
        %v297 = vld [vmem:[%s190 + $0xf0] sm:$0xff]
        %v298 = vld [vmem:[%s190 + $0xf8] sm:$0xff]
        %s299 = scalar_lea.vmem [#allocation2], 24
        %300 = vst [vmem:[%s299 + $0x1] sm:$0xff] %v267
        %301 = vst [vmem:[%s299 + $0x9] sm:$0xff] %v268
        %302 = vst [vmem:[%s299 + $0x19] sm:$0xff] %v269
        %303 = vst [vmem:[%s299 + $0x21] sm:$0xff] %v270
        %304 = vst [vmem:[%s299 + $0x31] sm:$0xff] %v271
        %305 = vst [vmem:[%s299 + $0x39] sm:$0xff] %v272
        %306 = vst [vmem:[%s299 + $0x49] sm:$0xff] %v273
        %307 = vst [vmem:[%s299 + $0x51] sm:$0xff] %v274
        %308 = vst [vmem:[%s299 + $0x61] sm:$0xff] %v275
        %309 = vst [vmem:[%s299 + $0x69] sm:$0xff] %v276
        %310 = vst [vmem:[%s299 + $0x79] sm:$0xff] %v277
        %311 = vst [vmem:[%s299 + $0x81] sm:$0xff] %v278
        %312 = vst [vmem:[%s299 + $0x91] sm:$0xff] %v279
        %313 = vst [vmem:[%s299 + $0x99] sm:$0xff] %v280
        %314 = vst [vmem:[%s299 + $0xa9] sm:$0xff] %v281
        %315 = vst [vmem:[%s299 + $0xb1] sm:$0xff] %v282
        %316 = vst [vmem:[%s299 + $0xc1] sm:$0xff] %v283
        %317 = vst [vmem:[%s299 + $0xc9] sm:$0xff] %v284
        %318 = vst [vmem:[%s299 + $0xd9] sm:$0xff] %v285
        %319 = vst [vmem:[%s299 + $0xe1] sm:$0xff] %v286
        %320 = vst [vmem:[%s299 + $0xf1] sm:$0xff] %v287
        %321 = vst [vmem:[%s299 + $0xf9] sm:$0xff] %v288
        %322 = vst [vmem:[%s299 + $0x109] sm:$0xff] %v289
        %323 = vst [vmem:[%s299 + $0x111] sm:$0xff] %v290
        %324 = vst [vmem:[%s299 + $0x121] sm:$0xff] %v291
        %325 = vst [vmem:[%s299 + $0x129] sm:$0xff] %v292
        %326 = vst [vmem:[%s299 + $0x139] sm:$0xff] %v293
        %327 = vst [vmem:[%s299 + $0x141] sm:$0xff] %v294
        %328 = vst [vmem:[%s299 + $0x151] sm:$0xff] %v295
        %329 = vst [vmem:[%s299 + $0x159] sm:$0xff] %v296
        %330 = vst [vmem:[%s299 + $0x169] sm:$0xff] %v297
        %331 = vst [vmem:[%s299 + $0x171] sm:$0xff] %v298
        %v332 = vld [vmem:[#allocation2] sm:$0xff]
        %v333 = vld [vmem:[#allocation2 + $0x8] sm:$0xff]
        %v334 = vld [vmem:[#allocation2 + $0x18] sm:$0xff]
        %v335 = vld [vmem:[#allocation2 + $0x20] sm:$0xff]
        %v336 = vld [vmem:[#allocation2 + $0x30] sm:$0xff]
        %v337 = vld [vmem:[#allocation2 + $0x38] sm:$0xff]
        %v338 = vld [vmem:[#allocation2 + $0x48] sm:$0xff]
        %v339 = vld [vmem:[#allocation2 + $0x50] sm:$0xff]
        %v340 = vld [vmem:[#allocation2 + $0x60] sm:$0xff]
        %v341 = vld [vmem:[#allocation2 + $0x68] sm:$0xff]
        %v342 = vld [vmem:[#allocation2 + $0x78] sm:$0xff]
        %v343 = vld [vmem:[#allocation2 + $0x80] sm:$0xff]
        %v344 = vld [vmem:[#allocation2 + $0x90] sm:$0xff]
        %v345 = vld [vmem:[#allocation2 + $0x98] sm:$0xff]
        %v346 = vld [vmem:[#allocation2 + $0xa8] sm:$0xff]
        %v347 = vld [vmem:[#allocation2 + $0xb0] sm:$0xff]
        %v348 = vld [vmem:[#allocation2 + $0xc0] sm:$0xff]
        %v349 = vld [vmem:[#allocation2 + $0xc8] sm:$0xff]
        %v350 = vld [vmem:[#allocation2 + $0xd8] sm:$0xff]
        %v351 = vld [vmem:[#allocation2 + $0xe0] sm:$0xff]
        %v352 = vld [vmem:[#allocation2 + $0xf0] sm:$0xff]
        %v353 = vld [vmem:[#allocation2 + $0xf8] sm:$0xff]
        %v354 = vld [vmem:[#allocation2 + $0x108] sm:$0xff]
        %v355 = vld [vmem:[#allocation2 + $0x110] sm:$0xff]
        %v356 = vld [vmem:[#allocation2 + $0x120] sm:$0xff]
        %v357 = vld [vmem:[#allocation2 + $0x128] sm:$0xff]
        %v358 = vld [vmem:[#allocation2 + $0x138] sm:$0xff]
        %v359 = vld [vmem:[#allocation2 + $0x140] sm:$0xff]
        %v360 = vld [vmem:[#allocation2 + $0x150] sm:$0xff]
        %v361 = vld [vmem:[#allocation2 + $0x158] sm:$0xff]
        %v362 = vld [vmem:[#allocation2 + $0x168] sm:$0xff]
        %v363 = vld [vmem:[#allocation2 + $0x170] sm:$0xff]
        %364 = vst [vmem:[#allocation3] sm:$0xff] %v332
        %365 = vst [vmem:[#allocation3 + $0x48] sm:$0xff] %v333
        %366 = vst [vmem:[#allocation3 + $0x90] sm:$0xff] %v334
        %367 = vst [vmem:[#allocation3 + $0xd8] sm:$0xff] %v335
        %368 = vst [vmem:[#allocation3 + $0x120] sm:$0xff] %v336
        %369 = vst [vmem:[#allocation3 + $0x168] sm:$0xff] %v337
        %370 = vst [vmem:[#allocation3 + $0x1b0] sm:$0xff] %v338
        %371 = vst [vmem:[#allocation3 + $0x1f8] sm:$0xff] %v339
        %372 = vst [vmem:[#allocation3 + $0x240] sm:$0xff] %v340
        %373 = vst [vmem:[#allocation3 + $0x288] sm:$0xff] %v341
        %374 = vst [vmem:[#allocation3 + $0x2d0] sm:$0xff] %v342
        %375 = vst [vmem:[#allocation3 + $0x318] sm:$0xff] %v343
        %376 = vst [vmem:[#allocation3 + $0x360] sm:$0xff] %v344
        %377 = vst [vmem:[#allocation3 + $0x3a8] sm:$0xff] %v345
        %378 = vst [vmem:[#allocation3 + $0x3f0] sm:$0xff] %v346
        %379 = vst [vmem:[#allocation3 + $0x438] sm:$0xff] %v347
        %380 = vst [vmem:[#allocation3 + $0x480] sm:$0xff] %v348
        %381 = vst [vmem:[#allocation3 + $0x4c8] sm:$0xff] %v349
        %382 = vst [vmem:[#allocation3 + $0x510] sm:$0xff] %v350
        %383 = vst [vmem:[#allocation3 + $0x558] sm:$0xff] %v351
        %384 = vst [vmem:[#allocation3 + $0x5a0] sm:$0xff] %v352
        %385 = vst [vmem:[#allocation3 + $0x5e8] sm:$0xff] %v353
        %386 = vst [vmem:[#allocation3 + $0x630] sm:$0xff] %v354
        %387 = vst [vmem:[#allocation3 + $0x678] sm:$0xff] %v355
        %388 = vst [vmem:[#allocation3 + $0x6c0] sm:$0xff] %v356
        %389 = vst [vmem:[#allocation3 + $0x708] sm:$0xff] %v357
        %390 = vst [vmem:[#allocation3 + $0x750] sm:$0xff] %v358
        %391 = vst [vmem:[#allocation3 + $0x798] sm:$0xff] %v359
        %392 = vst [vmem:[#allocation3 + $0x7e0] sm:$0xff] %v360
        %393 = vst [vmem:[#allocation3 + $0x828] sm:$0xff] %v361
        %394 = vst [vmem:[#allocation3 + $0x870] sm:$0xff] %v362
        %395 = vst [vmem:[#allocation3 + $0x8b8] sm:$0xff] %v363
        %v396 = vld [vmem:[#allocation2 + $0x1] sm:$0xff]
        %v397 = vld [vmem:[#allocation2 + $0x9] sm:$0xff]
        %v398 = vld [vmem:[#allocation2 + $0x19] sm:$0xff]
        %v399 = vld [vmem:[#allocation2 + $0x21] sm:$0xff]
        %v400 = vld [vmem:[#allocation2 + $0x31] sm:$0xff]
        %v401 = vld [vmem:[#allocation2 + $0x39] sm:$0xff]
        %v402 = vld [vmem:[#allocation2 + $0x49] sm:$0xff]
        %v403 = vld [vmem:[#allocation2 + $0x51] sm:$0xff]
        %v404 = vld [vmem:[#allocation2 + $0x61] sm:$0xff]
        %v405 = vld [vmem:[#allocation2 + $0x69] sm:$0xff]
        %v406 = vld [vmem:[#allocation2 + $0x79] sm:$0xff]
        %v407 = vld [vmem:[#allocation2 + $0x81] sm:$0xff]
        %v408 = vld [vmem:[#allocation2 + $0x91] sm:$0xff]
        %v409 = vld [vmem:[#allocation2 + $0x99] sm:$0xff]
        %v410 = vld [vmem:[#allocation2 + $0xa9] sm:$0xff]
        %v411 = vld [vmem:[#allocation2 + $0xb1] sm:$0xff]
        %v412 = vld [vmem:[#allocation2 + $0xc1] sm:$0xff]
        %v413 = vld [vmem:[#allocation2 + $0xc9] sm:$0xff]
        %v414 = vld [vmem:[#allocation2 + $0xd9] sm:$0xff]
        %v415 = vld [vmem:[#allocation2 + $0xe1] sm:$0xff]
        %v416 = vld [vmem:[#allocation2 + $0xf1] sm:$0xff]
        %v417 = vld [vmem:[#allocation2 + $0xf9] sm:$0xff]
        %v418 = vld [vmem:[#allocation2 + $0x109] sm:$0xff]
        %v419 = vld [vmem:[#allocation2 + $0x111] sm:$0xff]
        %v420 = vld [vmem:[#allocation2 + $0x121] sm:$0xff]
        %v421 = vld [vmem:[#allocation2 + $0x129] sm:$0xff]
        %v422 = vld [vmem:[#allocation2 + $0x139] sm:$0xff]
        %v423 = vld [vmem:[#allocation2 + $0x141] sm:$0xff]
        %v424 = vld [vmem:[#allocation2 + $0x151] sm:$0xff]
        %v425 = vld [vmem:[#allocation2 + $0x159] sm:$0xff]
        %v426 = vld [vmem:[#allocation2 + $0x169] sm:$0xff]
        %v427 = vld [vmem:[#allocation2 + $0x171] sm:$0xff]
        %428 = vst [vmem:[#allocation3 + $0x8] sm:$0xff] %v396
        %429 = vst [vmem:[#allocation3 + $0x50] sm:$0xff] %v397
        %430 = vst [vmem:[#allocation3 + $0x98] sm:$0xff] %v398
        %431 = vst [vmem:[#allocation3 + $0xe0] sm:$0xff] %v399
        %432 = vst [vmem:[#allocation3 + $0x128] sm:$0xff] %v400
        %433 = vst [vmem:[#allocation3 + $0x170] sm:$0xff] %v401
        %434 = vst [vmem:[#allocation3 + $0x1b8] sm:$0xff] %v402
        %435 = vst [vmem:[#allocation3 + $0x200] sm:$0xff] %v403
        %436 = vst [vmem:[#allocation3 + $0x248] sm:$0xff] %v404
        %437 = vst [vmem:[#allocation3 + $0x290] sm:$0xff] %v405
        %438 = vst [vmem:[#allocation3 + $0x2d8] sm:$0xff] %v406
        %439 = vst [vmem:[#allocation3 + $0x320] sm:$0xff] %v407
        %440 = vst [vmem:[#allocation3 + $0x368] sm:$0xff] %v408
        %441 = vst [vmem:[#allocation3 + $0x3b0] sm:$0xff] %v409
        %442 = vst [vmem:[#allocation3 + $0x3f8] sm:$0xff] %v410
        %443 = vst [vmem:[#allocation3 + $0x440] sm:$0xff] %v411
        %444 = vst [vmem:[#allocation3 + $0x488] sm:$0xff] %v412
        %445 = vst [vmem:[#allocation3 + $0x4d0] sm:$0xff] %v413
        %446 = vst [vmem:[#allocation3 + $0x518] sm:$0xff] %v414
        %447 = vst [vmem:[#allocation3 + $0x560] sm:$0xff] %v415
        %448 = vst [vmem:[#allocation3 + $0x5a8] sm:$0xff] %v416
        %449 = vst [vmem:[#allocation3 + $0x5f0] sm:$0xff] %v417
        %450 = vst [vmem:[#allocation3 + $0x638] sm:$0xff] %v418
        %451 = vst [vmem:[#allocation3 + $0x680] sm:$0xff] %v419
        %452 = vst [vmem:[#allocation3 + $0x6c8] sm:$0xff] %v420
        %453 = vst [vmem:[#allocation3 + $0x710] sm:$0xff] %v421
        %454 = vst [vmem:[#allocation3 + $0x758] sm:$0xff] %v422
        %455 = vst [vmem:[#allocation3 + $0x7a0] sm:$0xff] %v423
        %456 = vst [vmem:[#allocation3 + $0x7e8] sm:$0xff] %v424
        %457 = vst [vmem:[#allocation3 + $0x830] sm:$0xff] %v425
        %458 = vst [vmem:[#allocation3 + $0x878] sm:$0xff] %v426
        %459 = vst [vmem:[#allocation3 + $0x8c0] sm:$0xff] %v427
        %v460 = vld [vmem:[#allocation2 + $0x2] sm:$0xff]
        %v461 = vld [vmem:[#allocation2 + $0xa] sm:$0xff]
        %v462 = vld [vmem:[#allocation2 + $0x1a] sm:$0xff]
        %v463 = vld [vmem:[#allocation2 + $0x22] sm:$0xff]
        %v464 = vld [vmem:[#allocation2 + $0x32] sm:$0xff]
        %v465 = vld [vmem:[#allocation2 + $0x3a] sm:$0xff]
        %v466 = vld [vmem:[#allocation2 + $0x4a] sm:$0xff]
        %v467 = vld [vmem:[#allocation2 + $0x52] sm:$0xff]
        %v468 = vld [vmem:[#allocation2 + $0x62] sm:$0xff]
        %v469 = vld [vmem:[#allocation2 + $0x6a] sm:$0xff]
        %v470 = vld [vmem:[#allocation2 + $0x7a] sm:$0xff]
        %v471 = vld [vmem:[#allocation2 + $0x82] sm:$0xff]
        %v472 = vld [vmem:[#allocation2 + $0x92] sm:$0xff]
        %v473 = vld [vmem:[#allocation2 + $0x9a] sm:$0xff]
        %v474 = vld [vmem:[#allocation2 + $0xaa] sm:$0xff]
        %v475 = vld [vmem:[#allocation2 + $0xb2] sm:$0xff]
        %v476 = vld [vmem:[#allocation2 + $0xc2] sm:$0xff]
        %v477 = vld [vmem:[#allocation2 + $0xca] sm:$0xff]
        %v478 = vld [vmem:[#allocation2 + $0xda] sm:$0xff]
        %v479 = vld [vmem:[#allocation2 + $0xe2] sm:$0xff]
        %v480 = vld [vmem:[#allocation2 + $0xf2] sm:$0xff]
        %v481 = vld [vmem:[#allocation2 + $0xfa] sm:$0xff]
        %v482 = vld [vmem:[#allocation2 + $0x10a] sm:$0xff]
        %v483 = vld [vmem:[#allocation2 + $0x112] sm:$0xff]
        %v484 = vld [vmem:[#allocation2 + $0x122] sm:$0xff]
        %v485 = vld [vmem:[#allocation2 + $0x12a] sm:$0xff]
        %v486 = vld [vmem:[#allocation2 + $0x13a] sm:$0xff]
        %v487 = vld [vmem:[#allocation2 + $0x142] sm:$0xff]
        %v488 = vld [vmem:[#allocation2 + $0x152] sm:$0xff]
        %v489 = vld [vmem:[#allocation2 + $0x15a] sm:$0xff]
        %v490 = vld [vmem:[#allocation2 + $0x16a] sm:$0xff]
        %v491 = vld [vmem:[#allocation2 + $0x172] sm:$0xff]
        %492 = vst [vmem:[#allocation3 + $0x10] sm:$0xff] %v460
        %493 = vst [vmem:[#allocation3 + $0x58] sm:$0xff] %v461
        %494 = vst [vmem:[#allocation3 + $0xa0] sm:$0xff] %v462
        %495 = vst [vmem:[#allocation3 + $0xe8] sm:$0xff] %v463
        %496 = vst [vmem:[#allocation3 + $0x130] sm:$0xff] %v464
        %497 = vst [vmem:[#allocation3 + $0x178] sm:$0xff] %v465
        %498 = vst [vmem:[#allocation3 + $0x1c0] sm:$0xff] %v466
        %499 = vst [vmem:[#allocation3 + $0x208] sm:$0xff] %v467
        %500 = vst [vmem:[#allocation3 + $0x250] sm:$0xff] %v468
        %501 = vst [vmem:[#allocation3 + $0x298] sm:$0xff] %v469
        %502 = vst [vmem:[#allocation3 + $0x2e0] sm:$0xff] %v470
        %503 = vst [vmem:[#allocation3 + $0x328] sm:$0xff] %v471
        %504 = vst [vmem:[#allocation3 + $0x370] sm:$0xff] %v472
        %505 = vst [vmem:[#allocation3 + $0x3b8] sm:$0xff] %v473
        %506 = vst [vmem:[#allocation3 + $0x400] sm:$0xff] %v474
        %507 = vst [vmem:[#allocation3 + $0x448] sm:$0xff] %v475
        %508 = vst [vmem:[#allocation3 + $0x490] sm:$0xff] %v476
        %509 = vst [vmem:[#allocation3 + $0x4d8] sm:$0xff] %v477
        %510 = vst [vmem:[#allocation3 + $0x520] sm:$0xff] %v478
        %511 = vst [vmem:[#allocation3 + $0x568] sm:$0xff] %v479
        %512 = vst [vmem:[#allocation3 + $0x5b0] sm:$0xff] %v480
        %513 = vst [vmem:[#allocation3 + $0x5f8] sm:$0xff] %v481
        %514 = vst [vmem:[#allocation3 + $0x640] sm:$0xff] %v482
        %515 = vst [vmem:[#allocation3 + $0x688] sm:$0xff] %v483
        %516 = vst [vmem:[#allocation3 + $0x6d0] sm:$0xff] %v484
        %517 = vst [vmem:[#allocation3 + $0x718] sm:$0xff] %v485
        %518 = vst [vmem:[#allocation3 + $0x760] sm:$0xff] %v486
        %519 = vst [vmem:[#allocation3 + $0x7a8] sm:$0xff] %v487
        %520 = vst [vmem:[#allocation3 + $0x7f0] sm:$0xff] %v488
        %521 = vst [vmem:[#allocation3 + $0x838] sm:$0xff] %v489
        %522 = vst [vmem:[#allocation3 + $0x880] sm:$0xff] %v490
        %523 = vst [vmem:[#allocation3 + $0x8c8] sm:$0xff] %v491
        %v524 = vld [vmem:[%s299] sm:$0xff]
        %v525 = vld [vmem:[%s299 + $0x8] sm:$0xff]
        %v526 = vld [vmem:[%s299 + $0x18] sm:$0xff]
        %v527 = vld [vmem:[%s299 + $0x20] sm:$0xff]
        %v528 = vld [vmem:[%s299 + $0x30] sm:$0xff]
        %v529 = vld [vmem:[%s299 + $0x38] sm:$0xff]
        %v530 = vld [vmem:[%s299 + $0x48] sm:$0xff]
        %v531 = vld [vmem:[%s299 + $0x50] sm:$0xff]
        %v532 = vld [vmem:[%s299 + $0x60] sm:$0xff]
        %v533 = vld [vmem:[%s299 + $0x68] sm:$0xff]
        %v534 = vld [vmem:[%s299 + $0x78] sm:$0xff]
        %v535 = vld [vmem:[%s299 + $0x80] sm:$0xff]
        %v536 = vld [vmem:[%s299 + $0x90] sm:$0xff]
        %v537 = vld [vmem:[%s299 + $0x98] sm:$0xff]
        %v538 = vld [vmem:[%s299 + $0xa8] sm:$0xff]
        %v539 = vld [vmem:[%s299 + $0xb0] sm:$0xff]
        %v540 = vld [vmem:[%s299 + $0xc0] sm:$0xff]
        %v541 = vld [vmem:[%s299 + $0xc8] sm:$0xff]
        %v542 = vld [vmem:[%s299 + $0xd8] sm:$0xff]
        %v543 = vld [vmem:[%s299 + $0xe0] sm:$0xff]
        %v544 = vld [vmem:[%s299 + $0xf0] sm:$0xff]
        %v545 = vld [vmem:[%s299 + $0xf8] sm:$0xff]
        %v546 = vld [vmem:[%s299 + $0x108] sm:$0xff]
        %v547 = vld [vmem:[%s299 + $0x110] sm:$0xff]
        %v548 = vld [vmem:[%s299 + $0x120] sm:$0xff]
        %v549 = vld [vmem:[%s299 + $0x128] sm:$0xff]
        %v550 = vld [vmem:[%s299 + $0x138] sm:$0xff]
        %v551 = vld [vmem:[%s299 + $0x140] sm:$0xff]
        %v552 = vld [vmem:[%s299 + $0x150] sm:$0xff]
        %v553 = vld [vmem:[%s299 + $0x158] sm:$0xff]
        %v554 = vld [vmem:[%s299 + $0x168] sm:$0xff]
        %v555 = vld [vmem:[%s299 + $0x170] sm:$0xff]
        %556 = vst [vmem:[#allocation3 + $0x18] sm:$0xff] %v524
        %557 = vst [vmem:[#allocation3 + $0x60] sm:$0xff] %v525
        %558 = vst [vmem:[#allocation3 + $0xa8] sm:$0xff] %v526
        %559 = vst [vmem:[#allocation3 + $0xf0] sm:$0xff] %v527
        %560 = vst [vmem:[#allocation3 + $0x138] sm:$0xff] %v528
        %561 = vst [vmem:[#allocation3 + $0x180] sm:$0xff] %v529
        %562 = vst [vmem:[#allocation3 + $0x1c8] sm:$0xff] %v530
        %563 = vst [vmem:[#allocation3 + $0x210] sm:$0xff] %v531
        %564 = vst [vmem:[#allocation3 + $0x258] sm:$0xff] %v532
        %565 = vst [vmem:[#allocation3 + $0x2a0] sm:$0xff] %v533
        %566 = vst [vmem:[#allocation3 + $0x2e8] sm:$0xff] %v534
        %567 = vst [vmem:[#allocation3 + $0x330] sm:$0xff] %v535
        %568 = vst [vmem:[#allocation3 + $0x378] sm:$0xff] %v536
        %569 = vst [vmem:[#allocation3 + $0x3c0] sm:$0xff] %v537
        %570 = vst [vmem:[#allocation3 + $0x408] sm:$0xff] %v538
        %571 = vst [vmem:[#allocation3 + $0x450] sm:$0xff] %v539
        %572 = vst [vmem:[#allocation3 + $0x498] sm:$0xff] %v540
        %573 = vst [vmem:[#allocation3 + $0x4e0] sm:$0xff] %v541
        %574 = vst [vmem:[#allocation3 + $0x528] sm:$0xff] %v542
        %575 = vst [vmem:[#allocation3 + $0x570] sm:$0xff] %v543
        %576 = vst [vmem:[#allocation3 + $0x5b8] sm:$0xff] %v544
        %577 = vst [vmem:[#allocation3 + $0x600] sm:$0xff] %v545
        %578 = vst [vmem:[#allocation3 + $0x648] sm:$0xff] %v546
        %579 = vst [vmem:[#allocation3 + $0x690] sm:$0xff] %v547
        %580 = vst [vmem:[#allocation3 + $0x6d8] sm:$0xff] %v548
        %581 = vst [vmem:[#allocation3 + $0x720] sm:$0xff] %v549
        %582 = vst [vmem:[#allocation3 + $0x768] sm:$0xff] %v550
        %583 = vst [vmem:[#allocation3 + $0x7b0] sm:$0xff] %v551
        %584 = vst [vmem:[#allocation3 + $0x7f8] sm:$0xff] %v552
        %585 = vst [vmem:[#allocation3 + $0x840] sm:$0xff] %v553
        %586 = vst [vmem:[#allocation3 + $0x888] sm:$0xff] %v554
        %587 = vst [vmem:[#allocation3 + $0x8d0] sm:$0xff] %v555
        %v588 = vld [vmem:[%s299 + $0x1] sm:$0xff]
        %v589 = vld [vmem:[%s299 + $0x9] sm:$0xff]
        %v590 = vld [vmem:[%s299 + $0x19] sm:$0xff]
        %v591 = vld [vmem:[%s299 + $0x21] sm:$0xff]
        %v592 = vld [vmem:[%s299 + $0x31] sm:$0xff]
        %v593 = vld [vmem:[%s299 + $0x39] sm:$0xff]
        %v594 = vld [vmem:[%s299 + $0x49] sm:$0xff]
        %v595 = vld [vmem:[%s299 + $0x51] sm:$0xff]
        %v596 = vld [vmem:[%s299 + $0x61] sm:$0xff]
        %v597 = vld [vmem:[%s299 + $0x69] sm:$0xff]
        %v598 = vld [vmem:[%s299 + $0x79] sm:$0xff]
        %v599 = vld [vmem:[%s299 + $0x81] sm:$0xff]
        %v600 = vld [vmem:[%s299 + $0x91] sm:$0xff]
        %v601 = vld [vmem:[%s299 + $0x99] sm:$0xff]
        %v602 = vld [vmem:[%s299 + $0xa9] sm:$0xff]
        %v603 = vld [vmem:[%s299 + $0xb1] sm:$0xff]
        %v604 = vld [vmem:[%s299 + $0xc1] sm:$0xff]
        %v605 = vld [vmem:[%s299 + $0xc9] sm:$0xff]
        %v606 = vld [vmem:[%s299 + $0xd9] sm:$0xff]
        %v607 = vld [vmem:[%s299 + $0xe1] sm:$0xff]
        %v608 = vld [vmem:[%s299 + $0xf1] sm:$0xff]
        %v609 = vld [vmem:[%s299 + $0xf9] sm:$0xff]
        %v610 = vld [vmem:[%s299 + $0x109] sm:$0xff]
        %v611 = vld [vmem:[%s299 + $0x111] sm:$0xff]
        %v612 = vld [vmem:[%s299 + $0x121] sm:$0xff]
        %v613 = vld [vmem:[%s299 + $0x129] sm:$0xff]
        %v614 = vld [vmem:[%s299 + $0x139] sm:$0xff]
        %v615 = vld [vmem:[%s299 + $0x141] sm:$0xff]
        %v616 = vld [vmem:[%s299 + $0x151] sm:$0xff]
        %v617 = vld [vmem:[%s299 + $0x159] sm:$0xff]
        %v618 = vld [vmem:[%s299 + $0x169] sm:$0xff]
        %v619 = vld [vmem:[%s299 + $0x171] sm:$0xff]
        %620 = vst [vmem:[#allocation3 + $0x20] sm:$0xff] %v588
        %621 = vst [vmem:[#allocation3 + $0x68] sm:$0xff] %v589
        %622 = vst [vmem:[#allocation3 + $0xb0] sm:$0xff] %v590
        %623 = vst [vmem:[#allocation3 + $0xf8] sm:$0xff] %v591
        %624 = vst [vmem:[#allocation3 + $0x140] sm:$0xff] %v592
        %625 = vst [vmem:[#allocation3 + $0x188] sm:$0xff] %v593
        %626 = vst [vmem:[#allocation3 + $0x1d0] sm:$0xff] %v594
        %627 = vst [vmem:[#allocation3 + $0x218] sm:$0xff] %v595
        %628 = vst [vmem:[#allocation3 + $0x260] sm:$0xff] %v596
        %629 = vst [vmem:[#allocation3 + $0x2a8] sm:$0xff] %v597
        %630 = vst [vmem:[#allocation3 + $0x2f0] sm:$0xff] %v598
        %631 = vst [vmem:[#allocation3 + $0x338] sm:$0xff] %v599
        %632 = vst [vmem:[#allocation3 + $0x380] sm:$0xff] %v600
        %633 = vst [vmem:[#allocation3 + $0x3c8] sm:$0xff] %v601
        %634 = vst [vmem:[#allocation3 + $0x410] sm:$0xff] %v602
        %635 = vst [vmem:[#allocation3 + $0x458] sm:$0xff] %v603
        %636 = vst [vmem:[#allocation3 + $0x4a0] sm:$0xff] %v604
        %637 = vst [vmem:[#allocation3 + $0x4e8] sm:$0xff] %v605
        %638 = vst [vmem:[#allocation3 + $0x530] sm:$0xff] %v606
        %639 = vst [vmem:[#allocation3 + $0x578] sm:$0xff] %v607
        %640 = vst [vmem:[#allocation3 + $0x5c0] sm:$0xff] %v608
        %641 = vst [vmem:[#allocation3 + $0x608] sm:$0xff] %v609
        %642 = vst [vmem:[#allocation3 + $0x650] sm:$0xff] %v610
        %643 = vst [vmem:[#allocation3 + $0x698] sm:$0xff] %v611
        %644 = vst [vmem:[#allocation3 + $0x6e0] sm:$0xff] %v612
        %645 = vst [vmem:[#allocation3 + $0x728] sm:$0xff] %v613
        %646 = vst [vmem:[#allocation3 + $0x770] sm:$0xff] %v614
        %647 = vst [vmem:[#allocation3 + $0x7b8] sm:$0xff] %v615
        %648 = vst [vmem:[#allocation3 + $0x800] sm:$0xff] %v616
        %649 = vst [vmem:[#allocation3 + $0x848] sm:$0xff] %v617
        %650 = vst [vmem:[#allocation3 + $0x890] sm:$0xff] %v618
        %651 = vst [vmem:[#allocation3 + $0x8d8] sm:$0xff] %v619
        %v652 = vld [vmem:[%s299 + $0x2] sm:$0xff]
        %v653 = vld [vmem:[%s299 + $0xa] sm:$0xff]
        %v654 = vld [vmem:[%s299 + $0x1a] sm:$0xff]
        %v655 = vld [vmem:[%s299 + $0x22] sm:$0xff]
        %v656 = vld [vmem:[%s299 + $0x32] sm:$0xff]
        %v657 = vld [vmem:[%s299 + $0x3a] sm:$0xff]
        %v658 = vld [vmem:[%s299 + $0x4a] sm:$0xff]
        %v659 = vld [vmem:[%s299 + $0x52] sm:$0xff]
        %v660 = vld [vmem:[%s299 + $0x62] sm:$0xff]
        %v661 = vld [vmem:[%s299 + $0x6a] sm:$0xff]
        %v662 = vld [vmem:[%s299 + $0x7a] sm:$0xff]
        %v663 = vld [vmem:[%s299 + $0x82] sm:$0xff]
        %v664 = vld [vmem:[%s299 + $0x92] sm:$0xff]
        %v665 = vld [vmem:[%s299 + $0x9a] sm:$0xff]
        %v666 = vld [vmem:[%s299 + $0xaa] sm:$0xff]
        %v667 = vld [vmem:[%s299 + $0xb2] sm:$0xff]
        %v668 = vld [vmem:[%s299 + $0xc2] sm:$0xff]
        %v669 = vld [vmem:[%s299 + $0xca] sm:$0xff]
        %v670 = vld [vmem:[%s299 + $0xda] sm:$0xff]
        %v671 = vld [vmem:[%s299 + $0xe2] sm:$0xff]
        %v672 = vld [vmem:[%s299 + $0xf2] sm:$0xff]
        %v673 = vld [vmem:[%s299 + $0xfa] sm:$0xff]
        %v674 = vld [vmem:[%s299 + $0x10a] sm:$0xff]
        %v675 = vld [vmem:[%s299 + $0x112] sm:$0xff]
        %v676 = vld [vmem:[%s299 + $0x122] sm:$0xff]
        %v677 = vld [vmem:[%s299 + $0x12a] sm:$0xff]
        %v678 = vld [vmem:[%s299 + $0x13a] sm:$0xff]
        %v679 = vld [vmem:[%s299 + $0x142] sm:$0xff]
        %v680 = vld [vmem:[%s299 + $0x152] sm:$0xff]
        %v681 = vld [vmem:[%s299 + $0x15a] sm:$0xff]
        %v682 = vld [vmem:[%s299 + $0x16a] sm:$0xff]
        %v683 = vld [vmem:[%s299 + $0x172] sm:$0xff]
        %684 = vst [vmem:[#allocation3 + $0x28] sm:$0xff] %v652
        %685 = vst [vmem:[#allocation3 + $0x70] sm:$0xff] %v653
        %686 = vst [vmem:[#allocation3 + $0xb8] sm:$0xff] %v654
        %687 = vst [vmem:[#allocation3 + $0x100] sm:$0xff] %v655
        %688 = vst [vmem:[#allocation3 + $0x148] sm:$0xff] %v656
        %689 = vst [vmem:[#allocation3 + $0x190] sm:$0xff] %v657
        %690 = vst [vmem:[#allocation3 + $0x1d8] sm:$0xff] %v658
        %691 = vst [vmem:[#allocation3 + $0x220] sm:$0xff] %v659
        %692 = vst [vmem:[#allocation3 + $0x268] sm:$0xff] %v660
        %693 = vst [vmem:[#allocation3 + $0x2b0] sm:$0xff] %v661
        %694 = vst [vmem:[#allocation3 + $0x2f8] sm:$0xff] %v662
        %695 = vst [vmem:[#allocation3 + $0x340] sm:$0xff] %v663
        %696 = vst [vmem:[#allocation3 + $0x388] sm:$0xff] %v664
        %697 = vst [vmem:[#allocation3 + $0x3d0] sm:$0xff] %v665
        %698 = vst [vmem:[#allocation3 + $0x418] sm:$0xff] %v666
        %699 = vst [vmem:[#allocation3 + $0x460] sm:$0xff] %v667
        %700 = vst [vmem:[#allocation3 + $0x4a8] sm:$0xff] %v668
        %701 = vst [vmem:[#allocation3 + $0x4f0] sm:$0xff] %v669
        %702 = vst [vmem:[#allocation3 + $0x538] sm:$0xff] %v670
        %703 = vst [vmem:[#allocation3 + $0x580] sm:$0xff] %v671
        %704 = vst [vmem:[#allocation3 + $0x5c8] sm:$0xff] %v672
        %705 = vst [vmem:[#allocation3 + $0x610] sm:$0xff] %v673
        %706 = vst [vmem:[#allocation3 + $0x658] sm:$0xff] %v674
        %707 = vst [vmem:[#allocation3 + $0x6a0] sm:$0xff] %v675
        %708 = vst [vmem:[#allocation3 + $0x6e8] sm:$0xff] %v676
        %709 = vst [vmem:[#allocation3 + $0x730] sm:$0xff] %v677
        %710 = vst [vmem:[#allocation3 + $0x778] sm:$0xff] %v678
        %711 = vst [vmem:[#allocation3 + $0x7c0] sm:$0xff] %v679
        %712 = vst [vmem:[#allocation3 + $0x808] sm:$0xff] %v680
        %713 = vst [vmem:[#allocation3 + $0x850] sm:$0xff] %v681
        %714 = vst [vmem:[#allocation3 + $0x898] sm:$0xff] %v682
        %715 = vst [vmem:[#allocation3 + $0x8e0] sm:$0xff] %v683
        %s716 = scalar_lea.vmem [#allocation2], 48
        %v717 = vld [vmem:[%s716] sm:$0xff]
        %v718 = vld [vmem:[%s716 + $0x8] sm:$0xff]
        %v719 = vld [vmem:[%s716 + $0x18] sm:$0xff]
        %v720 = vld [vmem:[%s716 + $0x20] sm:$0xff]
        %v721 = vld [vmem:[%s716 + $0x30] sm:$0xff]
        %v722 = vld [vmem:[%s716 + $0x38] sm:$0xff]
        %v723 = vld [vmem:[%s716 + $0x48] sm:$0xff]
        %v724 = vld [vmem:[%s716 + $0x50] sm:$0xff]
        %v725 = vld [vmem:[%s716 + $0x60] sm:$0xff]
        %v726 = vld [vmem:[%s716 + $0x68] sm:$0xff]
        %v727 = vld [vmem:[%s716 + $0x78] sm:$0xff]
        %v728 = vld [vmem:[%s716 + $0x80] sm:$0xff]
        %v729 = vld [vmem:[%s716 + $0x90] sm:$0xff]
        %v730 = vld [vmem:[%s716 + $0x98] sm:$0xff]
        %v731 = vld [vmem:[%s716 + $0xa8] sm:$0xff]
        %v732 = vld [vmem:[%s716 + $0xb0] sm:$0xff]
        %v733 = vld [vmem:[%s716 + $0xc0] sm:$0xff]
        %v734 = vld [vmem:[%s716 + $0xc8] sm:$0xff]
        %v735 = vld [vmem:[%s716 + $0xd8] sm:$0xff]
        %v736 = vld [vmem:[%s716 + $0xe0] sm:$0xff]
        %v737 = vld [vmem:[%s716 + $0xf0] sm:$0xff]
        %v738 = vld [vmem:[%s716 + $0xf8] sm:$0xff]
        %v739 = vld [vmem:[%s716 + $0x108] sm:$0xff]
        %v740 = vld [vmem:[%s716 + $0x110] sm:$0xff]
        %v741 = vld [vmem:[%s716 + $0x120] sm:$0xff]
        %v742 = vld [vmem:[%s716 + $0x128] sm:$0xff]
        %v743 = vld [vmem:[%s716 + $0x138] sm:$0xff]
        %v744 = vld [vmem:[%s716 + $0x140] sm:$0xff]
        %v745 = vld [vmem:[%s716 + $0x150] sm:$0xff]
        %v746 = vld [vmem:[%s716 + $0x158] sm:$0xff]
        %v747 = vld [vmem:[%s716 + $0x168] sm:$0xff]
        %v748 = vld [vmem:[%s716 + $0x170] sm:$0xff]
        %749 = vst [vmem:[#allocation3 + $0x30] sm:$0xff] %v717
        %750 = vst [vmem:[#allocation3 + $0x78] sm:$0xff] %v718
        %751 = vst [vmem:[#allocation3 + $0xc0] sm:$0xff] %v719
        %752 = vst [vmem:[#allocation3 + $0x108] sm:$0xff] %v720
        %753 = vst [vmem:[#allocation3 + $0x150] sm:$0xff] %v721
        %754 = vst [vmem:[#allocation3 + $0x198] sm:$0xff] %v722
        %755 = vst [vmem:[#allocation3 + $0x1e0] sm:$0xff] %v723
        %756 = vst [vmem:[#allocation3 + $0x228] sm:$0xff] %v724
        %757 = vst [vmem:[#allocation3 + $0x270] sm:$0xff] %v725
        %758 = vst [vmem:[#allocation3 + $0x2b8] sm:$0xff] %v726
        %759 = vst [vmem:[#allocation3 + $0x300] sm:$0xff] %v727
        %760 = vst [vmem:[#allocation3 + $0x348] sm:$0xff] %v728
        %761 = vst [vmem:[#allocation3 + $0x390] sm:$0xff] %v729
        %762 = vst [vmem:[#allocation3 + $0x3d8] sm:$0xff] %v730
        %763 = vst [vmem:[#allocation3 + $0x420] sm:$0xff] %v731
        %764 = vst [vmem:[#allocation3 + $0x468] sm:$0xff] %v732
        %765 = vst [vmem:[#allocation3 + $0x4b0] sm:$0xff] %v733
        %766 = vst [vmem:[#allocation3 + $0x4f8] sm:$0xff] %v734
        %767 = vst [vmem:[#allocation3 + $0x540] sm:$0xff] %v735
        %768 = vst [vmem:[#allocation3 + $0x588] sm:$0xff] %v736
        %769 = vst [vmem:[#allocation3 + $0x5d0] sm:$0xff] %v737
        %770 = vst [vmem:[#allocation3 + $0x618] sm:$0xff] %v738
        %771 = vst [vmem:[#allocation3 + $0x660] sm:$0xff] %v739
        %772 = vst [vmem:[#allocation3 + $0x6a8] sm:$0xff] %v740
        %773 = vst [vmem:[#allocation3 + $0x6f0] sm:$0xff] %v741
        %774 = vst [vmem:[#allocation3 + $0x738] sm:$0xff] %v742
        %775 = vst [vmem:[#allocation3 + $0x780] sm:$0xff] %v743
        %776 = vst [vmem:[#allocation3 + $0x7c8] sm:$0xff] %v744
        %777 = vst [vmem:[#allocation3 + $0x810] sm:$0xff] %v745
        %778 = vst [vmem:[#allocation3 + $0x858] sm:$0xff] %v746
        %779 = vst [vmem:[#allocation3 + $0x8a0] sm:$0xff] %v747
        %780 = vst [vmem:[#allocation3 + $0x8e8] sm:$0xff] %v748
        %v781 = vld [vmem:[%s716 + $0x1] sm:$0xff]
        %v782 = vld [vmem:[%s716 + $0x9] sm:$0xff]
        %v783 = vld [vmem:[%s716 + $0x19] sm:$0xff]
        %v784 = vld [vmem:[%s716 + $0x21] sm:$0xff]
        %v785 = vld [vmem:[%s716 + $0x31] sm:$0xff]
        %v786 = vld [vmem:[%s716 + $0x39] sm:$0xff]
        %v787 = vld [vmem:[%s716 + $0x49] sm:$0xff]
        %v788 = vld [vmem:[%s716 + $0x51] sm:$0xff]
        %v789 = vld [vmem:[%s716 + $0x61] sm:$0xff]
        %v790 = vld [vmem:[%s716 + $0x69] sm:$0xff]
        %v791 = vld [vmem:[%s716 + $0x79] sm:$0xff]
        %v792 = vld [vmem:[%s716 + $0x81] sm:$0xff]
        %v793 = vld [vmem:[%s716 + $0x91] sm:$0xff]
        %v794 = vld [vmem:[%s716 + $0x99] sm:$0xff]
        %v795 = vld [vmem:[%s716 + $0xa9] sm:$0xff]
        %v796 = vld [vmem:[%s716 + $0xb1] sm:$0xff]
        %v797 = vld [vmem:[%s716 + $0xc1] sm:$0xff]
        %v798 = vld [vmem:[%s716 + $0xc9] sm:$0xff]
        %v799 = vld [vmem:[%s716 + $0xd9] sm:$0xff]
        %v800 = vld [vmem:[%s716 + $0xe1] sm:$0xff]
        %v801 = vld [vmem:[%s716 + $0xf1] sm:$0xff]
        %v802 = vld [vmem:[%s716 + $0xf9] sm:$0xff]
        %v803 = vld [vmem:[%s716 + $0x109] sm:$0xff]
        %v804 = vld [vmem:[%s716 + $0x111] sm:$0xff]
        %v805 = vld [vmem:[%s716 + $0x121] sm:$0xff]
        %v806 = vld [vmem:[%s716 + $0x129] sm:$0xff]
        %v807 = vld [vmem:[%s716 + $0x139] sm:$0xff]
        %v808 = vld [vmem:[%s716 + $0x141] sm:$0xff]
        %v809 = vld [vmem:[%s716 + $0x151] sm:$0xff]
        %v810 = vld [vmem:[%s716 + $0x159] sm:$0xff]
        %v811 = vld [vmem:[%s716 + $0x169] sm:$0xff]
        %v812 = vld [vmem:[%s716 + $0x171] sm:$0xff]
        %813 = vst [vmem:[#allocation3 + $0x38] sm:$0xff] %v781
        %814 = vst [vmem:[#allocation3 + $0x80] sm:$0xff] %v782
        %815 = vst [vmem:[#allocation3 + $0xc8] sm:$0xff] %v783
        %816 = vst [vmem:[#allocation3 + $0x110] sm:$0xff] %v784
        %817 = vst [vmem:[#allocation3 + $0x158] sm:$0xff] %v785
        %818 = vst [vmem:[#allocation3 + $0x1a0] sm:$0xff] %v786
        %819 = vst [vmem:[#allocation3 + $0x1e8] sm:$0xff] %v787
        %820 = vst [vmem:[#allocation3 + $0x230] sm:$0xff] %v788
        %821 = vst [vmem:[#allocation3 + $0x278] sm:$0xff] %v789
        %822 = vst [vmem:[#allocation3 + $0x2c0] sm:$0xff] %v790
        %823 = vst [vmem:[#allocation3 + $0x308] sm:$0xff] %v791
        %824 = vst [vmem:[#allocation3 + $0x350] sm:$0xff] %v792
        %825 = vst [vmem:[#allocation3 + $0x398] sm:$0xff] %v793
        %826 = vst [vmem:[#allocation3 + $0x3e0] sm:$0xff] %v794
        %827 = vst [vmem:[#allocation3 + $0x428] sm:$0xff] %v795
        %828 = vst [vmem:[#allocation3 + $0x470] sm:$0xff] %v796
        %829 = vst [vmem:[#allocation3 + $0x4b8] sm:$0xff] %v797
        %830 = vst [vmem:[#allocation3 + $0x500] sm:$0xff] %v798
        %831 = vst [vmem:[#allocation3 + $0x548] sm:$0xff] %v799
        %832 = vst [vmem:[#allocation3 + $0x590] sm:$0xff] %v800
        %833 = vst [vmem:[#allocation3 + $0x5d8] sm:$0xff] %v801
        %834 = vst [vmem:[#allocation3 + $0x620] sm:$0xff] %v802
        %835 = vst [vmem:[#allocation3 + $0x668] sm:$0xff] %v803
        %836 = vst [vmem:[#allocation3 + $0x6b0] sm:$0xff] %v804
        %837 = vst [vmem:[#allocation3 + $0x6f8] sm:$0xff] %v805
        %838 = vst [vmem:[#allocation3 + $0x740] sm:$0xff] %v806
        %839 = vst [vmem:[#allocation3 + $0x788] sm:$0xff] %v807
        %840 = vst [vmem:[#allocation3 + $0x7d0] sm:$0xff] %v808
        %841 = vst [vmem:[#allocation3 + $0x818] sm:$0xff] %v809
        %842 = vst [vmem:[#allocation3 + $0x860] sm:$0xff] %v810
        %843 = vst [vmem:[#allocation3 + $0x8a8] sm:$0xff] %v811
        %844 = vst [vmem:[#allocation3 + $0x8f0] sm:$0xff] %v812
        %v845 = vld [vmem:[%s716 + $0x2] sm:$0xff]
        %v846 = vld [vmem:[%s716 + $0xa] sm:$0xff]
        %v847 = vld [vmem:[%s716 + $0x1a] sm:$0xff]
        %v848 = vld [vmem:[%s716 + $0x22] sm:$0xff]
        %v849 = vld [vmem:[%s716 + $0x32] sm:$0xff]
        %v850 = vld [vmem:[%s716 + $0x3a] sm:$0xff]
        %v851 = vld [vmem:[%s716 + $0x4a] sm:$0xff]
        %v852 = vld [vmem:[%s716 + $0x52] sm:$0xff]
        %v853 = vld [vmem:[%s716 + $0x62] sm:$0xff]
        %v854 = vld [vmem:[%s716 + $0x6a] sm:$0xff]
        %v855 = vld [vmem:[%s716 + $0x7a] sm:$0xff]
        %v856 = vld [vmem:[%s716 + $0x82] sm:$0xff]
        %v857 = vld [vmem:[%s716 + $0x92] sm:$0xff]
        %v858 = vld [vmem:[%s716 + $0x9a] sm:$0xff]
        %v859 = vld [vmem:[%s716 + $0xaa] sm:$0xff]
        %v860 = vld [vmem:[%s716 + $0xb2] sm:$0xff]
        %v861 = vld [vmem:[%s716 + $0xc2] sm:$0xff]
        %v862 = vld [vmem:[%s716 + $0xca] sm:$0xff]
        %v863 = vld [vmem:[%s716 + $0xda] sm:$0xff]
        %v864 = vld [vmem:[%s716 + $0xe2] sm:$0xff]
        %v865 = vld [vmem:[%s716 + $0xf2] sm:$0xff]
        %v866 = vld [vmem:[%s716 + $0xfa] sm:$0xff]
        %v867 = vld [vmem:[%s716 + $0x10a] sm:$0xff]
        %v868 = vld [vmem:[%s716 + $0x112] sm:$0xff]
        %v869 = vld [vmem:[%s716 + $0x122] sm:$0xff]
        %v870 = vld [vmem:[%s716 + $0x12a] sm:$0xff]
        %v871 = vld [vmem:[%s716 + $0x13a] sm:$0xff]
        %v872 = vld [vmem:[%s716 + $0x142] sm:$0xff]
        %v873 = vld [vmem:[%s716 + $0x152] sm:$0xff]
        %v874 = vld [vmem:[%s716 + $0x15a] sm:$0xff]
        %v875 = vld [vmem:[%s716 + $0x16a] sm:$0xff]
        %v876 = vld [vmem:[%s716 + $0x172] sm:$0xff]
        %877 = vst [vmem:[#allocation3 + $0x40] sm:$0xff] %v845
        %878 = vst [vmem:[#allocation3 + $0x88] sm:$0xff] %v846
        %879 = vst [vmem:[#allocation3 + $0xd0] sm:$0xff] %v847
        %880 = vst [vmem:[#allocation3 + $0x118] sm:$0xff] %v848
        %881 = vst [vmem:[#allocation3 + $0x160] sm:$0xff] %v849
        %882 = vst [vmem:[#allocation3 + $0x1a8] sm:$0xff] %v850
        %883 = vst [vmem:[#allocation3 + $0x1f0] sm:$0xff] %v851
        %884 = vst [vmem:[#allocation3 + $0x238] sm:$0xff] %v852
        %885 = vst [vmem:[#allocation3 + $0x280] sm:$0xff] %v853
        %886 = vst [vmem:[#allocation3 + $0x2c8] sm:$0xff] %v854
        %887 = vst [vmem:[#allocation3 + $0x310] sm:$0xff] %v855
        %888 = vst [vmem:[#allocation3 + $0x358] sm:$0xff] %v856
        %889 = vst [vmem:[#allocation3 + $0x3a0] sm:$0xff] %v857
        %890 = vst [vmem:[#allocation3 + $0x3e8] sm:$0xff] %v858
        %891 = vst [vmem:[#allocation3 + $0x430] sm:$0xff] %v859
        %892 = vst [vmem:[#allocation3 + $0x478] sm:$0xff] %v860
        %893 = vst [vmem:[#allocation3 + $0x4c0] sm:$0xff] %v861
        %894 = vst [vmem:[#allocation3 + $0x508] sm:$0xff] %v862
        %895 = vst [vmem:[#allocation3 + $0x550] sm:$0xff] %v863
        %896 = vst [vmem:[#allocation3 + $0x598] sm:$0xff] %v864
        %897 = vst [vmem:[#allocation3 + $0x5e0] sm:$0xff] %v865
        %898 = vst [vmem:[#allocation3 + $0x628] sm:$0xff] %v866
        %899 = vst [vmem:[#allocation3 + $0x670] sm:$0xff] %v867
        %900 = vst [vmem:[#allocation3 + $0x6b8] sm:$0xff] %v868
        %901 = vst [vmem:[#allocation3 + $0x700] sm:$0xff] %v869
        %902 = vst [vmem:[#allocation3 + $0x748] sm:$0xff] %v870
        %903 = vst [vmem:[#allocation3 + $0x790] sm:$0xff] %v871
        %904 = vst [vmem:[#allocation3 + $0x7d8] sm:$0xff] %v872
        %905 = vst [vmem:[#allocation3 + $0x820] sm:$0xff] %v873
        %906 = vst [vmem:[#allocation3 + $0x868] sm:$0xff] %v874
        %907 = vst [vmem:[#allocation3 + $0x8b0] sm:$0xff] %v875
        %908 = vst [vmem:[#allocation3 + $0x8f8] sm:$0xff] %v876
        %v909 = vld [vmem:[#allocation3] sm:$0xff]
        %v910 = vld [vmem:[#allocation3 + $0x8] sm:$0xff]
        %v911 = vld [vmem:[#allocation3 + $0x10] sm:$0xff]
        %v912 = vld [vmem:[#allocation3 + $0x18] sm:$0xff]
        %v913 = vld [vmem:[#allocation3 + $0x20] sm:$0xff]
        %v914 = vld [vmem:[#allocation3 + $0x28] sm:$0xff]
        %v915 = vld [vmem:[#allocation3 + $0x30] sm:$0xff]
        %v916 = vld [vmem:[#allocation3 + $0x38] sm:$0xff]
        %v917 = vld [vmem:[#allocation3 + $0x40] sm:$0xff]
        %v918 = vld [vmem:[#allocation3 + $0x48] sm:$0xff]
        %v919 = vld [vmem:[#allocation3 + $0x50] sm:$0xff]
        %v920 = vld [vmem:[#allocation3 + $0x58] sm:$0xff]
        %v921 = vld [vmem:[#allocation3 + $0x60] sm:$0xff]
        %v922 = vld [vmem:[#allocation3 + $0x68] sm:$0xff]
        %v923 = vld [vmem:[#allocation3 + $0x70] sm:$0xff]
        %v924 = vld [vmem:[#allocation3 + $0x78] sm:$0xff]
        %v925 = vld [vmem:[#allocation3 + $0x80] sm:$0xff]
        %v926 = vld [vmem:[#allocation3 + $0x88] sm:$0xff]
        %v927 = vld [vmem:[#allocation3 + $0x90] sm:$0xff]
        %v928 = vld [vmem:[#allocation3 + $0x98] sm:$0xff]
        %v929 = vld [vmem:[#allocation3 + $0xa0] sm:$0xff]
        %v930 = vld [vmem:[#allocation3 + $0xa8] sm:$0xff]
        %v931 = vld [vmem:[#allocation3 + $0xb0] sm:$0xff]
        %v932 = vld [vmem:[#allocation3 + $0xb8] sm:$0xff]
        %v933 = vld [vmem:[#allocation3 + $0xc0] sm:$0xff]
        %v934 = vld [vmem:[#allocation3 + $0xc8] sm:$0xff]
        %v935 = vld [vmem:[#allocation3 + $0xd0] sm:$0xff]
        %v936 = vld [vmem:[#allocation3 + $0xd8] sm:$0xff]
        %v937 = vld [vmem:[#allocation3 + $0xe0] sm:$0xff]
        %v938 = vld [vmem:[#allocation3 + $0xe8] sm:$0xff]
        %v939 = vld [vmem:[#allocation3 + $0xf0] sm:$0xff]
        %v940 = vld [vmem:[#allocation3 + $0xf8] sm:$0xff]
        %v941 = vld [vmem:[#allocation3 + $0x100] sm:$0xff]
        %v942 = vld [vmem:[#allocation3 + $0x108] sm:$0xff]
        %v943 = vld [vmem:[#allocation3 + $0x110] sm:$0xff]
        %v944 = vld [vmem:[#allocation3 + $0x118] sm:$0xff]
        %v945 = vld [vmem:[#allocation3 + $0x120] sm:$0xff]
        %v946 = vld [vmem:[#allocation3 + $0x128] sm:$0xff]
        %v947 = vld [vmem:[#allocation3 + $0x130] sm:$0xff]
        %v948 = vld [vmem:[#allocation3 + $0x138] sm:$0xff]
        %v949 = vld [vmem:[#allocation3 + $0x140] sm:$0xff]
        %v950 = vld [vmem:[#allocation3 + $0x148] sm:$0xff]
        %v951 = vld [vmem:[#allocation3 + $0x150] sm:$0xff]
        %v952 = vld [vmem:[#allocation3 + $0x158] sm:$0xff]
        %v953 = vld [vmem:[#allocation3 + $0x160] sm:$0xff]
        %v954 = vld [vmem:[#allocation3 + $0x168] sm:$0xff]
        %v955 = vld [vmem:[#allocation3 + $0x170] sm:$0xff]
        %v956 = vld [vmem:[#allocation3 + $0x178] sm:$0xff]
        %v957 = vld [vmem:[#allocation3 + $0x180] sm:$0xff]
        %v958 = vld [vmem:[#allocation3 + $0x188] sm:$0xff]
        %v959 = vld [vmem:[#allocation3 + $0x190] sm:$0xff]
        %v960 = vld [vmem:[#allocation3 + $0x198] sm:$0xff]
        %v961 = vld [vmem:[#allocation3 + $0x1a0] sm:$0xff]
        %v962 = vld [vmem:[#allocation3 + $0x1a8] sm:$0xff]
        %v963 = vld [vmem:[#allocation3 + $0x1b0] sm:$0xff]
        %v964 = vld [vmem:[#allocation3 + $0x1b8] sm:$0xff]
        %v965 = vld [vmem:[#allocation3 + $0x1c0] sm:$0xff]
        %v966 = vld [vmem:[#allocation3 + $0x1c8] sm:$0xff]
        %v967 = vld [vmem:[#allocation3 + $0x1d0] sm:$0xff]
        %v968 = vld [vmem:[#allocation3 + $0x1d8] sm:$0xff]
        %v969 = vld [vmem:[#allocation3 + $0x1e0] sm:$0xff]
        %v970 = vld [vmem:[#allocation3 + $0x1e8] sm:$0xff]
        %v971 = vld [vmem:[#allocation3 + $0x1f0] sm:$0xff]
        %v972 = vld [vmem:[#allocation3 + $0x1f8] sm:$0xff]
        %v973 = vld [vmem:[#allocation3 + $0x200] sm:$0xff]
        %v974 = vld [vmem:[#allocation3 + $0x208] sm:$0xff]
        %v975 = vld [vmem:[#allocation3 + $0x210] sm:$0xff]
        %v976 = vld [vmem:[#allocation3 + $0x218] sm:$0xff]
        %v977 = vld [vmem:[#allocation3 + $0x220] sm:$0xff]
        %v978 = vld [vmem:[#allocation3 + $0x228] sm:$0xff]
        %v979 = vld [vmem:[#allocation3 + $0x230] sm:$0xff]
        %v980 = vld [vmem:[#allocation3 + $0x238] sm:$0xff]
        %v981 = vld [vmem:[#allocation3 + $0x240] sm:$0xff]
        %v982 = vld [vmem:[#allocation3 + $0x248] sm:$0xff]
        %v983 = vld [vmem:[#allocation3 + $0x250] sm:$0xff]
        %v984 = vld [vmem:[#allocation3 + $0x258] sm:$0xff]
        %v985 = vld [vmem:[#allocation3 + $0x260] sm:$0xff]
        %v986 = vld [vmem:[#allocation3 + $0x268] sm:$0xff]
        %v987 = vld [vmem:[#allocation3 + $0x270] sm:$0xff]
        %v988 = vld [vmem:[#allocation3 + $0x278] sm:$0xff]
        %v989 = vld [vmem:[#allocation3 + $0x280] sm:$0xff]
        %v990 = vld [vmem:[#allocation3 + $0x288] sm:$0xff]
        %v991 = vld [vmem:[#allocation3 + $0x290] sm:$0xff]
        %v992 = vld [vmem:[#allocation3 + $0x298] sm:$0xff]
        %v993 = vld [vmem:[#allocation3 + $0x2a0] sm:$0xff]
        %v994 = vld [vmem:[#allocation3 + $0x2a8] sm:$0xff]
        %v995 = vld [vmem:[#allocation3 + $0x2b0] sm:$0xff]
        %v996 = vld [vmem:[#allocation3 + $0x2b8] sm:$0xff]
        %v997 = vld [vmem:[#allocation3 + $0x2c0] sm:$0xff]
        %v998 = vld [vmem:[#allocation3 + $0x2c8] sm:$0xff]
        %v999 = vld [vmem:[#allocation3 + $0x2d0] sm:$0xff]
        %v1000 = vld [vmem:[#allocation3 + $0x2d8] sm:$0xff]
        %v1001 = vld [vmem:[#allocation3 + $0x2e0] sm:$0xff]
        %v1002 = vld [vmem:[#allocation3 + $0x2e8] sm:$0xff]
        %v1003 = vld [vmem:[#allocation3 + $0x2f0] sm:$0xff]
        %v1004 = vld [vmem:[#allocation3 + $0x2f8] sm:$0xff]
        %v1005 = vld [vmem:[#allocation3 + $0x300] sm:$0xff]
        %v1006 = vld [vmem:[#allocation3 + $0x308] sm:$0xff]
        %v1007 = vld [vmem:[#allocation3 + $0x310] sm:$0xff]
        %v1008 = vld [vmem:[#allocation3 + $0x318] sm:$0xff]
        %v1009 = vld [vmem:[#allocation3 + $0x320] sm:$0xff]
        %v1010 = vld [vmem:[#allocation3 + $0x328] sm:$0xff]
        %v1011 = vld [vmem:[#allocation3 + $0x330] sm:$0xff]
        %v1012 = vld [vmem:[#allocation3 + $0x338] sm:$0xff]
        %v1013 = vld [vmem:[#allocation3 + $0x340] sm:$0xff]
        %v1014 = vld [vmem:[#allocation3 + $0x348] sm:$0xff]
        %v1015 = vld [vmem:[#allocation3 + $0x350] sm:$0xff]
        %v1016 = vld [vmem:[#allocation3 + $0x358] sm:$0xff]
        %v1017 = vld [vmem:[#allocation3 + $0x360] sm:$0xff]
        %v1018 = vld [vmem:[#allocation3 + $0x368] sm:$0xff]
        %v1019 = vld [vmem:[#allocation3 + $0x370] sm:$0xff]
        %v1020 = vld [vmem:[#allocation3 + $0x378] sm:$0xff]
        %v1021 = vld [vmem:[#allocation3 + $0x380] sm:$0xff]
        %v1022 = vld [vmem:[#allocation3 + $0x388] sm:$0xff]
        %v1023 = vld [vmem:[#allocation3 + $0x390] sm:$0xff]
        %v1024 = vld [vmem:[#allocation3 + $0x398] sm:$0xff]
        %v1025 = vld [vmem:[#allocation3 + $0x3a0] sm:$0xff]
        %v1026 = vld [vmem:[#allocation3 + $0x3a8] sm:$0xff]
        %v1027 = vld [vmem:[#allocation3 + $0x3b0] sm:$0xff]
        %v1028 = vld [vmem:[#allocation3 + $0x3b8] sm:$0xff]
        %v1029 = vld [vmem:[#allocation3 + $0x3c0] sm:$0xff]
        %v1030 = vld [vmem:[#allocation3 + $0x3c8] sm:$0xff]
        %v1031 = vld [vmem:[#allocation3 + $0x3d0] sm:$0xff]
        %v1032 = vld [vmem:[#allocation3 + $0x3d8] sm:$0xff]
        %v1033 = vld [vmem:[#allocation3 + $0x3e0] sm:$0xff]
        %v1034 = vld [vmem:[#allocation3 + $0x3e8] sm:$0xff]
        %v1035 = vld [vmem:[#allocation3 + $0x3f0] sm:$0xff]
        %v1036 = vld [vmem:[#allocation3 + $0x3f8] sm:$0xff]
        %v1037 = vld [vmem:[#allocation3 + $0x400] sm:$0xff]
        %v1038 = vld [vmem:[#allocation3 + $0x408] sm:$0xff]
        %v1039 = vld [vmem:[#allocation3 + $0x410] sm:$0xff]
        %v1040 = vld [vmem:[#allocation3 + $0x418] sm:$0xff]
        %v1041 = vld [vmem:[#allocation3 + $0x420] sm:$0xff]
        %v1042 = vld [vmem:[#allocation3 + $0x428] sm:$0xff]
        %v1043 = vld [vmem:[#allocation3 + $0x430] sm:$0xff]
        %v1044 = vld [vmem:[#allocation3 + $0x438] sm:$0xff]
        %v1045 = vld [vmem:[#allocation3 + $0x440] sm:$0xff]
        %v1046 = vld [vmem:[#allocation3 + $0x448] sm:$0xff]
        %v1047 = vld [vmem:[#allocation3 + $0x450] sm:$0xff]
        %v1048 = vld [vmem:[#allocation3 + $0x458] sm:$0xff]
        %v1049 = vld [vmem:[#allocation3 + $0x460] sm:$0xff]
        %v1050 = vld [vmem:[#allocation3 + $0x468] sm:$0xff]
        %v1051 = vld [vmem:[#allocation3 + $0x470] sm:$0xff]
        %v1052 = vld [vmem:[#allocation3 + $0x478] sm:$0xff]
        %v1053 = vld [vmem:[#allocation3 + $0x480] sm:$0xff]
        %v1054 = vld [vmem:[#allocation3 + $0x488] sm:$0xff]
        %v1055 = vld [vmem:[#allocation3 + $0x490] sm:$0xff]
        %v1056 = vld [vmem:[#allocation3 + $0x498] sm:$0xff]
        %v1057 = vld [vmem:[#allocation3 + $0x4a0] sm:$0xff]
        %v1058 = vld [vmem:[#allocation3 + $0x4a8] sm:$0xff]
        %v1059 = vld [vmem:[#allocation3 + $0x4b0] sm:$0xff]
        %v1060 = vld [vmem:[#allocation3 + $0x4b8] sm:$0xff]
        %v1061 = vld [vmem:[#allocation3 + $0x4c0] sm:$0xff]
        %v1062 = vld [vmem:[#allocation3 + $0x4c8] sm:$0xff]
        %v1063 = vld [vmem:[#allocation3 + $0x4d0] sm:$0xff]
        %v1064 = vld [vmem:[#allocation3 + $0x4d8] sm:$0xff]
        %v1065 = vld [vmem:[#allocation3 + $0x4e0] sm:$0xff]
        %v1066 = vld [vmem:[#allocation3 + $0x4e8] sm:$0xff]
        %v1067 = vld [vmem:[#allocation3 + $0x4f0] sm:$0xff]
        %v1068 = vld [vmem:[#allocation3 + $0x4f8] sm:$0xff]
        %v1069 = vld [vmem:[#allocation3 + $0x500] sm:$0xff]
        %v1070 = vld [vmem:[#allocation3 + $0x508] sm:$0xff]
        %v1071 = vld [vmem:[#allocation3 + $0x510] sm:$0xff]
        %v1072 = vld [vmem:[#allocation3 + $0x518] sm:$0xff]
        %v1073 = vld [vmem:[#allocation3 + $0x520] sm:$0xff]
        %v1074 = vld [vmem:[#allocation3 + $0x528] sm:$0xff]
        %v1075 = vld [vmem:[#allocation3 + $0x530] sm:$0xff]
        %v1076 = vld [vmem:[#allocation3 + $0x538] sm:$0xff]
        %v1077 = vld [vmem:[#allocation3 + $0x540] sm:$0xff]
        %v1078 = vld [vmem:[#allocation3 + $0x548] sm:$0xff]
        %v1079 = vld [vmem:[#allocation3 + $0x550] sm:$0xff]
        %v1080 = vld [vmem:[#allocation3 + $0x558] sm:$0xff]
        %v1081 = vld [vmem:[#allocation3 + $0x560] sm:$0xff]
        %v1082 = vld [vmem:[#allocation3 + $0x568] sm:$0xff]
        %v1083 = vld [vmem:[#allocation3 + $0x570] sm:$0xff]
        %v1084 = vld [vmem:[#allocation3 + $0x578] sm:$0xff]
        %v1085 = vld [vmem:[#allocation3 + $0x580] sm:$0xff]
        %v1086 = vld [vmem:[#allocation3 + $0x588] sm:$0xff]
        %v1087 = vld [vmem:[#allocation3 + $0x590] sm:$0xff]
        %v1088 = vld [vmem:[#allocation3 + $0x598] sm:$0xff]
        %v1089 = vld [vmem:[#allocation3 + $0x5a0] sm:$0xff]
        %v1090 = vld [vmem:[#allocation3 + $0x5a8] sm:$0xff]
        %v1091 = vld [vmem:[#allocation3 + $0x5b0] sm:$0xff]
        %v1092 = vld [vmem:[#allocation3 + $0x5b8] sm:$0xff]
        %v1093 = vld [vmem:[#allocation3 + $0x5c0] sm:$0xff]
        %v1094 = vld [vmem:[#allocation3 + $0x5c8] sm:$0xff]
        %v1095 = vld [vmem:[#allocation3 + $0x5d0] sm:$0xff]
        %v1096 = vld [vmem:[#allocation3 + $0x5d8] sm:$0xff]
        %v1097 = vld [vmem:[#allocation3 + $0x5e0] sm:$0xff]
        %v1098 = vld [vmem:[#allocation3 + $0x5e8] sm:$0xff]
        %v1099 = vld [vmem:[#allocation3 + $0x5f0] sm:$0xff]
        %v1100 = vld [vmem:[#allocation3 + $0x5f8] sm:$0xff]
        %v1101 = vld [vmem:[#allocation3 + $0x600] sm:$0xff]
        %v1102 = vld [vmem:[#allocation3 + $0x608] sm:$0xff]
        %v1103 = vld [vmem:[#allocation3 + $0x610] sm:$0xff]
        %v1104 = vld [vmem:[#allocation3 + $0x618] sm:$0xff]
        %v1105 = vld [vmem:[#allocation3 + $0x620] sm:$0xff]
        %v1106 = vld [vmem:[#allocation3 + $0x628] sm:$0xff]
        %v1107 = vld [vmem:[#allocation3 + $0x630] sm:$0xff]
        %v1108 = vld [vmem:[#allocation3 + $0x638] sm:$0xff]
        %v1109 = vld [vmem:[#allocation3 + $0x640] sm:$0xff]
        %v1110 = vld [vmem:[#allocation3 + $0x648] sm:$0xff]
        %v1111 = vld [vmem:[#allocation3 + $0x650] sm:$0xff]
        %v1112 = vld [vmem:[#allocation3 + $0x658] sm:$0xff]
        %v1113 = vld [vmem:[#allocation3 + $0x660] sm:$0xff]
        %v1114 = vld [vmem:[#allocation3 + $0x668] sm:$0xff]
        %v1115 = vld [vmem:[#allocation3 + $0x670] sm:$0xff]
        %v1116 = vld [vmem:[#allocation3 + $0x678] sm:$0xff]
        %v1117 = vld [vmem:[#allocation3 + $0x680] sm:$0xff]
        %v1118 = vld [vmem:[#allocation3 + $0x688] sm:$0xff]
        %v1119 = vld [vmem:[#allocation3 + $0x690] sm:$0xff]
        %v1120 = vld [vmem:[#allocation3 + $0x698] sm:$0xff]
        %v1121 = vld [vmem:[#allocation3 + $0x6a0] sm:$0xff]
        %v1122 = vld [vmem:[#allocation3 + $0x6a8] sm:$0xff]
        %v1123 = vld [vmem:[#allocation3 + $0x6b0] sm:$0xff]
        %v1124 = vld [vmem:[#allocation3 + $0x6b8] sm:$0xff]
        %v1125 = vld [vmem:[#allocation3 + $0x6c0] sm:$0xff]
        %v1126 = vld [vmem:[#allocation3 + $0x6c8] sm:$0xff]
        %v1127 = vld [vmem:[#allocation3 + $0x6d0] sm:$0xff]
        %v1128 = vld [vmem:[#allocation3 + $0x6d8] sm:$0xff]
        %v1129 = vld [vmem:[#allocation3 + $0x6e0] sm:$0xff]
        %v1130 = vld [vmem:[#allocation3 + $0x6e8] sm:$0xff]
        %v1131 = vld [vmem:[#allocation3 + $0x6f0] sm:$0xff]
        %v1132 = vld [vmem:[#allocation3 + $0x6f8] sm:$0xff]
        %v1133 = vld [vmem:[#allocation3 + $0x700] sm:$0xff]
        %v1134 = vld [vmem:[#allocation3 + $0x708] sm:$0xff]
        %v1135 = vld [vmem:[#allocation3 + $0x710] sm:$0xff]
        %v1136 = vld [vmem:[#allocation3 + $0x718] sm:$0xff]
        %v1137 = vld [vmem:[#allocation3 + $0x720] sm:$0xff]
        %v1138 = vld [vmem:[#allocation3 + $0x728] sm:$0xff]
        %v1139 = vld [vmem:[#allocation3 + $0x730] sm:$0xff]
        %v1140 = vld [vmem:[#allocation3 + $0x738] sm:$0xff]
        %v1141 = vld [vmem:[#allocation3 + $0x740] sm:$0xff]
        %v1142 = vld [vmem:[#allocation3 + $0x748] sm:$0xff]
        %v1143 = vld [vmem:[#allocation3 + $0x750] sm:$0xff]
        %v1144 = vld [vmem:[#allocation3 + $0x758] sm:$0xff]
        %v1145 = vld [vmem:[#allocation3 + $0x760] sm:$0xff]
        %v1146 = vld [vmem:[#allocation3 + $0x768] sm:$0xff]
        %v1147 = vld [vmem:[#allocation3 + $0x770] sm:$0xff]
        %v1148 = vld [vmem:[#allocation3 + $0x778] sm:$0xff]
        %v1149 = vld [vmem:[#allocation3 + $0x780] sm:$0xff]
        %v1150 = vld [vmem:[#allocation3 + $0x788] sm:$0xff]
        %v1151 = vld [vmem:[#allocation3 + $0x790] sm:$0xff]
        %v1152 = vld [vmem:[#allocation3 + $0x798] sm:$0xff]
        %v1153 = vld [vmem:[#allocation3 + $0x7a0] sm:$0xff]
        %v1154 = vld [vmem:[#allocation3 + $0x7a8] sm:$0xff]
        %v1155 = vld [vmem:[#allocation3 + $0x7b0] sm:$0xff]
        %v1156 = vld [vmem:[#allocation3 + $0x7b8] sm:$0xff]
        %v1157 = vld [vmem:[#allocation3 + $0x7c0] sm:$0xff]
        %v1158 = vld [vmem:[#allocation3 + $0x7c8] sm:$0xff]
        %v1159 = vld [vmem:[#allocation3 + $0x7d0] sm:$0xff]
        %v1160 = vld [vmem:[#allocation3 + $0x7d8] sm:$0xff]
        %v1161 = vld [vmem:[#allocation3 + $0x7e0] sm:$0xff]
        %v1162 = vld [vmem:[#allocation3 + $0x7e8] sm:$0xff]
        %v1163 = vld [vmem:[#allocation3 + $0x7f0] sm:$0xff]
        %v1164 = vld [vmem:[#allocation3 + $0x7f8] sm:$0xff]
        %v1165 = vld [vmem:[#allocation3 + $0x800] sm:$0xff]
        %v1166 = vld [vmem:[#allocation3 + $0x808] sm:$0xff]
        %v1167 = vld [vmem:[#allocation3 + $0x810] sm:$0xff]
        %v1168 = vld [vmem:[#allocation3 + $0x818] sm:$0xff]
        %v1169 = vld [vmem:[#allocation3 + $0x820] sm:$0xff]
        %v1170 = vld [vmem:[#allocation3 + $0x828] sm:$0xff]
        %v1171 = vld [vmem:[#allocation3 + $0x830] sm:$0xff]
        %v1172 = vld [vmem:[#allocation3 + $0x838] sm:$0xff]
        %v1173 = vld [vmem:[#allocation3 + $0x840] sm:$0xff]
        %v1174 = vld [vmem:[#allocation3 + $0x848] sm:$0xff]
        %v1175 = vld [vmem:[#allocation3 + $0x850] sm:$0xff]
        %v1176 = vld [vmem:[#allocation3 + $0x858] sm:$0xff]
        %v1177 = vld [vmem:[#allocation3 + $0x860] sm:$0xff]
        %v1178 = vld [vmem:[#allocation3 + $0x868] sm:$0xff]
        %v1179 = vld [vmem:[#allocation3 + $0x870] sm:$0xff]
        %v1180 = vld [vmem:[#allocation3 + $0x878] sm:$0xff]
        %v1181 = vld [vmem:[#allocation3 + $0x880] sm:$0xff]
        %v1182 = vld [vmem:[#allocation3 + $0x888] sm:$0xff]
        %v1183 = vld [vmem:[#allocation3 + $0x890] sm:$0xff]
        %v1184 = vld [vmem:[#allocation3 + $0x898] sm:$0xff]
        %v1185 = vld [vmem:[#allocation3 + $0x8a0] sm:$0xff]
        %v1186 = vld [vmem:[#allocation3 + $0x8a8] sm:$0xff]
        %v1187 = vld [vmem:[#allocation3 + $0x8b0] sm:$0xff]
        %v1188 = vld [vmem:[#allocation3 + $0x8b8] sm:$0xff]
        %v1189 = vld [vmem:[#allocation3 + $0x8c0] sm:$0xff]
        %v1190 = vld [vmem:[#allocation3 + $0x8c8] sm:$0xff]
        %v1191 = vld [vmem:[#allocation3 + $0x8d0] sm:$0xff]
        %v1192 = vld [vmem:[#allocation3 + $0x8d8] sm:$0xff]
        %v1193 = vld [vmem:[#allocation3 + $0x8e0] sm:$0xff]
        %v1194 = vld [vmem:[#allocation3 + $0x8e8] sm:$0xff]
        %v1195 = vld [vmem:[#allocation3 + $0x8f0] sm:$0xff]
        %v1196 = vld [vmem:[#allocation3 + $0x8f8] sm:$0xff]
        %v1197 = vld [vmem:[#allocation7] sm:$0xff]
        %v1198 = vld [vmem:[#allocation7 + $0x8] sm:$0xff]
        %v1199 = vld [vmem:[#allocation7 + $0x10] sm:$0xff]
        %v1200 = vld [vmem:[#allocation7 + $0x18] sm:$0xff]
        %v1201 = vld [vmem:[#allocation7 + $0x20] sm:$0xff]
        %v1202 = vld [vmem:[#allocation7 + $0x28] sm:$0xff]
        %v1203 = vld [vmem:[#allocation7 + $0x30] sm:$0xff]
        %v1204 = vld [vmem:[#allocation7 + $0x38] sm:$0xff]
        %v1205 = vld [vmem:[#allocation7 + $0x40] sm:$0xff]
        %v1206 = vld [vmem:[#allocation7 + $0x48] sm:$0xff]
        %v1207 = vld [vmem:[#allocation7 + $0x50] sm:$0xff]
        %v1208 = vld [vmem:[#allocation7 + $0x58] sm:$0xff]
        %v1209 = vld [vmem:[#allocation7 + $0x60] sm:$0xff]
        %v1210 = vld [vmem:[#allocation7 + $0x68] sm:$0xff]
        %v1211 = vld [vmem:[#allocation7 + $0x70] sm:$0xff]
        %v1212 = vld [vmem:[#allocation7 + $0x78] sm:$0xff]
        %v1213 = vld [vmem:[#allocation7 + $0x80] sm:$0xff]
        %v1214 = vld [vmem:[#allocation7 + $0x88] sm:$0xff]
        %v1215 = vld [vmem:[#allocation7 + $0x90] sm:$0xff]
        %v1216 = vld [vmem:[#allocation7 + $0x98] sm:$0xff]
        %v1217 = vld [vmem:[#allocation7 + $0xa0] sm:$0xff]
        %v1218 = vld [vmem:[#allocation7 + $0xa8] sm:$0xff]
        %v1219 = vld [vmem:[#allocation7 + $0xb0] sm:$0xff]
        %v1220 = vld [vmem:[#allocation7 + $0xb8] sm:$0xff]
        %v1221 = vld [vmem:[#allocation7 + $0xc0] sm:$0xff]
        %v1222 = vld [vmem:[#allocation7 + $0xc8] sm:$0xff]
        %v1223 = vld [vmem:[#allocation7 + $0xd0] sm:$0xff]
        %v1224 = vld [vmem:[#allocation7 + $0xd8] sm:$0xff]
        %v1225 = vld [vmem:[#allocation7 + $0xe0] sm:$0xff]
        %v1226 = vld [vmem:[#allocation7 + $0xe8] sm:$0xff]
        %v1227 = vld [vmem:[#allocation7 + $0xf0] sm:$0xff]
        %v1228 = vld [vmem:[#allocation7 + $0xf8] sm:$0xff]
        %v1229 = vld [vmem:[#allocation7 + $0x100] sm:$0xff]
        %v1230 = vld [vmem:[#allocation7 + $0x108] sm:$0xff]
        %v1231 = vld [vmem:[#allocation7 + $0x110] sm:$0xff]
        %v1232 = vld [vmem:[#allocation7 + $0x118] sm:$0xff]
        %v1233 = vld [vmem:[#allocation7 + $0x120] sm:$0xff]
        %v1234 = vld [vmem:[#allocation7 + $0x128] sm:$0xff]
        %v1235 = vld [vmem:[#allocation7 + $0x130] sm:$0xff]
        %v1236 = vld [vmem:[#allocation7 + $0x138] sm:$0xff]
        %v1237 = vld [vmem:[#allocation7 + $0x140] sm:$0xff]
        %v1238 = vld [vmem:[#allocation7 + $0x148] sm:$0xff]
        %v1239 = vld [vmem:[#allocation7 + $0x150] sm:$0xff]
        %v1240 = vld [vmem:[#allocation7 + $0x158] sm:$0xff]
        %v1241 = vld [vmem:[#allocation7 + $0x160] sm:$0xff]
        %v1242 = vld [vmem:[#allocation7 + $0x168] sm:$0xff]
        %v1243 = vld [vmem:[#allocation7 + $0x170] sm:$0xff]
        %v1244 = vld [vmem:[#allocation7 + $0x178] sm:$0xff]
        %v1245 = vld [vmem:[#allocation7 + $0x180] sm:$0xff]
        %v1246 = vld [vmem:[#allocation7 + $0x188] sm:$0xff]
        %v1247 = vld [vmem:[#allocation7 + $0x190] sm:$0xff]
        %v1248 = vld [vmem:[#allocation7 + $0x198] sm:$0xff]
        %v1249 = vld [vmem:[#allocation7 + $0x1a0] sm:$0xff]
        %v1250 = vld [vmem:[#allocation7 + $0x1a8] sm:$0xff]
        %v1251 = vld [vmem:[#allocation7 + $0x1b0] sm:$0xff]
        %v1252 = vld [vmem:[#allocation7 + $0x1b8] sm:$0xff]
        %v1253 = vld [vmem:[#allocation7 + $0x1c0] sm:$0xff]
        %v1254 = vld [vmem:[#allocation7 + $0x1c8] sm:$0xff]
        %v1255 = vld [vmem:[#allocation7 + $0x1d0] sm:$0xff]
        %v1256 = vld [vmem:[#allocation7 + $0x1d8] sm:$0xff]
        %v1257 = vld [vmem:[#allocation7 + $0x1e0] sm:$0xff]
        %v1258 = vld [vmem:[#allocation7 + $0x1e8] sm:$0xff]
        %v1259 = vld [vmem:[#allocation7 + $0x1f0] sm:$0xff]
        %v1260 = vld [vmem:[#allocation7 + $0x1f8] sm:$0xff]
        %v1261 = vld [vmem:[#allocation7 + $0x200] sm:$0xff]
        %v1262 = vld [vmem:[#allocation7 + $0x208] sm:$0xff]
        %v1263 = vld [vmem:[#allocation7 + $0x210] sm:$0xff]
        %v1264 = vld [vmem:[#allocation7 + $0x218] sm:$0xff]
        %v1265 = vld [vmem:[#allocation7 + $0x220] sm:$0xff]
        %v1266 = vld [vmem:[#allocation7 + $0x228] sm:$0xff]
        %v1267 = vld [vmem:[#allocation7 + $0x230] sm:$0xff]
        %v1268 = vld [vmem:[#allocation7 + $0x238] sm:$0xff]
        %v1269 = vld [vmem:[#allocation7 + $0x240] sm:$0xff]
        %v1270 = vld [vmem:[#allocation7 + $0x248] sm:$0xff]
        %v1271 = vld [vmem:[#allocation7 + $0x250] sm:$0xff]
        %v1272 = vld [vmem:[#allocation7 + $0x258] sm:$0xff]
        %v1273 = vld [vmem:[#allocation7 + $0x260] sm:$0xff]
        %v1274 = vld [vmem:[#allocation7 + $0x268] sm:$0xff]
        %v1275 = vld [vmem:[#allocation7 + $0x270] sm:$0xff]
        %v1276 = vld [vmem:[#allocation7 + $0x278] sm:$0xff]
        %v1277 = vld [vmem:[#allocation7 + $0x280] sm:$0xff]
        %v1278 = vld [vmem:[#allocation7 + $0x288] sm:$0xff]
        %v1279 = vld [vmem:[#allocation7 + $0x290] sm:$0xff]
        %v1280 = vld [vmem:[#allocation7 + $0x298] sm:$0xff]
        %v1281 = vld [vmem:[#allocation7 + $0x2a0] sm:$0xff]
        %v1282 = vld [vmem:[#allocation7 + $0x2a8] sm:$0xff]
        %v1283 = vld [vmem:[#allocation7 + $0x2b0] sm:$0xff]
        %v1284 = vld [vmem:[#allocation7 + $0x2b8] sm:$0xff]
        %v1285 = vld [vmem:[#allocation7 + $0x2c0] sm:$0xff]
        %v1286 = vld [vmem:[#allocation7 + $0x2c8] sm:$0xff]
        %v1287 = vld [vmem:[#allocation7 + $0x2d0] sm:$0xff]
        %v1288 = vld [vmem:[#allocation7 + $0x2d8] sm:$0xff]
        %v1289 = vld [vmem:[#allocation7 + $0x2e0] sm:$0xff]
        %v1290 = vld [vmem:[#allocation7 + $0x2e8] sm:$0xff]
        %v1291 = vld [vmem:[#allocation7 + $0x2f0] sm:$0xff]
        %v1292 = vld [vmem:[#allocation7 + $0x2f8] sm:$0xff]
        %v1293 = vld [vmem:[#allocation7 + $0x300] sm:$0xff]
        %v1294 = vld [vmem:[#allocation7 + $0x308] sm:$0xff]
        %v1295 = vld [vmem:[#allocation7 + $0x310] sm:$0xff]
        %v1296 = vld [vmem:[#allocation7 + $0x318] sm:$0xff]
        %v1297 = vld [vmem:[#allocation7 + $0x320] sm:$0xff]
        %v1298 = vld [vmem:[#allocation7 + $0x328] sm:$0xff]
        %v1299 = vld [vmem:[#allocation7 + $0x330] sm:$0xff]
        %v1300 = vld [vmem:[#allocation7 + $0x338] sm:$0xff]
        %v1301 = vld [vmem:[#allocation7 + $0x340] sm:$0xff]
        %v1302 = vld [vmem:[#allocation7 + $0x348] sm:$0xff]
        %v1303 = vld [vmem:[#allocation7 + $0x350] sm:$0xff]
        %v1304 = vld [vmem:[#allocation7 + $0x358] sm:$0xff]
        %v1305 = vld [vmem:[#allocation7 + $0x360] sm:$0xff]
        %v1306 = vld [vmem:[#allocation7 + $0x368] sm:$0xff]
        %v1307 = vld [vmem:[#allocation7 + $0x370] sm:$0xff]
        %v1308 = vld [vmem:[#allocation7 + $0x378] sm:$0xff]
        %v1309 = vld [vmem:[#allocation7 + $0x380] sm:$0xff]
        %v1310 = vld [vmem:[#allocation7 + $0x388] sm:$0xff]
        %v1311 = vld [vmem:[#allocation7 + $0x390] sm:$0xff]
        %v1312 = vld [vmem:[#allocation7 + $0x398] sm:$0xff]
        %v1313 = vld [vmem:[#allocation7 + $0x3a0] sm:$0xff]
        %v1314 = vld [vmem:[#allocation7 + $0x3a8] sm:$0xff]
        %v1315 = vld [vmem:[#allocation7 + $0x3b0] sm:$0xff]
        %v1316 = vld [vmem:[#allocation7 + $0x3b8] sm:$0xff]
        %v1317 = vld [vmem:[#allocation7 + $0x3c0] sm:$0xff]
        %v1318 = vld [vmem:[#allocation7 + $0x3c8] sm:$0xff]
        %v1319 = vld [vmem:[#allocation7 + $0x3d0] sm:$0xff]
        %v1320 = vld [vmem:[#allocation7 + $0x3d8] sm:$0xff]
        %v1321 = vld [vmem:[#allocation7 + $0x3e0] sm:$0xff]
        %v1322 = vld [vmem:[#allocation7 + $0x3e8] sm:$0xff]
        %v1323 = vld [vmem:[#allocation7 + $0x3f0] sm:$0xff]
        %v1324 = vld [vmem:[#allocation7 + $0x3f8] sm:$0xff]
        %v1325 = vld [vmem:[#allocation7 + $0x400] sm:$0xff]
        %v1326 = vld [vmem:[#allocation7 + $0x408] sm:$0xff]
        %v1327 = vld [vmem:[#allocation7 + $0x410] sm:$0xff]
        %v1328 = vld [vmem:[#allocation7 + $0x418] sm:$0xff]
        %v1329 = vld [vmem:[#allocation7 + $0x420] sm:$0xff]
        %v1330 = vld [vmem:[#allocation7 + $0x428] sm:$0xff]
        %v1331 = vld [vmem:[#allocation7 + $0x430] sm:$0xff]
        %v1332 = vld [vmem:[#allocation7 + $0x438] sm:$0xff]
        %v1333 = vld [vmem:[#allocation7 + $0x440] sm:$0xff]
        %v1334 = vld [vmem:[#allocation7 + $0x448] sm:$0xff]
        %v1335 = vld [vmem:[#allocation7 + $0x450] sm:$0xff]
        %v1336 = vld [vmem:[#allocation7 + $0x458] sm:$0xff]
        %v1337 = vld [vmem:[#allocation7 + $0x460] sm:$0xff]
        %v1338 = vld [vmem:[#allocation7 + $0x468] sm:$0xff]
        %v1339 = vld [vmem:[#allocation7 + $0x470] sm:$0xff]
        %v1340 = vld [vmem:[#allocation7 + $0x478] sm:$0xff]
        %1341 = vmatpush.msra.mxu0 %v1212
        %1342 = vmatpush.msra.mxu0 %v1211
        %1343 = vmatpush.msra.mxu0 %v1210
        %1344 = vmatpush.msra.mxu0 %v1209
        %1345 = vmatpush.msra.mxu0 %v1208
        %1346 = vmatpush.msra.mxu0 %v1207
        %1347 = vmatpush.msra.mxu0 %v1206
        %1348 = vmatpush.msra.mxu0 %v1205
        %1349 = vmatpush.msra.mxu0 %v1204
        %1350 = vmatpush.msra.mxu0 %v1203
        %1351 = vmatpush.msra.mxu0 %v1202
        %1352 = vmatpush.msra.mxu0 %v1201
        %1353 = vmatpush.msra.mxu0 %v1200
        %1354 = vmatpush.msra.mxu0 %v1199
        %1355 = vmatpush.msra.mxu0 %v1198
        %1356 = vmatpush.msra.mxu0 %v1197
        %1357 = vmatmul.f32.gmra.mxu0 %v909
        %v1358 = vpop.f32.mrf.mxu0
        %v1359 = vadd.f32 0.0, %v1358
        %1360 = vmatmul.f32.gmra.mxu0 %v918
        %v1361 = vpop.f32.mrf.mxu0
        %v1362 = vadd.f32 0.0, %v1361
        %1363 = vmatmul.f32.gmra.mxu0 %v927
        %v1364 = vpop.f32.mrf.mxu0
        %v1365 = vadd.f32 0.0, %v1364
        %1366 = vmatmul.f32.gmra.mxu0 %v936
        %v1367 = vpop.f32.mrf.mxu0
        %v1368 = vadd.f32 0.0, %v1367
        %1369 = vmatmul.f32.gmra.mxu0 %v945
        %v1370 = vpop.f32.mrf.mxu0
        %v1371 = vadd.f32 0.0, %v1370
        %1372 = vmatmul.f32.gmra.mxu0 %v954
        %v1373 = vpop.f32.mrf.mxu0
        %v1374 = vadd.f32 0.0, %v1373
        %1375 = vmatmul.f32.gmra.mxu0 %v963
        %v1376 = vpop.f32.mrf.mxu0
        %v1377 = vadd.f32 0.0, %v1376
        %1378 = vmatmul.f32.gmra.mxu0 %v972
        %v1379 = vpop.f32.mrf.mxu0
        %v1380 = vadd.f32 0.0, %v1379
        %1381 = vmatmul.f32.gmra.mxu0 %v981
        %v1382 = vpop.f32.mrf.mxu0
        %v1383 = vadd.f32 0.0, %v1382
        %1384 = vmatmul.f32.gmra.mxu0 %v990
        %v1385 = vpop.f32.mrf.mxu0
        %v1386 = vadd.f32 0.0, %v1385
        %1387 = vmatmul.f32.gmra.mxu0 %v999
        %v1388 = vpop.f32.mrf.mxu0
        %v1389 = vadd.f32 0.0, %v1388
        %1390 = vmatmul.f32.gmra.mxu0 %v1008
        %v1391 = vpop.f32.mrf.mxu0
        %v1392 = vadd.f32 0.0, %v1391
        %1393 = vmatmul.f32.gmra.mxu0 %v1017
        %v1394 = vpop.f32.mrf.mxu0
        %v1395 = vadd.f32 0.0, %v1394
        %1396 = vmatmul.f32.gmra.mxu0 %v1026
        %v1397 = vpop.f32.mrf.mxu0
        %v1398 = vadd.f32 0.0, %v1397
        %1399 = vmatmul.f32.gmra.mxu0 %v1035
        %v1400 = vpop.f32.mrf.mxu0
        %v1401 = vadd.f32 0.0, %v1400
        %1402 = vmatmul.f32.gmra.mxu0 %v1044
        %v1403 = vpop.f32.mrf.mxu0
        %v1404 = vadd.f32 0.0, %v1403
        %1405 = vmatmul.f32.gmra.mxu0 %v1053
        %v1406 = vpop.f32.mrf.mxu0
        %v1407 = vadd.f32 0.0, %v1406
        %1408 = vmatmul.f32.gmra.mxu0 %v1062
        %v1409 = vpop.f32.mrf.mxu0
        %v1410 = vadd.f32 0.0, %v1409
        %1411 = vmatmul.f32.gmra.mxu0 %v1071
        %v1412 = vpop.f32.mrf.mxu0
        %v1413 = vadd.f32 0.0, %v1412
        %1414 = vmatmul.f32.gmra.mxu0 %v1080
        %v1415 = vpop.f32.mrf.mxu0
        %v1416 = vadd.f32 0.0, %v1415
        %1417 = vmatmul.f32.gmra.mxu0 %v1089
        %v1418 = vpop.f32.mrf.mxu0
        %v1419 = vadd.f32 0.0, %v1418
        %1420 = vmatmul.f32.gmra.mxu0 %v1098
        %v1421 = vpop.f32.mrf.mxu0
        %v1422 = vadd.f32 0.0, %v1421
        %1423 = vmatmul.f32.gmra.mxu0 %v1107
        %v1424 = vpop.f32.mrf.mxu0
        %v1425 = vadd.f32 0.0, %v1424
        %1426 = vmatmul.f32.gmra.mxu0 %v1116
        %v1427 = vpop.f32.mrf.mxu0
        %v1428 = vadd.f32 0.0, %v1427
        %1429 = vmatmul.f32.gmra.mxu0 %v1125
        %v1430 = vpop.f32.mrf.mxu0
        %v1431 = vadd.f32 0.0, %v1430
        %1432 = vmatmul.f32.gmra.mxu0 %v1134
        %v1433 = vpop.f32.mrf.mxu0
        %v1434 = vadd.f32 0.0, %v1433
        %1435 = vmatmul.f32.gmra.mxu0 %v1143
        %v1436 = vpop.f32.mrf.mxu0
        %v1437 = vadd.f32 0.0, %v1436
        %1438 = vmatmul.f32.gmra.mxu0 %v1152
        %v1439 = vpop.f32.mrf.mxu0
        %v1440 = vadd.f32 0.0, %v1439
        %1441 = vmatmul.f32.gmra.mxu0 %v1161
        %v1442 = vpop.f32.mrf.mxu0
        %v1443 = vadd.f32 0.0, %v1442
        %1444 = vmatmul.f32.gmra.mxu0 %v1170
        %v1445 = vpop.f32.mrf.mxu0
        %v1446 = vadd.f32 0.0, %v1445
        %1447 = vmatmul.f32.gmra.mxu0 %v1179
        %v1448 = vpop.f32.mrf.mxu0
        %v1449 = vadd.f32 0.0, %v1448
        %1450 = vmatmul.f32.gmra.mxu0 %v1188
        %v1451 = vpop.f32.mrf.mxu0
        %v1452 = vadd.f32 0.0, %v1451
        %1453 = vdwg.mxu0
        %1454 = vmatpush.msra.mxu0 %v1228
        %1455 = vmatpush.msra.mxu0 %v1227
        %1456 = vmatpush.msra.mxu0 %v1226
        %1457 = vmatpush.msra.mxu0 %v1225
        %1458 = vmatpush.msra.mxu0 %v1224
        %1459 = vmatpush.msra.mxu0 %v1223
        %1460 = vmatpush.msra.mxu0 %v1222
        %1461 = vmatpush.msra.mxu0 %v1221
        %1462 = vmatpush.msra.mxu0 %v1220
        %1463 = vmatpush.msra.mxu0 %v1219
        %1464 = vmatpush.msra.mxu0 %v1218
        %1465 = vmatpush.msra.mxu0 %v1217
        %1466 = vmatpush.msra.mxu0 %v1216
        %1467 = vmatpush.msra.mxu0 %v1215
        %1468 = vmatpush.msra.mxu0 %v1214
        %1469 = vmatpush.msra.mxu0 %v1213
        %1470 = vmatmul.f32.gmra.mxu0 %v910
        %v1471 = vpop.f32.mrf.mxu0
        %v1472 = vadd.f32 %v1359, %v1471
        %1473 = vmatmul.f32.gmra.mxu0 %v919
        %v1474 = vpop.f32.mrf.mxu0
        %v1475 = vadd.f32 %v1362, %v1474
        %1476 = vmatmul.f32.gmra.mxu0 %v928
        %v1477 = vpop.f32.mrf.mxu0
        %v1478 = vadd.f32 %v1365, %v1477
        %1479 = vmatmul.f32.gmra.mxu0 %v937
        %v1480 = vpop.f32.mrf.mxu0
        %v1481 = vadd.f32 %v1368, %v1480
        %1482 = vmatmul.f32.gmra.mxu0 %v946
        %v1483 = vpop.f32.mrf.mxu0
        %v1484 = vadd.f32 %v1371, %v1483
        %1485 = vmatmul.f32.gmra.mxu0 %v955
        %v1486 = vpop.f32.mrf.mxu0
        %v1487 = vadd.f32 %v1374, %v1486
        %1488 = vmatmul.f32.gmra.mxu0 %v964
        %v1489 = vpop.f32.mrf.mxu0
        %v1490 = vadd.f32 %v1377, %v1489
        %1491 = vmatmul.f32.gmra.mxu0 %v973
        %v1492 = vpop.f32.mrf.mxu0
        %v1493 = vadd.f32 %v1380, %v1492
        %1494 = vmatmul.f32.gmra.mxu0 %v982
        %v1495 = vpop.f32.mrf.mxu0
        %v1496 = vadd.f32 %v1383, %v1495
        %1497 = vmatmul.f32.gmra.mxu0 %v991
        %v1498 = vpop.f32.mrf.mxu0
        %v1499 = vadd.f32 %v1386, %v1498
        %1500 = vmatmul.f32.gmra.mxu0 %v1000
        %v1501 = vpop.f32.mrf.mxu0
        %v1502 = vadd.f32 %v1389, %v1501
        %1503 = vmatmul.f32.gmra.mxu0 %v1009
        %v1504 = vpop.f32.mrf.mxu0
        %v1505 = vadd.f32 %v1392, %v1504
        %1506 = vmatmul.f32.gmra.mxu0 %v1018
        %v1507 = vpop.f32.mrf.mxu0
        %v1508 = vadd.f32 %v1395, %v1507
        %1509 = vmatmul.f32.gmra.mxu0 %v1027
        %v1510 = vpop.f32.mrf.mxu0
        %v1511 = vadd.f32 %v1398, %v1510
        %1512 = vmatmul.f32.gmra.mxu0 %v1036
        %v1513 = vpop.f32.mrf.mxu0
        %v1514 = vadd.f32 %v1401, %v1513
        %1515 = vmatmul.f32.gmra.mxu0 %v1045
        %v1516 = vpop.f32.mrf.mxu0
        %v1517 = vadd.f32 %v1404, %v1516
        %1518 = vmatmul.f32.gmra.mxu0 %v1054
        %v1519 = vpop.f32.mrf.mxu0
        %v1520 = vadd.f32 %v1407, %v1519
        %1521 = vmatmul.f32.gmra.mxu0 %v1063
        %v1522 = vpop.f32.mrf.mxu0
        %v1523 = vadd.f32 %v1410, %v1522
        %1524 = vmatmul.f32.gmra.mxu0 %v1072
        %v1525 = vpop.f32.mrf.mxu0
        %v1526 = vadd.f32 %v1413, %v1525
        %1527 = vmatmul.f32.gmra.mxu0 %v1081
        %v1528 = vpop.f32.mrf.mxu0
        %v1529 = vadd.f32 %v1416, %v1528
        %1530 = vmatmul.f32.gmra.mxu0 %v1090
        %v1531 = vpop.f32.mrf.mxu0
        %v1532 = vadd.f32 %v1419, %v1531
        %1533 = vmatmul.f32.gmra.mxu0 %v1099
        %v1534 = vpop.f32.mrf.mxu0
        %v1535 = vadd.f32 %v1422, %v1534
        %1536 = vmatmul.f32.gmra.mxu0 %v1108
        %v1537 = vpop.f32.mrf.mxu0
        %v1538 = vadd.f32 %v1425, %v1537
        %1539 = vmatmul.f32.gmra.mxu0 %v1117
        %v1540 = vpop.f32.mrf.mxu0
        %v1541 = vadd.f32 %v1428, %v1540
        %1542 = vmatmul.f32.gmra.mxu0 %v1126
        %v1543 = vpop.f32.mrf.mxu0
        %v1544 = vadd.f32 %v1431, %v1543
        %1545 = vmatmul.f32.gmra.mxu0 %v1135
        %v1546 = vpop.f32.mrf.mxu0
        %v1547 = vadd.f32 %v1434, %v1546
        %1548 = vmatmul.f32.gmra.mxu0 %v1144
        %v1549 = vpop.f32.mrf.mxu0
        %v1550 = vadd.f32 %v1437, %v1549
        %1551 = vmatmul.f32.gmra.mxu0 %v1153
        %v1552 = vpop.f32.mrf.mxu0
        %v1553 = vadd.f32 %v1440, %v1552
        %1554 = vmatmul.f32.gmra.mxu0 %v1162
        %v1555 = vpop.f32.mrf.mxu0
        %v1556 = vadd.f32 %v1443, %v1555
        %1557 = vmatmul.f32.gmra.mxu0 %v1171
        %v1558 = vpop.f32.mrf.mxu0
        %v1559 = vadd.f32 %v1446, %v1558
        %1560 = vmatmul.f32.gmra.mxu0 %v1180
        %v1561 = vpop.f32.mrf.mxu0
        %v1562 = vadd.f32 %v1449, %v1561
        %1563 = vmatmul.f32.gmra.mxu0 %v1189
        %v1564 = vpop.f32.mrf.mxu0
        %v1565 = vadd.f32 %v1452, %v1564
        %1566 = vdwg.mxu0
        %1567 = vmatpush.msra.mxu0 %v1244
        %1568 = vmatpush.msra.mxu0 %v1243
        %1569 = vmatpush.msra.mxu0 %v1242
        %1570 = vmatpush.msra.mxu0 %v1241
        %1571 = vmatpush.msra.mxu0 %v1240
        %1572 = vmatpush.msra.mxu0 %v1239
        %1573 = vmatpush.msra.mxu0 %v1238
        %1574 = vmatpush.msra.mxu0 %v1237
        %1575 = vmatpush.msra.mxu0 %v1236
        %1576 = vmatpush.msra.mxu0 %v1235
        %1577 = vmatpush.msra.mxu0 %v1234
        %1578 = vmatpush.msra.mxu0 %v1233
        %1579 = vmatpush.msra.mxu0 %v1232
        %1580 = vmatpush.msra.mxu0 %v1231
        %1581 = vmatpush.msra.mxu0 %v1230
        %1582 = vmatpush.msra.mxu0 %v1229
        %1583 = vmatmul.f32.gmra.mxu0 %v911
        %v1584 = vpop.f32.mrf.mxu0
        %v1585 = vadd.f32 %v1472, %v1584
        %1586 = vmatmul.f32.gmra.mxu0 %v920
        %v1587 = vpop.f32.mrf.mxu0
        %v1588 = vadd.f32 %v1475, %v1587
        %1589 = vmatmul.f32.gmra.mxu0 %v929
        %v1590 = vpop.f32.mrf.mxu0
        %v1591 = vadd.f32 %v1478, %v1590
        %1592 = vmatmul.f32.gmra.mxu0 %v938
        %v1593 = vpop.f32.mrf.mxu0
        %v1594 = vadd.f32 %v1481, %v1593
        %1595 = vmatmul.f32.gmra.mxu0 %v947
        %v1596 = vpop.f32.mrf.mxu0
        %v1597 = vadd.f32 %v1484, %v1596
        %1598 = vmatmul.f32.gmra.mxu0 %v956
        %v1599 = vpop.f32.mrf.mxu0
        %v1600 = vadd.f32 %v1487, %v1599
        %1601 = vmatmul.f32.gmra.mxu0 %v965
        %v1602 = vpop.f32.mrf.mxu0
        %v1603 = vadd.f32 %v1490, %v1602
        %1604 = vmatmul.f32.gmra.mxu0 %v974
        %v1605 = vpop.f32.mrf.mxu0
        %v1606 = vadd.f32 %v1493, %v1605
        %1607 = vmatmul.f32.gmra.mxu0 %v983
        %v1608 = vpop.f32.mrf.mxu0
        %v1609 = vadd.f32 %v1496, %v1608
        %1610 = vmatmul.f32.gmra.mxu0 %v992
        %v1611 = vpop.f32.mrf.mxu0
        %v1612 = vadd.f32 %v1499, %v1611
        %1613 = vmatmul.f32.gmra.mxu0 %v1001
        %v1614 = vpop.f32.mrf.mxu0
        %v1615 = vadd.f32 %v1502, %v1614
        %1616 = vmatmul.f32.gmra.mxu0 %v1010
        %v1617 = vpop.f32.mrf.mxu0
        %v1618 = vadd.f32 %v1505, %v1617
        %1619 = vmatmul.f32.gmra.mxu0 %v1019
        %v1620 = vpop.f32.mrf.mxu0
        %v1621 = vadd.f32 %v1508, %v1620
        %1622 = vmatmul.f32.gmra.mxu0 %v1028
        %v1623 = vpop.f32.mrf.mxu0
        %v1624 = vadd.f32 %v1511, %v1623
        %1625 = vmatmul.f32.gmra.mxu0 %v1037
        %v1626 = vpop.f32.mrf.mxu0
        %v1627 = vadd.f32 %v1514, %v1626
        %1628 = vmatmul.f32.gmra.mxu0 %v1046
        %v1629 = vpop.f32.mrf.mxu0
        %v1630 = vadd.f32 %v1517, %v1629
        %1631 = vmatmul.f32.gmra.mxu0 %v1055
        %v1632 = vpop.f32.mrf.mxu0
        %v1633 = vadd.f32 %v1520, %v1632
        %1634 = vmatmul.f32.gmra.mxu0 %v1064
        %v1635 = vpop.f32.mrf.mxu0
        %v1636 = vadd.f32 %v1523, %v1635
        %1637 = vmatmul.f32.gmra.mxu0 %v1073
        %v1638 = vpop.f32.mrf.mxu0
        %v1639 = vadd.f32 %v1526, %v1638
        %1640 = vmatmul.f32.gmra.mxu0 %v1082
        %v1641 = vpop.f32.mrf.mxu0
        %v1642 = vadd.f32 %v1529, %v1641
        %1643 = vmatmul.f32.gmra.mxu0 %v1091
        %v1644 = vpop.f32.mrf.mxu0
        %v1645 = vadd.f32 %v1532, %v1644
        %1646 = vmatmul.f32.gmra.mxu0 %v1100
        %v1647 = vpop.f32.mrf.mxu0
        %v1648 = vadd.f32 %v1535, %v1647
        %1649 = vmatmul.f32.gmra.mxu0 %v1109
        %v1650 = vpop.f32.mrf.mxu0
        %v1651 = vadd.f32 %v1538, %v1650
        %1652 = vmatmul.f32.gmra.mxu0 %v1118
        %v1653 = vpop.f32.mrf.mxu0
        %v1654 = vadd.f32 %v1541, %v1653
        %1655 = vmatmul.f32.gmra.mxu0 %v1127
        %v1656 = vpop.f32.mrf.mxu0
        %v1657 = vadd.f32 %v1544, %v1656
        %1658 = vmatmul.f32.gmra.mxu0 %v1136
        %v1659 = vpop.f32.mrf.mxu0
        %v1660 = vadd.f32 %v1547, %v1659
        %1661 = vmatmul.f32.gmra.mxu0 %v1145
        %v1662 = vpop.f32.mrf.mxu0
        %v1663 = vadd.f32 %v1550, %v1662
        %1664 = vmatmul.f32.gmra.mxu0 %v1154
        %v1665 = vpop.f32.mrf.mxu0
        %v1666 = vadd.f32 %v1553, %v1665
        %1667 = vmatmul.f32.gmra.mxu0 %v1163
        %v1668 = vpop.f32.mrf.mxu0
        %v1669 = vadd.f32 %v1556, %v1668
        %1670 = vmatmul.f32.gmra.mxu0 %v1172
        %v1671 = vpop.f32.mrf.mxu0
        %v1672 = vadd.f32 %v1559, %v1671
        %1673 = vmatmul.f32.gmra.mxu0 %v1181
        %v1674 = vpop.f32.mrf.mxu0
        %v1675 = vadd.f32 %v1562, %v1674
        %1676 = vmatmul.f32.gmra.mxu0 %v1190
        %v1677 = vpop.f32.mrf.mxu0
        %v1678 = vadd.f32 %v1565, %v1677
        %1679 = vdwg.mxu0
        %1680 = vmatpush.msra.mxu0 %v1260
        %1681 = vmatpush.msra.mxu0 %v1259
        %1682 = vmatpush.msra.mxu0 %v1258
        %1683 = vmatpush.msra.mxu0 %v1257
        %1684 = vmatpush.msra.mxu0 %v1256
        %1685 = vmatpush.msra.mxu0 %v1255
        %1686 = vmatpush.msra.mxu0 %v1254
        %1687 = vmatpush.msra.mxu0 %v1253
        %1688 = vmatpush.msra.mxu0 %v1252
        %1689 = vmatpush.msra.mxu0 %v1251
        %1690 = vmatpush.msra.mxu0 %v1250
        %1691 = vmatpush.msra.mxu0 %v1249
        %1692 = vmatpush.msra.mxu0 %v1248
        %1693 = vmatpush.msra.mxu0 %v1247
        %1694 = vmatpush.msra.mxu0 %v1246
        %1695 = vmatpush.msra.mxu0 %v1245
        %1696 = vmatmul.f32.gmra.mxu0 %v912
        %v1697 = vpop.f32.mrf.mxu0
        %v1698 = vadd.f32 %v1585, %v1697
        %1699 = vmatmul.f32.gmra.mxu0 %v921
        %v1700 = vpop.f32.mrf.mxu0
        %v1701 = vadd.f32 %v1588, %v1700
        %1702 = vmatmul.f32.gmra.mxu0 %v930
        %v1703 = vpop.f32.mrf.mxu0
        %v1704 = vadd.f32 %v1591, %v1703
        %1705 = vmatmul.f32.gmra.mxu0 %v939
        %v1706 = vpop.f32.mrf.mxu0
        %v1707 = vadd.f32 %v1594, %v1706
        %1708 = vmatmul.f32.gmra.mxu0 %v948
        %v1709 = vpop.f32.mrf.mxu0
        %v1710 = vadd.f32 %v1597, %v1709
        %1711 = vmatmul.f32.gmra.mxu0 %v957
        %v1712 = vpop.f32.mrf.mxu0
        %v1713 = vadd.f32 %v1600, %v1712
        %1714 = vmatmul.f32.gmra.mxu0 %v966
        %v1715 = vpop.f32.mrf.mxu0
        %v1716 = vadd.f32 %v1603, %v1715
        %1717 = vmatmul.f32.gmra.mxu0 %v975
        %v1718 = vpop.f32.mrf.mxu0
        %v1719 = vadd.f32 %v1606, %v1718
        %1720 = vmatmul.f32.gmra.mxu0 %v984
        %v1721 = vpop.f32.mrf.mxu0
        %v1722 = vadd.f32 %v1609, %v1721
        %1723 = vmatmul.f32.gmra.mxu0 %v993
        %v1724 = vpop.f32.mrf.mxu0
        %v1725 = vadd.f32 %v1612, %v1724
        %1726 = vmatmul.f32.gmra.mxu0 %v1002
        %v1727 = vpop.f32.mrf.mxu0
        %v1728 = vadd.f32 %v1615, %v1727
        %1729 = vmatmul.f32.gmra.mxu0 %v1011
        %v1730 = vpop.f32.mrf.mxu0
        %v1731 = vadd.f32 %v1618, %v1730
        %1732 = vmatmul.f32.gmra.mxu0 %v1020
        %v1733 = vpop.f32.mrf.mxu0
        %v1734 = vadd.f32 %v1621, %v1733
        %1735 = vmatmul.f32.gmra.mxu0 %v1029
        %v1736 = vpop.f32.mrf.mxu0
        %v1737 = vadd.f32 %v1624, %v1736
        %1738 = vmatmul.f32.gmra.mxu0 %v1038
        %v1739 = vpop.f32.mrf.mxu0
        %v1740 = vadd.f32 %v1627, %v1739
        %1741 = vmatmul.f32.gmra.mxu0 %v1047
        %v1742 = vpop.f32.mrf.mxu0
        %v1743 = vadd.f32 %v1630, %v1742
        %1744 = vmatmul.f32.gmra.mxu0 %v1056
        %v1745 = vpop.f32.mrf.mxu0
        %v1746 = vadd.f32 %v1633, %v1745
        %1747 = vmatmul.f32.gmra.mxu0 %v1065
        %v1748 = vpop.f32.mrf.mxu0
        %v1749 = vadd.f32 %v1636, %v1748
        %1750 = vmatmul.f32.gmra.mxu0 %v1074
        %v1751 = vpop.f32.mrf.mxu0
        %v1752 = vadd.f32 %v1639, %v1751
        %1753 = vmatmul.f32.gmra.mxu0 %v1083
        %v1754 = vpop.f32.mrf.mxu0
        %v1755 = vadd.f32 %v1642, %v1754
        %1756 = vmatmul.f32.gmra.mxu0 %v1092
        %v1757 = vpop.f32.mrf.mxu0
        %v1758 = vadd.f32 %v1645, %v1757
        %1759 = vmatmul.f32.gmra.mxu0 %v1101
        %v1760 = vpop.f32.mrf.mxu0
        %v1761 = vadd.f32 %v1648, %v1760
        %1762 = vmatmul.f32.gmra.mxu0 %v1110
        %v1763 = vpop.f32.mrf.mxu0
        %v1764 = vadd.f32 %v1651, %v1763
        %1765 = vmatmul.f32.gmra.mxu0 %v1119
        %v1766 = vpop.f32.mrf.mxu0
        %v1767 = vadd.f32 %v1654, %v1766
        %1768 = vmatmul.f32.gmra.mxu0 %v1128
        %v1769 = vpop.f32.mrf.mxu0
        %v1770 = vadd.f32 %v1657, %v1769
        %1771 = vmatmul.f32.gmra.mxu0 %v1137
        %v1772 = vpop.f32.mrf.mxu0
        %v1773 = vadd.f32 %v1660, %v1772
        %1774 = vmatmul.f32.gmra.mxu0 %v1146
        %v1775 = vpop.f32.mrf.mxu0
        %v1776 = vadd.f32 %v1663, %v1775
        %1777 = vmatmul.f32.gmra.mxu0 %v1155
        %v1778 = vpop.f32.mrf.mxu0
        %v1779 = vadd.f32 %v1666, %v1778
        %1780 = vmatmul.f32.gmra.mxu0 %v1164
        %v1781 = vpop.f32.mrf.mxu0
        %v1782 = vadd.f32 %v1669, %v1781
        %1783 = vmatmul.f32.gmra.mxu0 %v1173
        %v1784 = vpop.f32.mrf.mxu0
        %v1785 = vadd.f32 %v1672, %v1784
        %1786 = vmatmul.f32.gmra.mxu0 %v1182
        %v1787 = vpop.f32.mrf.mxu0
        %v1788 = vadd.f32 %v1675, %v1787
        %1789 = vmatmul.f32.gmra.mxu0 %v1191
        %v1790 = vpop.f32.mrf.mxu0
        %v1791 = vadd.f32 %v1678, %v1790
        %1792 = vdwg.mxu0
        %1793 = vmatpush.msra.mxu0 %v1276
        %1794 = vmatpush.msra.mxu0 %v1275
        %1795 = vmatpush.msra.mxu0 %v1274
        %1796 = vmatpush.msra.mxu0 %v1273
        %1797 = vmatpush.msra.mxu0 %v1272
        %1798 = vmatpush.msra.mxu0 %v1271
        %1799 = vmatpush.msra.mxu0 %v1270
        %1800 = vmatpush.msra.mxu0 %v1269
        %1801 = vmatpush.msra.mxu0 %v1268
        %1802 = vmatpush.msra.mxu0 %v1267
        %1803 = vmatpush.msra.mxu0 %v1266
        %1804 = vmatpush.msra.mxu0 %v1265
        %1805 = vmatpush.msra.mxu0 %v1264
        %1806 = vmatpush.msra.mxu0 %v1263
        %1807 = vmatpush.msra.mxu0 %v1262
        %1808 = vmatpush.msra.mxu0 %v1261
        %1809 = vmatmul.f32.gmra.mxu0 %v913
        %v1810 = vpop.f32.mrf.mxu0
        %v1811 = vadd.f32 %v1698, %v1810
        %1812 = vmatmul.f32.gmra.mxu0 %v922
        %v1813 = vpop.f32.mrf.mxu0
        %v1814 = vadd.f32 %v1701, %v1813
        %1815 = vmatmul.f32.gmra.mxu0 %v931
        %v1816 = vpop.f32.mrf.mxu0
        %v1817 = vadd.f32 %v1704, %v1816
        %1818 = vmatmul.f32.gmra.mxu0 %v940
        %v1819 = vpop.f32.mrf.mxu0
        %v1820 = vadd.f32 %v1707, %v1819
        %1821 = vmatmul.f32.gmra.mxu0 %v949
        %v1822 = vpop.f32.mrf.mxu0
        %v1823 = vadd.f32 %v1710, %v1822
        %1824 = vmatmul.f32.gmra.mxu0 %v958
        %v1825 = vpop.f32.mrf.mxu0
        %v1826 = vadd.f32 %v1713, %v1825
        %1827 = vmatmul.f32.gmra.mxu0 %v967
        %v1828 = vpop.f32.mrf.mxu0
        %v1829 = vadd.f32 %v1716, %v1828
        %1830 = vmatmul.f32.gmra.mxu0 %v976
        %v1831 = vpop.f32.mrf.mxu0
        %v1832 = vadd.f32 %v1719, %v1831
        %1833 = vmatmul.f32.gmra.mxu0 %v985
        %v1834 = vpop.f32.mrf.mxu0
        %v1835 = vadd.f32 %v1722, %v1834
        %1836 = vmatmul.f32.gmra.mxu0 %v994
        %v1837 = vpop.f32.mrf.mxu0
        %v1838 = vadd.f32 %v1725, %v1837
        %1839 = vmatmul.f32.gmra.mxu0 %v1003
        %v1840 = vpop.f32.mrf.mxu0
        %v1841 = vadd.f32 %v1728, %v1840
        %1842 = vmatmul.f32.gmra.mxu0 %v1012
        %v1843 = vpop.f32.mrf.mxu0
        %v1844 = vadd.f32 %v1731, %v1843
        %1845 = vmatmul.f32.gmra.mxu0 %v1021
        %v1846 = vpop.f32.mrf.mxu0
        %v1847 = vadd.f32 %v1734, %v1846
        %1848 = vmatmul.f32.gmra.mxu0 %v1030
        %v1849 = vpop.f32.mrf.mxu0
        %v1850 = vadd.f32 %v1737, %v1849
        %1851 = vmatmul.f32.gmra.mxu0 %v1039
        %v1852 = vpop.f32.mrf.mxu0
        %v1853 = vadd.f32 %v1740, %v1852
        %1854 = vmatmul.f32.gmra.mxu0 %v1048
        %v1855 = vpop.f32.mrf.mxu0
        %v1856 = vadd.f32 %v1743, %v1855
        %1857 = vmatmul.f32.gmra.mxu0 %v1057
        %v1858 = vpop.f32.mrf.mxu0
        %v1859 = vadd.f32 %v1746, %v1858
        %1860 = vmatmul.f32.gmra.mxu0 %v1066
        %v1861 = vpop.f32.mrf.mxu0
        %v1862 = vadd.f32 %v1749, %v1861
        %1863 = vmatmul.f32.gmra.mxu0 %v1075
        %v1864 = vpop.f32.mrf.mxu0
        %v1865 = vadd.f32 %v1752, %v1864
        %1866 = vmatmul.f32.gmra.mxu0 %v1084
        %v1867 = vpop.f32.mrf.mxu0
        %v1868 = vadd.f32 %v1755, %v1867
        %1869 = vmatmul.f32.gmra.mxu0 %v1093
        %v1870 = vpop.f32.mrf.mxu0
        %v1871 = vadd.f32 %v1758, %v1870
        %1872 = vmatmul.f32.gmra.mxu0 %v1102
        %v1873 = vpop.f32.mrf.mxu0
        %v1874 = vadd.f32 %v1761, %v1873
        %1875 = vmatmul.f32.gmra.mxu0 %v1111
        %v1876 = vpop.f32.mrf.mxu0
        %v1877 = vadd.f32 %v1764, %v1876
        %1878 = vmatmul.f32.gmra.mxu0 %v1120
        %v1879 = vpop.f32.mrf.mxu0
        %v1880 = vadd.f32 %v1767, %v1879
        %1881 = vmatmul.f32.gmra.mxu0 %v1129
        %v1882 = vpop.f32.mrf.mxu0
        %v1883 = vadd.f32 %v1770, %v1882
        %1884 = vmatmul.f32.gmra.mxu0 %v1138
        %v1885 = vpop.f32.mrf.mxu0
        %v1886 = vadd.f32 %v1773, %v1885
        %1887 = vmatmul.f32.gmra.mxu0 %v1147
        %v1888 = vpop.f32.mrf.mxu0
        %v1889 = vadd.f32 %v1776, %v1888
        %1890 = vmatmul.f32.gmra.mxu0 %v1156
        %v1891 = vpop.f32.mrf.mxu0
        %v1892 = vadd.f32 %v1779, %v1891
        %1893 = vmatmul.f32.gmra.mxu0 %v1165
        %v1894 = vpop.f32.mrf.mxu0
        %v1895 = vadd.f32 %v1782, %v1894
        %1896 = vmatmul.f32.gmra.mxu0 %v1174
        %v1897 = vpop.f32.mrf.mxu0
        %v1898 = vadd.f32 %v1785, %v1897
        %1899 = vmatmul.f32.gmra.mxu0 %v1183
        %v1900 = vpop.f32.mrf.mxu0
        %v1901 = vadd.f32 %v1788, %v1900
        %1902 = vmatmul.f32.gmra.mxu0 %v1192
        %v1903 = vpop.f32.mrf.mxu0
        %v1904 = vadd.f32 %v1791, %v1903
        %1905 = vdwg.mxu0
        %1906 = vmatpush.msra.mxu0 %v1292
        %1907 = vmatpush.msra.mxu0 %v1291
        %1908 = vmatpush.msra.mxu0 %v1290
        %1909 = vmatpush.msra.mxu0 %v1289
        %1910 = vmatpush.msra.mxu0 %v1288
        %1911 = vmatpush.msra.mxu0 %v1287
        %1912 = vmatpush.msra.mxu0 %v1286
        %1913 = vmatpush.msra.mxu0 %v1285
        %1914 = vmatpush.msra.mxu0 %v1284
        %1915 = vmatpush.msra.mxu0 %v1283
        %1916 = vmatpush.msra.mxu0 %v1282
        %1917 = vmatpush.msra.mxu0 %v1281
        %1918 = vmatpush.msra.mxu0 %v1280
        %1919 = vmatpush.msra.mxu0 %v1279
        %1920 = vmatpush.msra.mxu0 %v1278
        %1921 = vmatpush.msra.mxu0 %v1277
        %1922 = vmatmul.f32.gmra.mxu0 %v914
        %v1923 = vpop.f32.mrf.mxu0
        %v1924 = vadd.f32 %v1811, %v1923
        %1925 = vmatmul.f32.gmra.mxu0 %v923
        %v1926 = vpop.f32.mrf.mxu0
        %v1927 = vadd.f32 %v1814, %v1926
        %1928 = vmatmul.f32.gmra.mxu0 %v932
        %v1929 = vpop.f32.mrf.mxu0
        %v1930 = vadd.f32 %v1817, %v1929
        %1931 = vmatmul.f32.gmra.mxu0 %v941
        %v1932 = vpop.f32.mrf.mxu0
        %v1933 = vadd.f32 %v1820, %v1932
        %1934 = vmatmul.f32.gmra.mxu0 %v950
        %v1935 = vpop.f32.mrf.mxu0
        %v1936 = vadd.f32 %v1823, %v1935
        %1937 = vmatmul.f32.gmra.mxu0 %v959
        %v1938 = vpop.f32.mrf.mxu0
        %v1939 = vadd.f32 %v1826, %v1938
        %1940 = vmatmul.f32.gmra.mxu0 %v968
        %v1941 = vpop.f32.mrf.mxu0
        %v1942 = vadd.f32 %v1829, %v1941
        %1943 = vmatmul.f32.gmra.mxu0 %v977
        %v1944 = vpop.f32.mrf.mxu0
        %v1945 = vadd.f32 %v1832, %v1944
        %1946 = vmatmul.f32.gmra.mxu0 %v986
        %v1947 = vpop.f32.mrf.mxu0
        %v1948 = vadd.f32 %v1835, %v1947
        %1949 = vmatmul.f32.gmra.mxu0 %v995
        %v1950 = vpop.f32.mrf.mxu0
        %v1951 = vadd.f32 %v1838, %v1950
        %1952 = vmatmul.f32.gmra.mxu0 %v1004
        %v1953 = vpop.f32.mrf.mxu0
        %v1954 = vadd.f32 %v1841, %v1953
        %1955 = vmatmul.f32.gmra.mxu0 %v1013
        %v1956 = vpop.f32.mrf.mxu0
        %v1957 = vadd.f32 %v1844, %v1956
        %1958 = vmatmul.f32.gmra.mxu0 %v1022
        %v1959 = vpop.f32.mrf.mxu0
        %v1960 = vadd.f32 %v1847, %v1959
        %1961 = vmatmul.f32.gmra.mxu0 %v1031
        %v1962 = vpop.f32.mrf.mxu0
        %v1963 = vadd.f32 %v1850, %v1962
        %1964 = vmatmul.f32.gmra.mxu0 %v1040
        %v1965 = vpop.f32.mrf.mxu0
        %v1966 = vadd.f32 %v1853, %v1965
        %1967 = vmatmul.f32.gmra.mxu0 %v1049
        %v1968 = vpop.f32.mrf.mxu0
        %v1969 = vadd.f32 %v1856, %v1968
        %1970 = vmatmul.f32.gmra.mxu0 %v1058
        %v1971 = vpop.f32.mrf.mxu0
        %v1972 = vadd.f32 %v1859, %v1971
        %1973 = vmatmul.f32.gmra.mxu0 %v1067
        %v1974 = vpop.f32.mrf.mxu0
        %v1975 = vadd.f32 %v1862, %v1974
        %1976 = vmatmul.f32.gmra.mxu0 %v1076
        %v1977 = vpop.f32.mrf.mxu0
        %v1978 = vadd.f32 %v1865, %v1977
        %1979 = vmatmul.f32.gmra.mxu0 %v1085
        %v1980 = vpop.f32.mrf.mxu0
        %v1981 = vadd.f32 %v1868, %v1980
        %1982 = vmatmul.f32.gmra.mxu0 %v1094
        %v1983 = vpop.f32.mrf.mxu0
        %v1984 = vadd.f32 %v1871, %v1983
        %1985 = vmatmul.f32.gmra.mxu0 %v1103
        %v1986 = vpop.f32.mrf.mxu0
        %v1987 = vadd.f32 %v1874, %v1986
        %1988 = vmatmul.f32.gmra.mxu0 %v1112
        %v1989 = vpop.f32.mrf.mxu0
        %v1990 = vadd.f32 %v1877, %v1989
        %1991 = vmatmul.f32.gmra.mxu0 %v1121
        %v1992 = vpop.f32.mrf.mxu0
        %v1993 = vadd.f32 %v1880, %v1992
        %1994 = vmatmul.f32.gmra.mxu0 %v1130
        %v1995 = vpop.f32.mrf.mxu0
        %v1996 = vadd.f32 %v1883, %v1995
        %1997 = vmatmul.f32.gmra.mxu0 %v1139
        %v1998 = vpop.f32.mrf.mxu0
        %v1999 = vadd.f32 %v1886, %v1998
        %2000 = vmatmul.f32.gmra.mxu0 %v1148
        %v2001 = vpop.f32.mrf.mxu0
        %v2002 = vadd.f32 %v1889, %v2001
        %2003 = vmatmul.f32.gmra.mxu0 %v1157
        %v2004 = vpop.f32.mrf.mxu0
        %v2005 = vadd.f32 %v1892, %v2004
        %2006 = vmatmul.f32.gmra.mxu0 %v1166
        %v2007 = vpop.f32.mrf.mxu0
        %v2008 = vadd.f32 %v1895, %v2007
        %2009 = vmatmul.f32.gmra.mxu0 %v1175
        %v2010 = vpop.f32.mrf.mxu0
        %v2011 = vadd.f32 %v1898, %v2010
        %2012 = vmatmul.f32.gmra.mxu0 %v1184
        %v2013 = vpop.f32.mrf.mxu0
        %v2014 = vadd.f32 %v1901, %v2013
        %2015 = vmatmul.f32.gmra.mxu0 %v1193
        %v2016 = vpop.f32.mrf.mxu0
        %v2017 = vadd.f32 %v1904, %v2016
        %2018 = vdwg.mxu0
        %2019 = vmatpush.msra.mxu0 %v1308
        %2020 = vmatpush.msra.mxu0 %v1307
        %2021 = vmatpush.msra.mxu0 %v1306
        %2022 = vmatpush.msra.mxu0 %v1305
        %2023 = vmatpush.msra.mxu0 %v1304
        %2024 = vmatpush.msra.mxu0 %v1303
        %2025 = vmatpush.msra.mxu0 %v1302
        %2026 = vmatpush.msra.mxu0 %v1301
        %2027 = vmatpush.msra.mxu0 %v1300
        %2028 = vmatpush.msra.mxu0 %v1299
        %2029 = vmatpush.msra.mxu0 %v1298
        %2030 = vmatpush.msra.mxu0 %v1297
        %2031 = vmatpush.msra.mxu0 %v1296
        %2032 = vmatpush.msra.mxu0 %v1295
        %2033 = vmatpush.msra.mxu0 %v1294
        %2034 = vmatpush.msra.mxu0 %v1293
        %2035 = vmatmul.f32.gmra.mxu0 %v915
        %v2036 = vpop.f32.mrf.mxu0
        %v2037 = vadd.f32 %v1924, %v2036
        %2038 = vmatmul.f32.gmra.mxu0 %v924
        %v2039 = vpop.f32.mrf.mxu0
        %v2040 = vadd.f32 %v1927, %v2039
        %2041 = vmatmul.f32.gmra.mxu0 %v933
        %v2042 = vpop.f32.mrf.mxu0
        %v2043 = vadd.f32 %v1930, %v2042
        %2044 = vmatmul.f32.gmra.mxu0 %v942
        %v2045 = vpop.f32.mrf.mxu0
        %v2046 = vadd.f32 %v1933, %v2045
        %2047 = vmatmul.f32.gmra.mxu0 %v951
        %v2048 = vpop.f32.mrf.mxu0
        %v2049 = vadd.f32 %v1936, %v2048
        %2050 = vmatmul.f32.gmra.mxu0 %v960
        %v2051 = vpop.f32.mrf.mxu0
        %v2052 = vadd.f32 %v1939, %v2051
        %2053 = vmatmul.f32.gmra.mxu0 %v969
        %v2054 = vpop.f32.mrf.mxu0
        %v2055 = vadd.f32 %v1942, %v2054
        %2056 = vmatmul.f32.gmra.mxu0 %v978
        %v2057 = vpop.f32.mrf.mxu0
        %v2058 = vadd.f32 %v1945, %v2057
        %2059 = vmatmul.f32.gmra.mxu0 %v987
        %v2060 = vpop.f32.mrf.mxu0
        %v2061 = vadd.f32 %v1948, %v2060
        %2062 = vmatmul.f32.gmra.mxu0 %v996
        %v2063 = vpop.f32.mrf.mxu0
        %v2064 = vadd.f32 %v1951, %v2063
        %2065 = vmatmul.f32.gmra.mxu0 %v1005
        %v2066 = vpop.f32.mrf.mxu0
        %v2067 = vadd.f32 %v1954, %v2066
        %2068 = vmatmul.f32.gmra.mxu0 %v1014
        %v2069 = vpop.f32.mrf.mxu0
        %v2070 = vadd.f32 %v1957, %v2069
        %2071 = vmatmul.f32.gmra.mxu0 %v1023
        %v2072 = vpop.f32.mrf.mxu0
        %v2073 = vadd.f32 %v1960, %v2072
        %2074 = vmatmul.f32.gmra.mxu0 %v1032
        %v2075 = vpop.f32.mrf.mxu0
        %v2076 = vadd.f32 %v1963, %v2075
        %2077 = vmatmul.f32.gmra.mxu0 %v1041
        %v2078 = vpop.f32.mrf.mxu0
        %v2079 = vadd.f32 %v1966, %v2078
        %2080 = vmatmul.f32.gmra.mxu0 %v1050
        %v2081 = vpop.f32.mrf.mxu0
        %v2082 = vadd.f32 %v1969, %v2081
        %2083 = vmatmul.f32.gmra.mxu0 %v1059
        %v2084 = vpop.f32.mrf.mxu0
        %v2085 = vadd.f32 %v1972, %v2084
        %2086 = vmatmul.f32.gmra.mxu0 %v1068
        %v2087 = vpop.f32.mrf.mxu0
        %v2088 = vadd.f32 %v1975, %v2087
        %2089 = vmatmul.f32.gmra.mxu0 %v1077
        %v2090 = vpop.f32.mrf.mxu0
        %v2091 = vadd.f32 %v1978, %v2090
        %2092 = vmatmul.f32.gmra.mxu0 %v1086
        %v2093 = vpop.f32.mrf.mxu0
        %v2094 = vadd.f32 %v1981, %v2093
        %2095 = vmatmul.f32.gmra.mxu0 %v1095
        %v2096 = vpop.f32.mrf.mxu0
        %v2097 = vadd.f32 %v1984, %v2096
        %2098 = vmatmul.f32.gmra.mxu0 %v1104
        %v2099 = vpop.f32.mrf.mxu0
        %v2100 = vadd.f32 %v1987, %v2099
        %2101 = vmatmul.f32.gmra.mxu0 %v1113
        %v2102 = vpop.f32.mrf.mxu0
        %v2103 = vadd.f32 %v1990, %v2102
        %2104 = vmatmul.f32.gmra.mxu0 %v1122
        %v2105 = vpop.f32.mrf.mxu0
        %v2106 = vadd.f32 %v1993, %v2105
        %2107 = vmatmul.f32.gmra.mxu0 %v1131
        %v2108 = vpop.f32.mrf.mxu0
        %v2109 = vadd.f32 %v1996, %v2108
        %2110 = vmatmul.f32.gmra.mxu0 %v1140
        %v2111 = vpop.f32.mrf.mxu0
        %v2112 = vadd.f32 %v1999, %v2111
        %2113 = vmatmul.f32.gmra.mxu0 %v1149
        %v2114 = vpop.f32.mrf.mxu0
        %v2115 = vadd.f32 %v2002, %v2114
        %2116 = vmatmul.f32.gmra.mxu0 %v1158
        %v2117 = vpop.f32.mrf.mxu0
        %v2118 = vadd.f32 %v2005, %v2117
        %2119 = vmatmul.f32.gmra.mxu0 %v1167
        %v2120 = vpop.f32.mrf.mxu0
        %v2121 = vadd.f32 %v2008, %v2120
        %2122 = vmatmul.f32.gmra.mxu0 %v1176
        %v2123 = vpop.f32.mrf.mxu0
        %v2124 = vadd.f32 %v2011, %v2123
        %2125 = vmatmul.f32.gmra.mxu0 %v1185
        %v2126 = vpop.f32.mrf.mxu0
        %v2127 = vadd.f32 %v2014, %v2126
        %2128 = vmatmul.f32.gmra.mxu0 %v1194
        %v2129 = vpop.f32.mrf.mxu0
        %v2130 = vadd.f32 %v2017, %v2129
        %2131 = vdwg.mxu0
        %2132 = vmatpush.msra.mxu0 %v1324
        %2133 = vmatpush.msra.mxu0 %v1323
        %2134 = vmatpush.msra.mxu0 %v1322
        %2135 = vmatpush.msra.mxu0 %v1321
        %2136 = vmatpush.msra.mxu0 %v1320
        %2137 = vmatpush.msra.mxu0 %v1319
        %2138 = vmatpush.msra.mxu0 %v1318
        %2139 = vmatpush.msra.mxu0 %v1317
        %2140 = vmatpush.msra.mxu0 %v1316
        %2141 = vmatpush.msra.mxu0 %v1315
        %2142 = vmatpush.msra.mxu0 %v1314
        %2143 = vmatpush.msra.mxu0 %v1313
        %2144 = vmatpush.msra.mxu0 %v1312
        %2145 = vmatpush.msra.mxu0 %v1311
        %2146 = vmatpush.msra.mxu0 %v1310
        %2147 = vmatpush.msra.mxu0 %v1309
        %2148 = vmatmul.f32.gmra.mxu0 %v916
        %v2149 = vpop.f32.mrf.mxu0
        %v2150 = vadd.f32 %v2037, %v2149
        %2151 = vmatmul.f32.gmra.mxu0 %v925
        %v2152 = vpop.f32.mrf.mxu0
        %v2153 = vadd.f32 %v2040, %v2152
        %2154 = vmatmul.f32.gmra.mxu0 %v934
        %v2155 = vpop.f32.mrf.mxu0
        %v2156 = vadd.f32 %v2043, %v2155
        %2157 = vmatmul.f32.gmra.mxu0 %v943
        %v2158 = vpop.f32.mrf.mxu0
        %v2159 = vadd.f32 %v2046, %v2158
        %2160 = vmatmul.f32.gmra.mxu0 %v952
        %v2161 = vpop.f32.mrf.mxu0
        %v2162 = vadd.f32 %v2049, %v2161
        %2163 = vmatmul.f32.gmra.mxu0 %v961
        %v2164 = vpop.f32.mrf.mxu0
        %v2165 = vadd.f32 %v2052, %v2164
        %2166 = vmatmul.f32.gmra.mxu0 %v970
        %v2167 = vpop.f32.mrf.mxu0
        %v2168 = vadd.f32 %v2055, %v2167
        %2169 = vmatmul.f32.gmra.mxu0 %v979
        %v2170 = vpop.f32.mrf.mxu0
        %v2171 = vadd.f32 %v2058, %v2170
        %2172 = vmatmul.f32.gmra.mxu0 %v988
        %v2173 = vpop.f32.mrf.mxu0
        %v2174 = vadd.f32 %v2061, %v2173
        %2175 = vmatmul.f32.gmra.mxu0 %v997
        %v2176 = vpop.f32.mrf.mxu0
        %v2177 = vadd.f32 %v2064, %v2176
        %2178 = vmatmul.f32.gmra.mxu0 %v1006
        %v2179 = vpop.f32.mrf.mxu0
        %v2180 = vadd.f32 %v2067, %v2179
        %2181 = vmatmul.f32.gmra.mxu0 %v1015
        %v2182 = vpop.f32.mrf.mxu0
        %v2183 = vadd.f32 %v2070, %v2182
        %2184 = vmatmul.f32.gmra.mxu0 %v1024
        %v2185 = vpop.f32.mrf.mxu0
        %v2186 = vadd.f32 %v2073, %v2185
        %2187 = vmatmul.f32.gmra.mxu0 %v1033
        %v2188 = vpop.f32.mrf.mxu0
        %v2189 = vadd.f32 %v2076, %v2188
        %2190 = vmatmul.f32.gmra.mxu0 %v1042
        %v2191 = vpop.f32.mrf.mxu0
        %v2192 = vadd.f32 %v2079, %v2191
        %2193 = vmatmul.f32.gmra.mxu0 %v1051
        %v2194 = vpop.f32.mrf.mxu0
        %v2195 = vadd.f32 %v2082, %v2194
        %2196 = vmatmul.f32.gmra.mxu0 %v1060
        %v2197 = vpop.f32.mrf.mxu0
        %v2198 = vadd.f32 %v2085, %v2197
        %2199 = vmatmul.f32.gmra.mxu0 %v1069
        %v2200 = vpop.f32.mrf.mxu0
        %v2201 = vadd.f32 %v2088, %v2200
        %2202 = vmatmul.f32.gmra.mxu0 %v1078
        %v2203 = vpop.f32.mrf.mxu0
        %v2204 = vadd.f32 %v2091, %v2203
        %2205 = vmatmul.f32.gmra.mxu0 %v1087
        %v2206 = vpop.f32.mrf.mxu0
        %v2207 = vadd.f32 %v2094, %v2206
        %2208 = vmatmul.f32.gmra.mxu0 %v1096
        %v2209 = vpop.f32.mrf.mxu0
        %v2210 = vadd.f32 %v2097, %v2209
        %2211 = vmatmul.f32.gmra.mxu0 %v1105
        %v2212 = vpop.f32.mrf.mxu0
        %v2213 = vadd.f32 %v2100, %v2212
        %2214 = vmatmul.f32.gmra.mxu0 %v1114
        %v2215 = vpop.f32.mrf.mxu0
        %v2216 = vadd.f32 %v2103, %v2215
        %2217 = vmatmul.f32.gmra.mxu0 %v1123
        %v2218 = vpop.f32.mrf.mxu0
        %v2219 = vadd.f32 %v2106, %v2218
        %2220 = vmatmul.f32.gmra.mxu0 %v1132
        %v2221 = vpop.f32.mrf.mxu0
        %v2222 = vadd.f32 %v2109, %v2221
        %2223 = vmatmul.f32.gmra.mxu0 %v1141
        %v2224 = vpop.f32.mrf.mxu0
        %v2225 = vadd.f32 %v2112, %v2224
        %2226 = vmatmul.f32.gmra.mxu0 %v1150
        %v2227 = vpop.f32.mrf.mxu0
        %v2228 = vadd.f32 %v2115, %v2227
        %2229 = vmatmul.f32.gmra.mxu0 %v1159
        %v2230 = vpop.f32.mrf.mxu0
        %v2231 = vadd.f32 %v2118, %v2230
        %2232 = vmatmul.f32.gmra.mxu0 %v1168
        %v2233 = vpop.f32.mrf.mxu0
        %v2234 = vadd.f32 %v2121, %v2233
        %2235 = vmatmul.f32.gmra.mxu0 %v1177
        %v2236 = vpop.f32.mrf.mxu0
        %v2237 = vadd.f32 %v2124, %v2236
        %2238 = vmatmul.f32.gmra.mxu0 %v1186
        %v2239 = vpop.f32.mrf.mxu0
        %v2240 = vadd.f32 %v2127, %v2239
        %2241 = vmatmul.f32.gmra.mxu0 %v1195
        %v2242 = vpop.f32.mrf.mxu0
        %v2243 = vadd.f32 %v2130, %v2242
        %2244 = vdwg.mxu0
        %2245 = vmatpush.msra.mxu0 %v1340
        %2246 = vmatpush.msra.mxu0 %v1339
        %2247 = vmatpush.msra.mxu0 %v1338
        %2248 = vmatpush.msra.mxu0 %v1337
        %2249 = vmatpush.msra.mxu0 %v1336
        %2250 = vmatpush.msra.mxu0 %v1335
        %2251 = vmatpush.msra.mxu0 %v1334
        %2252 = vmatpush.msra.mxu0 %v1333
        %2253 = vmatpush.msra.mxu0 %v1332
        %2254 = vmatpush.msra.mxu0 %v1331
        %2255 = vmatpush.msra.mxu0 %v1330
        %2256 = vmatpush.msra.mxu0 %v1329
        %2257 = vmatpush.msra.mxu0 %v1328
        %2258 = vmatpush.msra.mxu0 %v1327
        %2259 = vmatpush.msra.mxu0 %v1326
        %2260 = vmatpush.msra.mxu0 %v1325
        %2261 = vmatmul.f32.gmra.mxu0 %v917
        %v2262 = vpop.f32.mrf.mxu0
        %v2263 = vadd.f32 %v2150, %v2262
        %2264 = vmatmul.f32.gmra.mxu0 %v926
        %v2265 = vpop.f32.mrf.mxu0
        %v2266 = vadd.f32 %v2153, %v2265
        %2267 = vmatmul.f32.gmra.mxu0 %v935
        %v2268 = vpop.f32.mrf.mxu0
        %v2269 = vadd.f32 %v2156, %v2268
        %2270 = vmatmul.f32.gmra.mxu0 %v944
        %v2271 = vpop.f32.mrf.mxu0
        %v2272 = vadd.f32 %v2159, %v2271
        %2273 = vmatmul.f32.gmra.mxu0 %v953
        %v2274 = vpop.f32.mrf.mxu0
        %v2275 = vadd.f32 %v2162, %v2274
        %2276 = vmatmul.f32.gmra.mxu0 %v962
        %v2277 = vpop.f32.mrf.mxu0
        %v2278 = vadd.f32 %v2165, %v2277
        %2279 = vmatmul.f32.gmra.mxu0 %v971
        %v2280 = vpop.f32.mrf.mxu0
        %v2281 = vadd.f32 %v2168, %v2280
        %2282 = vmatmul.f32.gmra.mxu0 %v980
        %v2283 = vpop.f32.mrf.mxu0
        %v2284 = vadd.f32 %v2171, %v2283
        %2285 = vmatmul.f32.gmra.mxu0 %v989
        %v2286 = vpop.f32.mrf.mxu0
        %v2287 = vadd.f32 %v2174, %v2286
        %2288 = vmatmul.f32.gmra.mxu0 %v998
        %v2289 = vpop.f32.mrf.mxu0
        %v2290 = vadd.f32 %v2177, %v2289
        %2291 = vmatmul.f32.gmra.mxu0 %v1007
        %v2292 = vpop.f32.mrf.mxu0
        %v2293 = vadd.f32 %v2180, %v2292
        %2294 = vmatmul.f32.gmra.mxu0 %v1016
        %v2295 = vpop.f32.mrf.mxu0
        %v2296 = vadd.f32 %v2183, %v2295
        %2297 = vmatmul.f32.gmra.mxu0 %v1025
        %v2298 = vpop.f32.mrf.mxu0
        %v2299 = vadd.f32 %v2186, %v2298
        %2300 = vmatmul.f32.gmra.mxu0 %v1034
        %v2301 = vpop.f32.mrf.mxu0
        %v2302 = vadd.f32 %v2189, %v2301
        %2303 = vmatmul.f32.gmra.mxu0 %v1043
        %v2304 = vpop.f32.mrf.mxu0
        %v2305 = vadd.f32 %v2192, %v2304
        %2306 = vmatmul.f32.gmra.mxu0 %v1052
        %v2307 = vpop.f32.mrf.mxu0
        %v2308 = vadd.f32 %v2195, %v2307
        %2309 = vmatmul.f32.gmra.mxu0 %v1061
        %v2310 = vpop.f32.mrf.mxu0
        %v2311 = vadd.f32 %v2198, %v2310
        %2312 = vmatmul.f32.gmra.mxu0 %v1070
        %v2313 = vpop.f32.mrf.mxu0
        %v2314 = vadd.f32 %v2201, %v2313
        %2315 = vmatmul.f32.gmra.mxu0 %v1079
        %v2316 = vpop.f32.mrf.mxu0
        %v2317 = vadd.f32 %v2204, %v2316
        %2318 = vmatmul.f32.gmra.mxu0 %v1088
        %v2319 = vpop.f32.mrf.mxu0
        %v2320 = vadd.f32 %v2207, %v2319
        %2321 = vmatmul.f32.gmra.mxu0 %v1097
        %v2322 = vpop.f32.mrf.mxu0
        %v2323 = vadd.f32 %v2210, %v2322
        %2324 = vmatmul.f32.gmra.mxu0 %v1106
        %v2325 = vpop.f32.mrf.mxu0
        %v2326 = vadd.f32 %v2213, %v2325
        %2327 = vmatmul.f32.gmra.mxu0 %v1115
        %v2328 = vpop.f32.mrf.mxu0
        %v2329 = vadd.f32 %v2216, %v2328
        %2330 = vmatmul.f32.gmra.mxu0 %v1124
        %v2331 = vpop.f32.mrf.mxu0
        %v2332 = vadd.f32 %v2219, %v2331
        %2333 = vmatmul.f32.gmra.mxu0 %v1133
        %v2334 = vpop.f32.mrf.mxu0
        %v2335 = vadd.f32 %v2222, %v2334
        %2336 = vmatmul.f32.gmra.mxu0 %v1142
        %v2337 = vpop.f32.mrf.mxu0
        %v2338 = vadd.f32 %v2225, %v2337
        %2339 = vmatmul.f32.gmra.mxu0 %v1151
        %v2340 = vpop.f32.mrf.mxu0
        %v2341 = vadd.f32 %v2228, %v2340
        %2342 = vmatmul.f32.gmra.mxu0 %v1160
        %v2343 = vpop.f32.mrf.mxu0
        %v2344 = vadd.f32 %v2231, %v2343
        %2345 = vmatmul.f32.gmra.mxu0 %v1169
        %v2346 = vpop.f32.mrf.mxu0
        %v2347 = vadd.f32 %v2234, %v2346
        %2348 = vmatmul.f32.gmra.mxu0 %v1178
        %v2349 = vpop.f32.mrf.mxu0
        %v2350 = vadd.f32 %v2237, %v2349
        %2351 = vmatmul.f32.gmra.mxu0 %v1187
        %v2352 = vpop.f32.mrf.mxu0
        %v2353 = vadd.f32 %v2240, %v2352
        %2354 = vmatmul.f32.gmra.mxu0 %v1196
        %v2355 = vpop.f32.mrf.mxu0
        %v2356 = vadd.f32 %v2243, %v2355
        %2357 = vdwg.mxu0
        %v2358 = vmax.f32 %v2263, 0.0
        %v2359 = vmax.f32 %v2266, 0.0
        %v2360 = vmax.f32 %v2269, 0.0
        %v2361 = vmax.f32 %v2272, 0.0
        %v2362 = vmax.f32 %v2275, 0.0
        %v2363 = vmax.f32 %v2278, 0.0
        %v2364 = vmax.f32 %v2281, 0.0
        %v2365 = vmax.f32 %v2284, 0.0
        %v2366 = vmax.f32 %v2287, 0.0
        %v2367 = vmax.f32 %v2290, 0.0
        %v2368 = vmax.f32 %v2293, 0.0
        %v2369 = vmax.f32 %v2296, 0.0
        %v2370 = vmax.f32 %v2299, 0.0
        %v2371 = vmax.f32 %v2302, 0.0
        %v2372 = vmax.f32 %v2305, 0.0
        %v2373 = vmax.f32 %v2308, 0.0
        %v2374 = vmax.f32 %v2311, 0.0
        %v2375 = vmax.f32 %v2314, 0.0
        %v2376 = vmax.f32 %v2317, 0.0
        %v2377 = vmax.f32 %v2320, 0.0
        %v2378 = vmax.f32 %v2323, 0.0
        %v2379 = vmax.f32 %v2326, 0.0
        %v2380 = vmax.f32 %v2329, 0.0
        %v2381 = vmax.f32 %v2332, 0.0
        %v2382 = vmax.f32 %v2335, 0.0
        %v2383 = vmax.f32 %v2338, 0.0
        %v2384 = vmax.f32 %v2341, 0.0
        %v2385 = vmax.f32 %v2344, 0.0
        %v2386 = vmax.f32 %v2347, 0.0
        %v2387 = vmax.f32 %v2350, 0.0
        %v2388 = vmax.f32 %v2353, 0.0
        %v2389 = vmax.f32 %v2356, 0.0
        %2390 = vst [vmem:[%s299 + $0x1] sm:$0xff] %v2358
        %2391 = vst [vmem:[%s299 + $0x9] sm:$0xff] %v2359
        %2392 = vst [vmem:[%s299 + $0x19] sm:$0xff] %v2360
        %2393 = vst [vmem:[%s299 + $0x21] sm:$0xff] %v2361
        %2394 = vst [vmem:[%s299 + $0x31] sm:$0xff] %v2362
        %2395 = vst [vmem:[%s299 + $0x39] sm:$0xff] %v2363
        %2396 = vst [vmem:[%s299 + $0x49] sm:$0xff] %v2364
        %2397 = vst [vmem:[%s299 + $0x51] sm:$0xff] %v2365
        %2398 = vst [vmem:[%s299 + $0x61] sm:$0xff] %v2366
        %2399 = vst [vmem:[%s299 + $0x69] sm:$0xff] %v2367
        %2400 = vst [vmem:[%s299 + $0x79] sm:$0xff] %v2368
        %2401 = vst [vmem:[%s299 + $0x81] sm:$0xff] %v2369
        %2402 = vst [vmem:[%s299 + $0x91] sm:$0xff] %v2370
        %2403 = vst [vmem:[%s299 + $0x99] sm:$0xff] %v2371
        %2404 = vst [vmem:[%s299 + $0xa9] sm:$0xff] %v2372
        %2405 = vst [vmem:[%s299 + $0xb1] sm:$0xff] %v2373
        %2406 = vst [vmem:[%s299 + $0xc1] sm:$0xff] %v2374
        %2407 = vst [vmem:[%s299 + $0xc9] sm:$0xff] %v2375
        %2408 = vst [vmem:[%s299 + $0xd9] sm:$0xff] %v2376
        %2409 = vst [vmem:[%s299 + $0xe1] sm:$0xff] %v2377
        %2410 = vst [vmem:[%s299 + $0xf1] sm:$0xff] %v2378
        %2411 = vst [vmem:[%s299 + $0xf9] sm:$0xff] %v2379
        %2412 = vst [vmem:[%s299 + $0x109] sm:$0xff] %v2380
        %2413 = vst [vmem:[%s299 + $0x111] sm:$0xff] %v2381
        %2414 = vst [vmem:[%s299 + $0x121] sm:$0xff] %v2382
        %2415 = vst [vmem:[%s299 + $0x129] sm:$0xff] %v2383
        %2416 = vst [vmem:[%s299 + $0x139] sm:$0xff] %v2384
        %2417 = vst [vmem:[%s299 + $0x141] sm:$0xff] %v2385
        %2418 = vst [vmem:[%s299 + $0x151] sm:$0xff] %v2386
        %2419 = vst [vmem:[%s299 + $0x159] sm:$0xff] %v2387
        %2420 = vst [vmem:[%s299 + $0x169] sm:$0xff] %v2388
        %2421 = vst [vmem:[%s299 + $0x171] sm:$0xff] %v2389
        %v2422 = vld [vmem:[#allocation2] sm:$0xff]
        %v2423 = vld [vmem:[#allocation2 + $0x8] sm:$0xff]
        %v2424 = vld [vmem:[#allocation2 + $0x18] sm:$0xff]
        %v2425 = vld [vmem:[#allocation2 + $0x20] sm:$0xff]
        %v2426 = vld [vmem:[#allocation2 + $0x30] sm:$0xff]
        %v2427 = vld [vmem:[#allocation2 + $0x38] sm:$0xff]
        %v2428 = vld [vmem:[#allocation2 + $0x48] sm:$0xff]
        %v2429 = vld [vmem:[#allocation2 + $0x50] sm:$0xff]
        %v2430 = vld [vmem:[#allocation2 + $0x60] sm:$0xff]
        %v2431 = vld [vmem:[#allocation2 + $0x68] sm:$0xff]
        %v2432 = vld [vmem:[#allocation2 + $0x78] sm:$0xff]
        %v2433 = vld [vmem:[#allocation2 + $0x80] sm:$0xff]
        %v2434 = vld [vmem:[#allocation2 + $0x90] sm:$0xff]
        %v2435 = vld [vmem:[#allocation2 + $0x98] sm:$0xff]
        %v2436 = vld [vmem:[#allocation2 + $0xa8] sm:$0xff]
        %v2437 = vld [vmem:[#allocation2 + $0xb0] sm:$0xff]
        %v2438 = vld [vmem:[#allocation2 + $0xc0] sm:$0xff]
        %v2439 = vld [vmem:[#allocation2 + $0xc8] sm:$0xff]
        %v2440 = vld [vmem:[#allocation2 + $0xd8] sm:$0xff]
        %v2441 = vld [vmem:[#allocation2 + $0xe0] sm:$0xff]
        %v2442 = vld [vmem:[#allocation2 + $0xf0] sm:$0xff]
        %v2443 = vld [vmem:[#allocation2 + $0xf8] sm:$0xff]
        %v2444 = vld [vmem:[#allocation2 + $0x108] sm:$0xff]
        %v2445 = vld [vmem:[#allocation2 + $0x110] sm:$0xff]
        %v2446 = vld [vmem:[#allocation2 + $0x120] sm:$0xff]
        %v2447 = vld [vmem:[#allocation2 + $0x128] sm:$0xff]
        %v2448 = vld [vmem:[#allocation2 + $0x138] sm:$0xff]
        %v2449 = vld [vmem:[#allocation2 + $0x140] sm:$0xff]
        %v2450 = vld [vmem:[#allocation2 + $0x150] sm:$0xff]
        %v2451 = vld [vmem:[#allocation2 + $0x158] sm:$0xff]
        %v2452 = vld [vmem:[#allocation2 + $0x168] sm:$0xff]
        %v2453 = vld [vmem:[#allocation2 + $0x170] sm:$0xff]
        %2454 = vst [vmem:[#allocation3] sm:$0xff] %v2422
        %2455 = vst [vmem:[#allocation3 + $0x48] sm:$0xff] %v2423
        %2456 = vst [vmem:[#allocation3 + $0x90] sm:$0xff] %v2424
        %2457 = vst [vmem:[#allocation3 + $0xd8] sm:$0xff] %v2425
        %2458 = vst [vmem:[#allocation3 + $0x120] sm:$0xff] %v2426
        %2459 = vst [vmem:[#allocation3 + $0x168] sm:$0xff] %v2427
        %2460 = vst [vmem:[#allocation3 + $0x1b0] sm:$0xff] %v2428
        %2461 = vst [vmem:[#allocation3 + $0x1f8] sm:$0xff] %v2429
        %2462 = vst [vmem:[#allocation3 + $0x240] sm:$0xff] %v2430
        %2463 = vst [vmem:[#allocation3 + $0x288] sm:$0xff] %v2431
        %2464 = vst [vmem:[#allocation3 + $0x2d0] sm:$0xff] %v2432
        %2465 = vst [vmem:[#allocation3 + $0x318] sm:$0xff] %v2433
        %2466 = vst [vmem:[#allocation3 + $0x360] sm:$0xff] %v2434
        %2467 = vst [vmem:[#allocation3 + $0x3a8] sm:$0xff] %v2435
        %2468 = vst [vmem:[#allocation3 + $0x3f0] sm:$0xff] %v2436
        %2469 = vst [vmem:[#allocation3 + $0x438] sm:$0xff] %v2437
        %2470 = vst [vmem:[#allocation3 + $0x480] sm:$0xff] %v2438
        %2471 = vst [vmem:[#allocation3 + $0x4c8] sm:$0xff] %v2439
        %2472 = vst [vmem:[#allocation3 + $0x510] sm:$0xff] %v2440
        %2473 = vst [vmem:[#allocation3 + $0x558] sm:$0xff] %v2441
        %2474 = vst [vmem:[#allocation3 + $0x5a0] sm:$0xff] %v2442
        %2475 = vst [vmem:[#allocation3 + $0x5e8] sm:$0xff] %v2443
        %2476 = vst [vmem:[#allocation3 + $0x630] sm:$0xff] %v2444
        %2477 = vst [vmem:[#allocation3 + $0x678] sm:$0xff] %v2445
        %2478 = vst [vmem:[#allocation3 + $0x6c0] sm:$0xff] %v2446
        %2479 = vst [vmem:[#allocation3 + $0x708] sm:$0xff] %v2447
        %2480 = vst [vmem:[#allocation3 + $0x750] sm:$0xff] %v2448
        %2481 = vst [vmem:[#allocation3 + $0x798] sm:$0xff] %v2449
        %2482 = vst [vmem:[#allocation3 + $0x7e0] sm:$0xff] %v2450
        %2483 = vst [vmem:[#allocation3 + $0x828] sm:$0xff] %v2451
        %2484 = vst [vmem:[#allocation3 + $0x870] sm:$0xff] %v2452
        %2485 = vst [vmem:[#allocation3 + $0x8b8] sm:$0xff] %v2453
        %v2486 = vld [vmem:[#allocation2 + $0x1] sm:$0xff]
        %v2487 = vld [vmem:[#allocation2 + $0x9] sm:$0xff]
        %v2488 = vld [vmem:[#allocation2 + $0x19] sm:$0xff]
        %v2489 = vld [vmem:[#allocation2 + $0x21] sm:$0xff]
        %v2490 = vld [vmem:[#allocation2 + $0x31] sm:$0xff]
        %v2491 = vld [vmem:[#allocation2 + $0x39] sm:$0xff]
        %v2492 = vld [vmem:[#allocation2 + $0x49] sm:$0xff]
        %v2493 = vld [vmem:[#allocation2 + $0x51] sm:$0xff]
        %v2494 = vld [vmem:[#allocation2 + $0x61] sm:$0xff]
        %v2495 = vld [vmem:[#allocation2 + $0x69] sm:$0xff]
        %v2496 = vld [vmem:[#allocation2 + $0x79] sm:$0xff]
        %v2497 = vld [vmem:[#allocation2 + $0x81] sm:$0xff]
        %v2498 = vld [vmem:[#allocation2 + $0x91] sm:$0xff]
        %v2499 = vld [vmem:[#allocation2 + $0x99] sm:$0xff]
        %v2500 = vld [vmem:[#allocation2 + $0xa9] sm:$0xff]
        %v2501 = vld [vmem:[#allocation2 + $0xb1] sm:$0xff]
        %v2502 = vld [vmem:[#allocation2 + $0xc1] sm:$0xff]
        %v2503 = vld [vmem:[#allocation2 + $0xc9] sm:$0xff]
        %v2504 = vld [vmem:[#allocation2 + $0xd9] sm:$0xff]
        %v2505 = vld [vmem:[#allocation2 + $0xe1] sm:$0xff]
        %v2506 = vld [vmem:[#allocation2 + $0xf1] sm:$0xff]
        %v2507 = vld [vmem:[#allocation2 + $0xf9] sm:$0xff]
        %v2508 = vld [vmem:[#allocation2 + $0x109] sm:$0xff]
        %v2509 = vld [vmem:[#allocation2 + $0x111] sm:$0xff]
        %v2510 = vld [vmem:[#allocation2 + $0x121] sm:$0xff]
        %v2511 = vld [vmem:[#allocation2 + $0x129] sm:$0xff]
        %v2512 = vld [vmem:[#allocation2 + $0x139] sm:$0xff]
        %v2513 = vld [vmem:[#allocation2 + $0x141] sm:$0xff]
        %v2514 = vld [vmem:[#allocation2 + $0x151] sm:$0xff]
        %v2515 = vld [vmem:[#allocation2 + $0x159] sm:$0xff]
        %v2516 = vld [vmem:[#allocation2 + $0x169] sm:$0xff]
        %v2517 = vld [vmem:[#allocation2 + $0x171] sm:$0xff]
        %2518 = vst [vmem:[#allocation3 + $0x8] sm:$0xff] %v2486
        %2519 = vst [vmem:[#allocation3 + $0x50] sm:$0xff] %v2487
        %2520 = vst [vmem:[#allocation3 + $0x98] sm:$0xff] %v2488
        %2521 = vst [vmem:[#allocation3 + $0xe0] sm:$0xff] %v2489
        %2522 = vst [vmem:[#allocation3 + $0x128] sm:$0xff] %v2490
        %2523 = vst [vmem:[#allocation3 + $0x170] sm:$0xff] %v2491
        %2524 = vst [vmem:[#allocation3 + $0x1b8] sm:$0xff] %v2492
        %2525 = vst [vmem:[#allocation3 + $0x200] sm:$0xff] %v2493
        %2526 = vst [vmem:[#allocation3 + $0x248] sm:$0xff] %v2494
        %2527 = vst [vmem:[#allocation3 + $0x290] sm:$0xff] %v2495
        %2528 = vst [vmem:[#allocation3 + $0x2d8] sm:$0xff] %v2496
        %2529 = vst [vmem:[#allocation3 + $0x320] sm:$0xff] %v2497
        %2530 = vst [vmem:[#allocation3 + $0x368] sm:$0xff] %v2498
        %2531 = vst [vmem:[#allocation3 + $0x3b0] sm:$0xff] %v2499
        %2532 = vst [vmem:[#allocation3 + $0x3f8] sm:$0xff] %v2500
        %2533 = vst [vmem:[#allocation3 + $0x440] sm:$0xff] %v2501
        %2534 = vst [vmem:[#allocation3 + $0x488] sm:$0xff] %v2502
        %2535 = vst [vmem:[#allocation3 + $0x4d0] sm:$0xff] %v2503
        %2536 = vst [vmem:[#allocation3 + $0x518] sm:$0xff] %v2504
        %2537 = vst [vmem:[#allocation3 + $0x560] sm:$0xff] %v2505
        %2538 = vst [vmem:[#allocation3 + $0x5a8] sm:$0xff] %v2506
        %2539 = vst [vmem:[#allocation3 + $0x5f0] sm:$0xff] %v2507
        %2540 = vst [vmem:[#allocation3 + $0x638] sm:$0xff] %v2508
        %2541 = vst [vmem:[#allocation3 + $0x680] sm:$0xff] %v2509
        %2542 = vst [vmem:[#allocation3 + $0x6c8] sm:$0xff] %v2510
        %2543 = vst [vmem:[#allocation3 + $0x710] sm:$0xff] %v2511
        %2544 = vst [vmem:[#allocation3 + $0x758] sm:$0xff] %v2512
        %2545 = vst [vmem:[#allocation3 + $0x7a0] sm:$0xff] %v2513
        %2546 = vst [vmem:[#allocation3 + $0x7e8] sm:$0xff] %v2514
        %2547 = vst [vmem:[#allocation3 + $0x830] sm:$0xff] %v2515
        %2548 = vst [vmem:[#allocation3 + $0x878] sm:$0xff] %v2516
        %2549 = vst [vmem:[#allocation3 + $0x8c0] sm:$0xff] %v2517
        %v2550 = vld [vmem:[#allocation2 + $0x2] sm:$0xff]
        %v2551 = vld [vmem:[#allocation2 + $0xa] sm:$0xff]
        %v2552 = vld [vmem:[#allocation2 + $0x1a] sm:$0xff]
        %v2553 = vld [vmem:[#allocation2 + $0x22] sm:$0xff]
        %v2554 = vld [vmem:[#allocation2 + $0x32] sm:$0xff]
        %v2555 = vld [vmem:[#allocation2 + $0x3a] sm:$0xff]
        %v2556 = vld [vmem:[#allocation2 + $0x4a] sm:$0xff]
        %v2557 = vld [vmem:[#allocation2 + $0x52] sm:$0xff]
        %v2558 = vld [vmem:[#allocation2 + $0x62] sm:$0xff]
        %v2559 = vld [vmem:[#allocation2 + $0x6a] sm:$0xff]
        %v2560 = vld [vmem:[#allocation2 + $0x7a] sm:$0xff]
        %v2561 = vld [vmem:[#allocation2 + $0x82] sm:$0xff]
        %v2562 = vld [vmem:[#allocation2 + $0x92] sm:$0xff]
        %v2563 = vld [vmem:[#allocation2 + $0x9a] sm:$0xff]
        %v2564 = vld [vmem:[#allocation2 + $0xaa] sm:$0xff]
        %v2565 = vld [vmem:[#allocation2 + $0xb2] sm:$0xff]
        %v2566 = vld [vmem:[#allocation2 + $0xc2] sm:$0xff]
        %v2567 = vld [vmem:[#allocation2 + $0xca] sm:$0xff]
        %v2568 = vld [vmem:[#allocation2 + $0xda] sm:$0xff]
        %v2569 = vld [vmem:[#allocation2 + $0xe2] sm:$0xff]
        %v2570 = vld [vmem:[#allocation2 + $0xf2] sm:$0xff]
        %v2571 = vld [vmem:[#allocation2 + $0xfa] sm:$0xff]
        %v2572 = vld [vmem:[#allocation2 + $0x10a] sm:$0xff]
        %v2573 = vld [vmem:[#allocation2 + $0x112] sm:$0xff]
        %v2574 = vld [vmem:[#allocation2 + $0x122] sm:$0xff]
        %v2575 = vld [vmem:[#allocation2 + $0x12a] sm:$0xff]
        %v2576 = vld [vmem:[#allocation2 + $0x13a] sm:$0xff]
        %v2577 = vld [vmem:[#allocation2 + $0x142] sm:$0xff]
        %v2578 = vld [vmem:[#allocation2 + $0x152] sm:$0xff]
        %v2579 = vld [vmem:[#allocation2 + $0x15a] sm:$0xff]
        %v2580 = vld [vmem:[#allocation2 + $0x16a] sm:$0xff]
        %v2581 = vld [vmem:[#allocation2 + $0x172] sm:$0xff]
        %2582 = vst [vmem:[#allocation3 + $0x10] sm:$0xff] %v2550
        %2583 = vst [vmem:[#allocation3 + $0x58] sm:$0xff] %v2551
        %2584 = vst [vmem:[#allocation3 + $0xa0] sm:$0xff] %v2552
        %2585 = vst [vmem:[#allocation3 + $0xe8] sm:$0xff] %v2553
        %2586 = vst [vmem:[#allocation3 + $0x130] sm:$0xff] %v2554
        %2587 = vst [vmem:[#allocation3 + $0x178] sm:$0xff] %v2555
        %2588 = vst [vmem:[#allocation3 + $0x1c0] sm:$0xff] %v2556
        %2589 = vst [vmem:[#allocation3 + $0x208] sm:$0xff] %v2557
        %2590 = vst [vmem:[#allocation3 + $0x250] sm:$0xff] %v2558
        %2591 = vst [vmem:[#allocation3 + $0x298] sm:$0xff] %v2559
        %2592 = vst [vmem:[#allocation3 + $0x2e0] sm:$0xff] %v2560
        %2593 = vst [vmem:[#allocation3 + $0x328] sm:$0xff] %v2561
        %2594 = vst [vmem:[#allocation3 + $0x370] sm:$0xff] %v2562
        %2595 = vst [vmem:[#allocation3 + $0x3b8] sm:$0xff] %v2563
        %2596 = vst [vmem:[#allocation3 + $0x400] sm:$0xff] %v2564
        %2597 = vst [vmem:[#allocation3 + $0x448] sm:$0xff] %v2565
        %2598 = vst [vmem:[#allocation3 + $0x490] sm:$0xff] %v2566
        %2599 = vst [vmem:[#allocation3 + $0x4d8] sm:$0xff] %v2567
        %2600 = vst [vmem:[#allocation3 + $0x520] sm:$0xff] %v2568
        %2601 = vst [vmem:[#allocation3 + $0x568] sm:$0xff] %v2569
        %2602 = vst [vmem:[#allocation3 + $0x5b0] sm:$0xff] %v2570
        %2603 = vst [vmem:[#allocation3 + $0x5f8] sm:$0xff] %v2571
        %2604 = vst [vmem:[#allocation3 + $0x640] sm:$0xff] %v2572
        %2605 = vst [vmem:[#allocation3 + $0x688] sm:$0xff] %v2573
        %2606 = vst [vmem:[#allocation3 + $0x6d0] sm:$0xff] %v2574
        %2607 = vst [vmem:[#allocation3 + $0x718] sm:$0xff] %v2575
        %2608 = vst [vmem:[#allocation3 + $0x760] sm:$0xff] %v2576
        %2609 = vst [vmem:[#allocation3 + $0x7a8] sm:$0xff] %v2577
        %2610 = vst [vmem:[#allocation3 + $0x7f0] sm:$0xff] %v2578
        %2611 = vst [vmem:[#allocation3 + $0x838] sm:$0xff] %v2579
        %2612 = vst [vmem:[#allocation3 + $0x880] sm:$0xff] %v2580
        %2613 = vst [vmem:[#allocation3 + $0x8c8] sm:$0xff] %v2581
        %v2614 = vld [vmem:[%s299] sm:$0xff]
        %v2615 = vld [vmem:[%s299 + $0x8] sm:$0xff]
        %v2616 = vld [vmem:[%s299 + $0x18] sm:$0xff]
        %v2617 = vld [vmem:[%s299 + $0x20] sm:$0xff]
        %v2618 = vld [vmem:[%s299 + $0x30] sm:$0xff]
        %v2619 = vld [vmem:[%s299 + $0x38] sm:$0xff]
        %v2620 = vld [vmem:[%s299 + $0x48] sm:$0xff]
        %v2621 = vld [vmem:[%s299 + $0x50] sm:$0xff]
        %v2622 = vld [vmem:[%s299 + $0x60] sm:$0xff]
        %v2623 = vld [vmem:[%s299 + $0x68] sm:$0xff]
        %v2624 = vld [vmem:[%s299 + $0x78] sm:$0xff]
        %v2625 = vld [vmem:[%s299 + $0x80] sm:$0xff]
        %v2626 = vld [vmem:[%s299 + $0x90] sm:$0xff]
        %v2627 = vld [vmem:[%s299 + $0x98] sm:$0xff]
        %v2628 = vld [vmem:[%s299 + $0xa8] sm:$0xff]
        %v2629 = vld [vmem:[%s299 + $0xb0] sm:$0xff]
        %v2630 = vld [vmem:[%s299 + $0xc0] sm:$0xff]
        %v2631 = vld [vmem:[%s299 + $0xc8] sm:$0xff]
        %v2632 = vld [vmem:[%s299 + $0xd8] sm:$0xff]
        %v2633 = vld [vmem:[%s299 + $0xe0] sm:$0xff]
        %v2634 = vld [vmem:[%s299 + $0xf0] sm:$0xff]
        %v2635 = vld [vmem:[%s299 + $0xf8] sm:$0xff]
        %v2636 = vld [vmem:[%s299 + $0x108] sm:$0xff]
        %v2637 = vld [vmem:[%s299 + $0x110] sm:$0xff]
        %v2638 = vld [vmem:[%s299 + $0x120] sm:$0xff]
        %v2639 = vld [vmem:[%s299 + $0x128] sm:$0xff]
        %v2640 = vld [vmem:[%s299 + $0x138] sm:$0xff]
        %v2641 = vld [vmem:[%s299 + $0x140] sm:$0xff]
        %v2642 = vld [vmem:[%s299 + $0x150] sm:$0xff]
        %v2643 = vld [vmem:[%s299 + $0x158] sm:$0xff]
        %v2644 = vld [vmem:[%s299 + $0x168] sm:$0xff]
        %v2645 = vld [vmem:[%s299 + $0x170] sm:$0xff]
        %2646 = vst [vmem:[#allocation3 + $0x18] sm:$0xff] %v2614
        %2647 = vst [vmem:[#allocation3 + $0x60] sm:$0xff] %v2615
        %2648 = vst [vmem:[#allocation3 + $0xa8] sm:$0xff] %v2616
        %2649 = vst [vmem:[#allocation3 + $0xf0] sm:$0xff] %v2617
        %2650 = vst [vmem:[#allocation3 + $0x138] sm:$0xff] %v2618
        %2651 = vst [vmem:[#allocation3 + $0x180] sm:$0xff] %v2619
        %2652 = vst [vmem:[#allocation3 + $0x1c8] sm:$0xff] %v2620
        %2653 = vst [vmem:[#allocation3 + $0x210] sm:$0xff] %v2621
        %2654 = vst [vmem:[#allocation3 + $0x258] sm:$0xff] %v2622
        %2655 = vst [vmem:[#allocation3 + $0x2a0] sm:$0xff] %v2623
        %2656 = vst [vmem:[#allocation3 + $0x2e8] sm:$0xff] %v2624
        %2657 = vst [vmem:[#allocation3 + $0x330] sm:$0xff] %v2625
        %2658 = vst [vmem:[#allocation3 + $0x378] sm:$0xff] %v2626
        %2659 = vst [vmem:[#allocation3 + $0x3c0] sm:$0xff] %v2627
        %2660 = vst [vmem:[#allocation3 + $0x408] sm:$0xff] %v2628
        %2661 = vst [vmem:[#allocation3 + $0x450] sm:$0xff] %v2629
        %2662 = vst [vmem:[#allocation3 + $0x498] sm:$0xff] %v2630
        %2663 = vst [vmem:[#allocation3 + $0x4e0] sm:$0xff] %v2631
        %2664 = vst [vmem:[#allocation3 + $0x528] sm:$0xff] %v2632
        %2665 = vst [vmem:[#allocation3 + $0x570] sm:$0xff] %v2633
        %2666 = vst [vmem:[#allocation3 + $0x5b8] sm:$0xff] %v2634
        %2667 = vst [vmem:[#allocation3 + $0x600] sm:$0xff] %v2635
        %2668 = vst [vmem:[#allocation3 + $0x648] sm:$0xff] %v2636
        %2669 = vst [vmem:[#allocation3 + $0x690] sm:$0xff] %v2637
        %2670 = vst [vmem:[#allocation3 + $0x6d8] sm:$0xff] %v2638
        %2671 = vst [vmem:[#allocation3 + $0x720] sm:$0xff] %v2639
        %2672 = vst [vmem:[#allocation3 + $0x768] sm:$0xff] %v2640
        %2673 = vst [vmem:[#allocation3 + $0x7b0] sm:$0xff] %v2641
        %2674 = vst [vmem:[#allocation3 + $0x7f8] sm:$0xff] %v2642
        %2675 = vst [vmem:[#allocation3 + $0x840] sm:$0xff] %v2643
        %2676 = vst [vmem:[#allocation3 + $0x888] sm:$0xff] %v2644
        %2677 = vst [vmem:[#allocation3 + $0x8d0] sm:$0xff] %v2645
        %v2678 = vld [vmem:[%s299 + $0x1] sm:$0xff]
        %v2679 = vld [vmem:[%s299 + $0x9] sm:$0xff]
        %v2680 = vld [vmem:[%s299 + $0x19] sm:$0xff]
        %v2681 = vld [vmem:[%s299 + $0x21] sm:$0xff]
        %v2682 = vld [vmem:[%s299 + $0x31] sm:$0xff]
        %v2683 = vld [vmem:[%s299 + $0x39] sm:$0xff]
        %v2684 = vld [vmem:[%s299 + $0x49] sm:$0xff]
        %v2685 = vld [vmem:[%s299 + $0x51] sm:$0xff]
        %v2686 = vld [vmem:[%s299 + $0x61] sm:$0xff]
        %v2687 = vld [vmem:[%s299 + $0x69] sm:$0xff]
        %v2688 = vld [vmem:[%s299 + $0x79] sm:$0xff]
        %v2689 = vld [vmem:[%s299 + $0x81] sm:$0xff]
        %v2690 = vld [vmem:[%s299 + $0x91] sm:$0xff]
        %v2691 = vld [vmem:[%s299 + $0x99] sm:$0xff]
        %v2692 = vld [vmem:[%s299 + $0xa9] sm:$0xff]
        %v2693 = vld [vmem:[%s299 + $0xb1] sm:$0xff]
        %v2694 = vld [vmem:[%s299 + $0xc1] sm:$0xff]
        %v2695 = vld [vmem:[%s299 + $0xc9] sm:$0xff]
        %v2696 = vld [vmem:[%s299 + $0xd9] sm:$0xff]
        %v2697 = vld [vmem:[%s299 + $0xe1] sm:$0xff]
        %v2698 = vld [vmem:[%s299 + $0xf1] sm:$0xff]
        %v2699 = vld [vmem:[%s299 + $0xf9] sm:$0xff]
        %v2700 = vld [vmem:[%s299 + $0x109] sm:$0xff]
        %v2701 = vld [vmem:[%s299 + $0x111] sm:$0xff]
        %v2702 = vld [vmem:[%s299 + $0x121] sm:$0xff]
        %v2703 = vld [vmem:[%s299 + $0x129] sm:$0xff]
        %v2704 = vld [vmem:[%s299 + $0x139] sm:$0xff]
        %v2705 = vld [vmem:[%s299 + $0x141] sm:$0xff]
        %v2706 = vld [vmem:[%s299 + $0x151] sm:$0xff]
        %v2707 = vld [vmem:[%s299 + $0x159] sm:$0xff]
        %v2708 = vld [vmem:[%s299 + $0x169] sm:$0xff]
        %v2709 = vld [vmem:[%s299 + $0x171] sm:$0xff]
        %2710 = vst [vmem:[#allocation3 + $0x20] sm:$0xff] %v2678
        %2711 = vst [vmem:[#allocation3 + $0x68] sm:$0xff] %v2679
        %2712 = vst [vmem:[#allocation3 + $0xb0] sm:$0xff] %v2680
        %2713 = vst [vmem:[#allocation3 + $0xf8] sm:$0xff] %v2681
        %2714 = vst [vmem:[#allocation3 + $0x140] sm:$0xff] %v2682
        %2715 = vst [vmem:[#allocation3 + $0x188] sm:$0xff] %v2683
        %2716 = vst [vmem:[#allocation3 + $0x1d0] sm:$0xff] %v2684
        %2717 = vst [vmem:[#allocation3 + $0x218] sm:$0xff] %v2685
        %2718 = vst [vmem:[#allocation3 + $0x260] sm:$0xff] %v2686
        %2719 = vst [vmem:[#allocation3 + $0x2a8] sm:$0xff] %v2687
        %2720 = vst [vmem:[#allocation3 + $0x2f0] sm:$0xff] %v2688
        %2721 = vst [vmem:[#allocation3 + $0x338] sm:$0xff] %v2689
        %2722 = vst [vmem:[#allocation3 + $0x380] sm:$0xff] %v2690
        %2723 = vst [vmem:[#allocation3 + $0x3c8] sm:$0xff] %v2691
        %2724 = vst [vmem:[#allocation3 + $0x410] sm:$0xff] %v2692
        %2725 = vst [vmem:[#allocation3 + $0x458] sm:$0xff] %v2693
        %2726 = vst [vmem:[#allocation3 + $0x4a0] sm:$0xff] %v2694
        %2727 = vst [vmem:[#allocation3 + $0x4e8] sm:$0xff] %v2695
        %2728 = vst [vmem:[#allocation3 + $0x530] sm:$0xff] %v2696
        %2729 = vst [vmem:[#allocation3 + $0x578] sm:$0xff] %v2697
        %2730 = vst [vmem:[#allocation3 + $0x5c0] sm:$0xff] %v2698
        %2731 = vst [vmem:[#allocation3 + $0x608] sm:$0xff] %v2699
        %2732 = vst [vmem:[#allocation3 + $0x650] sm:$0xff] %v2700
        %2733 = vst [vmem:[#allocation3 + $0x698] sm:$0xff] %v2701
        %2734 = vst [vmem:[#allocation3 + $0x6e0] sm:$0xff] %v2702
        %2735 = vst [vmem:[#allocation3 + $0x728] sm:$0xff] %v2703
        %2736 = vst [vmem:[#allocation3 + $0x770] sm:$0xff] %v2704
        %2737 = vst [vmem:[#allocation3 + $0x7b8] sm:$0xff] %v2705
        %2738 = vst [vmem:[#allocation3 + $0x800] sm:$0xff] %v2706
        %2739 = vst [vmem:[#allocation3 + $0x848] sm:$0xff] %v2707
        %2740 = vst [vmem:[#allocation3 + $0x890] sm:$0xff] %v2708
        %2741 = vst [vmem:[#allocation3 + $0x8d8] sm:$0xff] %v2709
        %v2742 = vld [vmem:[%s299 + $0x2] sm:$0xff]
        %v2743 = vld [vmem:[%s299 + $0xa] sm:$0xff]
        %v2744 = vld [vmem:[%s299 + $0x1a] sm:$0xff]
        %v2745 = vld [vmem:[%s299 + $0x22] sm:$0xff]
        %v2746 = vld [vmem:[%s299 + $0x32] sm:$0xff]
        %v2747 = vld [vmem:[%s299 + $0x3a] sm:$0xff]
        %v2748 = vld [vmem:[%s299 + $0x4a] sm:$0xff]
        %v2749 = vld [vmem:[%s299 + $0x52] sm:$0xff]
        %v2750 = vld [vmem:[%s299 + $0x62] sm:$0xff]
        %v2751 = vld [vmem:[%s299 + $0x6a] sm:$0xff]
        %v2752 = vld [vmem:[%s299 + $0x7a] sm:$0xff]
        %v2753 = vld [vmem:[%s299 + $0x82] sm:$0xff]
        %v2754 = vld [vmem:[%s299 + $0x92] sm:$0xff]
        %v2755 = vld [vmem:[%s299 + $0x9a] sm:$0xff]
        %v2756 = vld [vmem:[%s299 + $0xaa] sm:$0xff]
        %v2757 = vld [vmem:[%s299 + $0xb2] sm:$0xff]
        %v2758 = vld [vmem:[%s299 + $0xc2] sm:$0xff]
        %v2759 = vld [vmem:[%s299 + $0xca] sm:$0xff]
        %v2760 = vld [vmem:[%s299 + $0xda] sm:$0xff]
        %v2761 = vld [vmem:[%s299 + $0xe2] sm:$0xff]
        %v2762 = vld [vmem:[%s299 + $0xf2] sm:$0xff]
        %v2763 = vld [vmem:[%s299 + $0xfa] sm:$0xff]
        %v2764 = vld [vmem:[%s299 + $0x10a] sm:$0xff]
        %v2765 = vld [vmem:[%s299 + $0x112] sm:$0xff]
        %v2766 = vld [vmem:[%s299 + $0x122] sm:$0xff]
        %v2767 = vld [vmem:[%s299 + $0x12a] sm:$0xff]
        %v2768 = vld [vmem:[%s299 + $0x13a] sm:$0xff]
        %v2769 = vld [vmem:[%s299 + $0x142] sm:$0xff]
        %v2770 = vld [vmem:[%s299 + $0x152] sm:$0xff]
        %v2771 = vld [vmem:[%s299 + $0x15a] sm:$0xff]
        %v2772 = vld [vmem:[%s299 + $0x16a] sm:$0xff]
        %v2773 = vld [vmem:[%s299 + $0x172] sm:$0xff]
        %2774 = vst [vmem:[#allocation3 + $0x28] sm:$0xff] %v2742
        %2775 = vst [vmem:[#allocation3 + $0x70] sm:$0xff] %v2743
        %2776 = vst [vmem:[#allocation3 + $0xb8] sm:$0xff] %v2744
        %2777 = vst [vmem:[#allocation3 + $0x100] sm:$0xff] %v2745
        %2778 = vst [vmem:[#allocation3 + $0x148] sm:$0xff] %v2746
        %2779 = vst [vmem:[#allocation3 + $0x190] sm:$0xff] %v2747
        %2780 = vst [vmem:[#allocation3 + $0x1d8] sm:$0xff] %v2748
        %2781 = vst [vmem:[#allocation3 + $0x220] sm:$0xff] %v2749
        %2782 = vst [vmem:[#allocation3 + $0x268] sm:$0xff] %v2750
        %2783 = vst [vmem:[#allocation3 + $0x2b0] sm:$0xff] %v2751
        %2784 = vst [vmem:[#allocation3 + $0x2f8] sm:$0xff] %v2752
        %2785 = vst [vmem:[#allocation3 + $0x340] sm:$0xff] %v2753
        %2786 = vst [vmem:[#allocation3 + $0x388] sm:$0xff] %v2754
        %2787 = vst [vmem:[#allocation3 + $0x3d0] sm:$0xff] %v2755
        %2788 = vst [vmem:[#allocation3 + $0x418] sm:$0xff] %v2756
        %2789 = vst [vmem:[#allocation3 + $0x460] sm:$0xff] %v2757
        %2790 = vst [vmem:[#allocation3 + $0x4a8] sm:$0xff] %v2758
        %2791 = vst [vmem:[#allocation3 + $0x4f0] sm:$0xff] %v2759
        %2792 = vst [vmem:[#allocation3 + $0x538] sm:$0xff] %v2760
        %2793 = vst [vmem:[#allocation3 + $0x580] sm:$0xff] %v2761
        %2794 = vst [vmem:[#allocation3 + $0x5c8] sm:$0xff] %v2762
        %2795 = vst [vmem:[#allocation3 + $0x610] sm:$0xff] %v2763
        %2796 = vst [vmem:[#allocation3 + $0x658] sm:$0xff] %v2764
        %2797 = vst [vmem:[#allocation3 + $0x6a0] sm:$0xff] %v2765
        %2798 = vst [vmem:[#allocation3 + $0x6e8] sm:$0xff] %v2766
        %2799 = vst [vmem:[#allocation3 + $0x730] sm:$0xff] %v2767
        %2800 = vst [vmem:[#allocation3 + $0x778] sm:$0xff] %v2768
        %2801 = vst [vmem:[#allocation3 + $0x7c0] sm:$0xff] %v2769
        %2802 = vst [vmem:[#allocation3 + $0x808] sm:$0xff] %v2770
        %2803 = vst [vmem:[#allocation3 + $0x850] sm:$0xff] %v2771
        %2804 = vst [vmem:[#allocation3 + $0x898] sm:$0xff] %v2772
        %2805 = vst [vmem:[#allocation3 + $0x8e0] sm:$0xff] %v2773
        %v2806 = vld [vmem:[%s716] sm:$0xff]
        %v2807 = vld [vmem:[%s716 + $0x8] sm:$0xff]
        %v2808 = vld [vmem:[%s716 + $0x18] sm:$0xff]
        %v2809 = vld [vmem:[%s716 + $0x20] sm:$0xff]
        %v2810 = vld [vmem:[%s716 + $0x30] sm:$0xff]
        %v2811 = vld [vmem:[%s716 + $0x38] sm:$0xff]
        %v2812 = vld [vmem:[%s716 + $0x48] sm:$0xff]
        %v2813 = vld [vmem:[%s716 + $0x50] sm:$0xff]
        %v2814 = vld [vmem:[%s716 + $0x60] sm:$0xff]
        %v2815 = vld [vmem:[%s716 + $0x68] sm:$0xff]
        %v2816 = vld [vmem:[%s716 + $0x78] sm:$0xff]
        %v2817 = vld [vmem:[%s716 + $0x80] sm:$0xff]
        %v2818 = vld [vmem:[%s716 + $0x90] sm:$0xff]
        %v2819 = vld [vmem:[%s716 + $0x98] sm:$0xff]
        %v2820 = vld [vmem:[%s716 + $0xa8] sm:$0xff]
        %v2821 = vld [vmem:[%s716 + $0xb0] sm:$0xff]
        %v2822 = vld [vmem:[%s716 + $0xc0] sm:$0xff]
        %v2823 = vld [vmem:[%s716 + $0xc8] sm:$0xff]
        %v2824 = vld [vmem:[%s716 + $0xd8] sm:$0xff]
        %v2825 = vld [vmem:[%s716 + $0xe0] sm:$0xff]
        %v2826 = vld [vmem:[%s716 + $0xf0] sm:$0xff]
        %v2827 = vld [vmem:[%s716 + $0xf8] sm:$0xff]
        %v2828 = vld [vmem:[%s716 + $0x108] sm:$0xff]
        %v2829 = vld [vmem:[%s716 + $0x110] sm:$0xff]
        %v2830 = vld [vmem:[%s716 + $0x120] sm:$0xff]
        %v2831 = vld [vmem:[%s716 + $0x128] sm:$0xff]
        %v2832 = vld [vmem:[%s716 + $0x138] sm:$0xff]
        %v2833 = vld [vmem:[%s716 + $0x140] sm:$0xff]
        %v2834 = vld [vmem:[%s716 + $0x150] sm:$0xff]
        %v2835 = vld [vmem:[%s716 + $0x158] sm:$0xff]
        %v2836 = vld [vmem:[%s716 + $0x168] sm:$0xff]
        %v2837 = vld [vmem:[%s716 + $0x170] sm:$0xff]
        %2838 = vst [vmem:[#allocation3 + $0x30] sm:$0xff] %v2806
        %2839 = vst [vmem:[#allocation3 + $0x78] sm:$0xff] %v2807
        %2840 = vst [vmem:[#allocation3 + $0xc0] sm:$0xff] %v2808
        %2841 = vst [vmem:[#allocation3 + $0x108] sm:$0xff] %v2809
        %2842 = vst [vmem:[#allocation3 + $0x150] sm:$0xff] %v2810
        %2843 = vst [vmem:[#allocation3 + $0x198] sm:$0xff] %v2811
        %2844 = vst [vmem:[#allocation3 + $0x1e0] sm:$0xff] %v2812
        %2845 = vst [vmem:[#allocation3 + $0x228] sm:$0xff] %v2813
        %2846 = vst [vmem:[#allocation3 + $0x270] sm:$0xff] %v2814
        %2847 = vst [vmem:[#allocation3 + $0x2b8] sm:$0xff] %v2815
        %2848 = vst [vmem:[#allocation3 + $0x300] sm:$0xff] %v2816
        %2849 = vst [vmem:[#allocation3 + $0x348] sm:$0xff] %v2817
        %2850 = vst [vmem:[#allocation3 + $0x390] sm:$0xff] %v2818
        %2851 = vst [vmem:[#allocation3 + $0x3d8] sm:$0xff] %v2819
        %2852 = vst [vmem:[#allocation3 + $0x420] sm:$0xff] %v2820
        %2853 = vst [vmem:[#allocation3 + $0x468] sm:$0xff] %v2821
        %2854 = vst [vmem:[#allocation3 + $0x4b0] sm:$0xff] %v2822
        %2855 = vst [vmem:[#allocation3 + $0x4f8] sm:$0xff] %v2823
        %2856 = vst [vmem:[#allocation3 + $0x540] sm:$0xff] %v2824
        %2857 = vst [vmem:[#allocation3 + $0x588] sm:$0xff] %v2825
        %2858 = vst [vmem:[#allocation3 + $0x5d0] sm:$0xff] %v2826
        %2859 = vst [vmem:[#allocation3 + $0x618] sm:$0xff] %v2827
        %2860 = vst [vmem:[#allocation3 + $0x660] sm:$0xff] %v2828
        %2861 = vst [vmem:[#allocation3 + $0x6a8] sm:$0xff] %v2829
        %2862 = vst [vmem:[#allocation3 + $0x6f0] sm:$0xff] %v2830
        %2863 = vst [vmem:[#allocation3 + $0x738] sm:$0xff] %v2831
        %2864 = vst [vmem:[#allocation3 + $0x780] sm:$0xff] %v2832
        %2865 = vst [vmem:[#allocation3 + $0x7c8] sm:$0xff] %v2833
        %2866 = vst [vmem:[#allocation3 + $0x810] sm:$0xff] %v2834
        %2867 = vst [vmem:[#allocation3 + $0x858] sm:$0xff] %v2835
        %2868 = vst [vmem:[#allocation3 + $0x8a0] sm:$0xff] %v2836
        %2869 = vst [vmem:[#allocation3 + $0x8e8] sm:$0xff] %v2837
        %v2870 = vld [vmem:[%s716 + $0x1] sm:$0xff]
        %v2871 = vld [vmem:[%s716 + $0x9] sm:$0xff]
        %v2872 = vld [vmem:[%s716 + $0x19] sm:$0xff]
        %v2873 = vld [vmem:[%s716 + $0x21] sm:$0xff]
        %v2874 = vld [vmem:[%s716 + $0x31] sm:$0xff]
        %v2875 = vld [vmem:[%s716 + $0x39] sm:$0xff]
        %v2876 = vld [vmem:[%s716 + $0x49] sm:$0xff]
        %v2877 = vld [vmem:[%s716 + $0x51] sm:$0xff]
        %v2878 = vld [vmem:[%s716 + $0x61] sm:$0xff]
        %v2879 = vld [vmem:[%s716 + $0x69] sm:$0xff]
        %v2880 = vld [vmem:[%s716 + $0x79] sm:$0xff]
        %v2881 = vld [vmem:[%s716 + $0x81] sm:$0xff]
        %v2882 = vld [vmem:[%s716 + $0x91] sm:$0xff]
        %v2883 = vld [vmem:[%s716 + $0x99] sm:$0xff]
        %v2884 = vld [vmem:[%s716 + $0xa9] sm:$0xff]
        %v2885 = vld [vmem:[%s716 + $0xb1] sm:$0xff]
        %v2886 = vld [vmem:[%s716 + $0xc1] sm:$0xff]
        %v2887 = vld [vmem:[%s716 + $0xc9] sm:$0xff]
        %v2888 = vld [vmem:[%s716 + $0xd9] sm:$0xff]
        %v2889 = vld [vmem:[%s716 + $0xe1] sm:$0xff]
        %v2890 = vld [vmem:[%s716 + $0xf1] sm:$0xff]
        %v2891 = vld [vmem:[%s716 + $0xf9] sm:$0xff]
        %v2892 = vld [vmem:[%s716 + $0x109] sm:$0xff]
        %v2893 = vld [vmem:[%s716 + $0x111] sm:$0xff]
        %v2894 = vld [vmem:[%s716 + $0x121] sm:$0xff]
        %v2895 = vld [vmem:[%s716 + $0x129] sm:$0xff]
        %v2896 = vld [vmem:[%s716 + $0x139] sm:$0xff]
        %v2897 = vld [vmem:[%s716 + $0x141] sm:$0xff]
        %v2898 = vld [vmem:[%s716 + $0x151] sm:$0xff]
        %v2899 = vld [vmem:[%s716 + $0x159] sm:$0xff]
        %v2900 = vld [vmem:[%s716 + $0x169] sm:$0xff]
        %v2901 = vld [vmem:[%s716 + $0x171] sm:$0xff]
        %2902 = vst [vmem:[#allocation3 + $0x38] sm:$0xff] %v2870
        %2903 = vst [vmem:[#allocation3 + $0x80] sm:$0xff] %v2871
        %2904 = vst [vmem:[#allocation3 + $0xc8] sm:$0xff] %v2872
        %2905 = vst [vmem:[#allocation3 + $0x110] sm:$0xff] %v2873
        %2906 = vst [vmem:[#allocation3 + $0x158] sm:$0xff] %v2874
        %2907 = vst [vmem:[#allocation3 + $0x1a0] sm:$0xff] %v2875
        %2908 = vst [vmem:[#allocation3 + $0x1e8] sm:$0xff] %v2876
        %2909 = vst [vmem:[#allocation3 + $0x230] sm:$0xff] %v2877
        %2910 = vst [vmem:[#allocation3 + $0x278] sm:$0xff] %v2878
        %2911 = vst [vmem:[#allocation3 + $0x2c0] sm:$0xff] %v2879
        %2912 = vst [vmem:[#allocation3 + $0x308] sm:$0xff] %v2880
        %2913 = vst [vmem:[#allocation3 + $0x350] sm:$0xff] %v2881
        %2914 = vst [vmem:[#allocation3 + $0x398] sm:$0xff] %v2882
        %2915 = vst [vmem:[#allocation3 + $0x3e0] sm:$0xff] %v2883
        %2916 = vst [vmem:[#allocation3 + $0x428] sm:$0xff] %v2884
        %2917 = vst [vmem:[#allocation3 + $0x470] sm:$0xff] %v2885
        %2918 = vst [vmem:[#allocation3 + $0x4b8] sm:$0xff] %v2886
        %2919 = vst [vmem:[#allocation3 + $0x500] sm:$0xff] %v2887
        %2920 = vst [vmem:[#allocation3 + $0x548] sm:$0xff] %v2888
        %2921 = vst [vmem:[#allocation3 + $0x590] sm:$0xff] %v2889
        %2922 = vst [vmem:[#allocation3 + $0x5d8] sm:$0xff] %v2890
        %2923 = vst [vmem:[#allocation3 + $0x620] sm:$0xff] %v2891
        %2924 = vst [vmem:[#allocation3 + $0x668] sm:$0xff] %v2892
        %2925 = vst [vmem:[#allocation3 + $0x6b0] sm:$0xff] %v2893
        %2926 = vst [vmem:[#allocation3 + $0x6f8] sm:$0xff] %v2894
        %2927 = vst [vmem:[#allocation3 + $0x740] sm:$0xff] %v2895
        %2928 = vst [vmem:[#allocation3 + $0x788] sm:$0xff] %v2896
        %2929 = vst [vmem:[#allocation3 + $0x7d0] sm:$0xff] %v2897
        %2930 = vst [vmem:[#allocation3 + $0x818] sm:$0xff] %v2898
        %2931 = vst [vmem:[#allocation3 + $0x860] sm:$0xff] %v2899
        %2932 = vst [vmem:[#allocation3 + $0x8a8] sm:$0xff] %v2900
        %2933 = vst [vmem:[#allocation3 + $0x8f0] sm:$0xff] %v2901
        %v2934 = vld [vmem:[%s716 + $0x2] sm:$0xff]
        %v2935 = vld [vmem:[%s716 + $0xa] sm:$0xff]
        %v2936 = vld [vmem:[%s716 + $0x1a] sm:$0xff]
        %v2937 = vld [vmem:[%s716 + $0x22] sm:$0xff]
        %v2938 = vld [vmem:[%s716 + $0x32] sm:$0xff]
        %v2939 = vld [vmem:[%s716 + $0x3a] sm:$0xff]
        %v2940 = vld [vmem:[%s716 + $0x4a] sm:$0xff]
        %v2941 = vld [vmem:[%s716 + $0x52] sm:$0xff]
        %v2942 = vld [vmem:[%s716 + $0x62] sm:$0xff]
        %v2943 = vld [vmem:[%s716 + $0x6a] sm:$0xff]
        %v2944 = vld [vmem:[%s716 + $0x7a] sm:$0xff]
        %v2945 = vld [vmem:[%s716 + $0x82] sm:$0xff]
        %v2946 = vld [vmem:[%s716 + $0x92] sm:$0xff]
        %v2947 = vld [vmem:[%s716 + $0x9a] sm:$0xff]
        %v2948 = vld [vmem:[%s716 + $0xaa] sm:$0xff]
        %v2949 = vld [vmem:[%s716 + $0xb2] sm:$0xff]
        %v2950 = vld [vmem:[%s716 + $0xc2] sm:$0xff]
        %v2951 = vld [vmem:[%s716 + $0xca] sm:$0xff]
        %v2952 = vld [vmem:[%s716 + $0xda] sm:$0xff]
        %v2953 = vld [vmem:[%s716 + $0xe2] sm:$0xff]
        %v2954 = vld [vmem:[%s716 + $0xf2] sm:$0xff]
        %v2955 = vld [vmem:[%s716 + $0xfa] sm:$0xff]
        %v2956 = vld [vmem:[%s716 + $0x10a] sm:$0xff]
        %v2957 = vld [vmem:[%s716 + $0x112] sm:$0xff]
        %v2958 = vld [vmem:[%s716 + $0x122] sm:$0xff]
        %v2959 = vld [vmem:[%s716 + $0x12a] sm:$0xff]
        %v2960 = vld [vmem:[%s716 + $0x13a] sm:$0xff]
        %v2961 = vld [vmem:[%s716 + $0x142] sm:$0xff]
        %v2962 = vld [vmem:[%s716 + $0x152] sm:$0xff]
        %v2963 = vld [vmem:[%s716 + $0x15a] sm:$0xff]
        %v2964 = vld [vmem:[%s716 + $0x16a] sm:$0xff]
        %v2965 = vld [vmem:[%s716 + $0x172] sm:$0xff]
        %2966 = vst [vmem:[#allocation3 + $0x40] sm:$0xff] %v2934
        %2967 = vst [vmem:[#allocation3 + $0x88] sm:$0xff] %v2935
        %2968 = vst [vmem:[#allocation3 + $0xd0] sm:$0xff] %v2936
        %2969 = vst [vmem:[#allocation3 + $0x118] sm:$0xff] %v2937
        %2970 = vst [vmem:[#allocation3 + $0x160] sm:$0xff] %v2938
        %2971 = vst [vmem:[#allocation3 + $0x1a8] sm:$0xff] %v2939
        %2972 = vst [vmem:[#allocation3 + $0x1f0] sm:$0xff] %v2940
        %2973 = vst [vmem:[#allocation3 + $0x238] sm:$0xff] %v2941
        %2974 = vst [vmem:[#allocation3 + $0x280] sm:$0xff] %v2942
        %2975 = vst [vmem:[#allocation3 + $0x2c8] sm:$0xff] %v2943
        %2976 = vst [vmem:[#allocation3 + $0x310] sm:$0xff] %v2944
        %2977 = vst [vmem:[#allocation3 + $0x358] sm:$0xff] %v2945
        %2978 = vst [vmem:[#allocation3 + $0x3a0] sm:$0xff] %v2946
        %2979 = vst [vmem:[#allocation3 + $0x3e8] sm:$0xff] %v2947
        %2980 = vst [vmem:[#allocation3 + $0x430] sm:$0xff] %v2948
        %2981 = vst [vmem:[#allocation3 + $0x478] sm:$0xff] %v2949
        %2982 = vst [vmem:[#allocation3 + $0x4c0] sm:$0xff] %v2950
        %2983 = vst [vmem:[#allocation3 + $0x508] sm:$0xff] %v2951
        %2984 = vst [vmem:[#allocation3 + $0x550] sm:$0xff] %v2952
        %2985 = vst [vmem:[#allocation3 + $0x598] sm:$0xff] %v2953
        %2986 = vst [vmem:[#allocation3 + $0x5e0] sm:$0xff] %v2954
        %2987 = vst [vmem:[#allocation3 + $0x628] sm:$0xff] %v2955
        %2988 = vst [vmem:[#allocation3 + $0x670] sm:$0xff] %v2956
        %2989 = vst [vmem:[#allocation3 + $0x6b8] sm:$0xff] %v2957
        %2990 = vst [vmem:[#allocation3 + $0x700] sm:$0xff] %v2958
        %2991 = vst [vmem:[#allocation3 + $0x748] sm:$0xff] %v2959
        %2992 = vst [vmem:[#allocation3 + $0x790] sm:$0xff] %v2960
        %2993 = vst [vmem:[#allocation3 + $0x7d8] sm:$0xff] %v2961
        %2994 = vst [vmem:[#allocation3 + $0x820] sm:$0xff] %v2962
        %2995 = vst [vmem:[#allocation3 + $0x868] sm:$0xff] %v2963
        %2996 = vst [vmem:[#allocation3 + $0x8b0] sm:$0xff] %v2964
        %2997 = vst [vmem:[#allocation3 + $0x8f8] sm:$0xff] %v2965
        %v2998 = vld [vmem:[#allocation3] sm:$0xff]
        %v2999 = vld [vmem:[#allocation3 + $0x8] sm:$0xff]
        %v3000 = vld [vmem:[#allocation3 + $0x10] sm:$0xff]
        %v3001 = vld [vmem:[#allocation3 + $0x18] sm:$0xff]
        %v3002 = vld [vmem:[#allocation3 + $0x20] sm:$0xff]
        %v3003 = vld [vmem:[#allocation3 + $0x28] sm:$0xff]
        %v3004 = vld [vmem:[#allocation3 + $0x30] sm:$0xff]
        %v3005 = vld [vmem:[#allocation3 + $0x38] sm:$0xff]
        %v3006 = vld [vmem:[#allocation3 + $0x40] sm:$0xff]
        %v3007 = vld [vmem:[#allocation3 + $0x48] sm:$0xff]
        %v3008 = vld [vmem:[#allocation3 + $0x50] sm:$0xff]
        %v3009 = vld [vmem:[#allocation3 + $0x58] sm:$0xff]
        %v3010 = vld [vmem:[#allocation3 + $0x60] sm:$0xff]
        %v3011 = vld [vmem:[#allocation3 + $0x68] sm:$0xff]
        %v3012 = vld [vmem:[#allocation3 + $0x70] sm:$0xff]
        %v3013 = vld [vmem:[#allocation3 + $0x78] sm:$0xff]
        %v3014 = vld [vmem:[#allocation3 + $0x80] sm:$0xff]
        %v3015 = vld [vmem:[#allocation3 + $0x88] sm:$0xff]
        %v3016 = vld [vmem:[#allocation3 + $0x90] sm:$0xff]
        %v3017 = vld [vmem:[#allocation3 + $0x98] sm:$0xff]
        %v3018 = vld [vmem:[#allocation3 + $0xa0] sm:$0xff]
        %v3019 = vld [vmem:[#allocation3 + $0xa8] sm:$0xff]
        %v3020 = vld [vmem:[#allocation3 + $0xb0] sm:$0xff]
        %v3021 = vld [vmem:[#allocation3 + $0xb8] sm:$0xff]
        %v3022 = vld [vmem:[#allocation3 + $0xc0] sm:$0xff]
        %v3023 = vld [vmem:[#allocation3 + $0xc8] sm:$0xff]
        %v3024 = vld [vmem:[#allocation3 + $0xd0] sm:$0xff]
        %v3025 = vld [vmem:[#allocation3 + $0xd8] sm:$0xff]
        %v3026 = vld [vmem:[#allocation3 + $0xe0] sm:$0xff]
        %v3027 = vld [vmem:[#allocation3 + $0xe8] sm:$0xff]
        %v3028 = vld [vmem:[#allocation3 + $0xf0] sm:$0xff]
        %v3029 = vld [vmem:[#allocation3 + $0xf8] sm:$0xff]
        %v3030 = vld [vmem:[#allocation3 + $0x100] sm:$0xff]
        %v3031 = vld [vmem:[#allocation3 + $0x108] sm:$0xff]
        %v3032 = vld [vmem:[#allocation3 + $0x110] sm:$0xff]
        %v3033 = vld [vmem:[#allocation3 + $0x118] sm:$0xff]
        %v3034 = vld [vmem:[#allocation3 + $0x120] sm:$0xff]
        %v3035 = vld [vmem:[#allocation3 + $0x128] sm:$0xff]
        %v3036 = vld [vmem:[#allocation3 + $0x130] sm:$0xff]
        %v3037 = vld [vmem:[#allocation3 + $0x138] sm:$0xff]
        %v3038 = vld [vmem:[#allocation3 + $0x140] sm:$0xff]
        %v3039 = vld [vmem:[#allocation3 + $0x148] sm:$0xff]
        %v3040 = vld [vmem:[#allocation3 + $0x150] sm:$0xff]
        %v3041 = vld [vmem:[#allocation3 + $0x158] sm:$0xff]
        %v3042 = vld [vmem:[#allocation3 + $0x160] sm:$0xff]
        %v3043 = vld [vmem:[#allocation3 + $0x168] sm:$0xff]
        %v3044 = vld [vmem:[#allocation3 + $0x170] sm:$0xff]
        %v3045 = vld [vmem:[#allocation3 + $0x178] sm:$0xff]
        %v3046 = vld [vmem:[#allocation3 + $0x180] sm:$0xff]
        %v3047 = vld [vmem:[#allocation3 + $0x188] sm:$0xff]
        %v3048 = vld [vmem:[#allocation3 + $0x190] sm:$0xff]
        %v3049 = vld [vmem:[#allocation3 + $0x198] sm:$0xff]
        %v3050 = vld [vmem:[#allocation3 + $0x1a0] sm:$0xff]
        %v3051 = vld [vmem:[#allocation3 + $0x1a8] sm:$0xff]
        %v3052 = vld [vmem:[#allocation3 + $0x1b0] sm:$0xff]
        %v3053 = vld [vmem:[#allocation3 + $0x1b8] sm:$0xff]
        %v3054 = vld [vmem:[#allocation3 + $0x1c0] sm:$0xff]
        %v3055 = vld [vmem:[#allocation3 + $0x1c8] sm:$0xff]
        %v3056 = vld [vmem:[#allocation3 + $0x1d0] sm:$0xff]
        %v3057 = vld [vmem:[#allocation3 + $0x1d8] sm:$0xff]
        %v3058 = vld [vmem:[#allocation3 + $0x1e0] sm:$0xff]
        %v3059 = vld [vmem:[#allocation3 + $0x1e8] sm:$0xff]
        %v3060 = vld [vmem:[#allocation3 + $0x1f0] sm:$0xff]
        %v3061 = vld [vmem:[#allocation3 + $0x1f8] sm:$0xff]
        %v3062 = vld [vmem:[#allocation3 + $0x200] sm:$0xff]
        %v3063 = vld [vmem:[#allocation3 + $0x208] sm:$0xff]
        %v3064 = vld [vmem:[#allocation3 + $0x210] sm:$0xff]
        %v3065 = vld [vmem:[#allocation3 + $0x218] sm:$0xff]
        %v3066 = vld [vmem:[#allocation3 + $0x220] sm:$0xff]
        %v3067 = vld [vmem:[#allocation3 + $0x228] sm:$0xff]
        %v3068 = vld [vmem:[#allocation3 + $0x230] sm:$0xff]
        %v3069 = vld [vmem:[#allocation3 + $0x238] sm:$0xff]
        %v3070 = vld [vmem:[#allocation3 + $0x240] sm:$0xff]
        %v3071 = vld [vmem:[#allocation3 + $0x248] sm:$0xff]
        %v3072 = vld [vmem:[#allocation3 + $0x250] sm:$0xff]
        %v3073 = vld [vmem:[#allocation3 + $0x258] sm:$0xff]
        %v3074 = vld [vmem:[#allocation3 + $0x260] sm:$0xff]
        %v3075 = vld [vmem:[#allocation3 + $0x268] sm:$0xff]
        %v3076 = vld [vmem:[#allocation3 + $0x270] sm:$0xff]
        %v3077 = vld [vmem:[#allocation3 + $0x278] sm:$0xff]
        %v3078 = vld [vmem:[#allocation3 + $0x280] sm:$0xff]
        %v3079 = vld [vmem:[#allocation3 + $0x288] sm:$0xff]
        %v3080 = vld [vmem:[#allocation3 + $0x290] sm:$0xff]
        %v3081 = vld [vmem:[#allocation3 + $0x298] sm:$0xff]
        %v3082 = vld [vmem:[#allocation3 + $0x2a0] sm:$0xff]
        %v3083 = vld [vmem:[#allocation3 + $0x2a8] sm:$0xff]
        %v3084 = vld [vmem:[#allocation3 + $0x2b0] sm:$0xff]
        %v3085 = vld [vmem:[#allocation3 + $0x2b8] sm:$0xff]
        %v3086 = vld [vmem:[#allocation3 + $0x2c0] sm:$0xff]
        %v3087 = vld [vmem:[#allocation3 + $0x2c8] sm:$0xff]
        %v3088 = vld [vmem:[#allocation3 + $0x2d0] sm:$0xff]
        %v3089 = vld [vmem:[#allocation3 + $0x2d8] sm:$0xff]
        %v3090 = vld [vmem:[#allocation3 + $0x2e0] sm:$0xff]
        %v3091 = vld [vmem:[#allocation3 + $0x2e8] sm:$0xff]
        %v3092 = vld [vmem:[#allocation3 + $0x2f0] sm:$0xff]
        %v3093 = vld [vmem:[#allocation3 + $0x2f8] sm:$0xff]
        %v3094 = vld [vmem:[#allocation3 + $0x300] sm:$0xff]
        %v3095 = vld [vmem:[#allocation3 + $0x308] sm:$0xff]
        %v3096 = vld [vmem:[#allocation3 + $0x310] sm:$0xff]
        %v3097 = vld [vmem:[#allocation3 + $0x318] sm:$0xff]
        %v3098 = vld [vmem:[#allocation3 + $0x320] sm:$0xff]
        %v3099 = vld [vmem:[#allocation3 + $0x328] sm:$0xff]
        %v3100 = vld [vmem:[#allocation3 + $0x330] sm:$0xff]
        %v3101 = vld [vmem:[#allocation3 + $0x338] sm:$0xff]
        %v3102 = vld [vmem:[#allocation3 + $0x340] sm:$0xff]
        %v3103 = vld [vmem:[#allocation3 + $0x348] sm:$0xff]
        %v3104 = vld [vmem:[#allocation3 + $0x350] sm:$0xff]
        %v3105 = vld [vmem:[#allocation3 + $0x358] sm:$0xff]
        %v3106 = vld [vmem:[#allocation3 + $0x360] sm:$0xff]
        %v3107 = vld [vmem:[#allocation3 + $0x368] sm:$0xff]
        %v3108 = vld [vmem:[#allocation3 + $0x370] sm:$0xff]
        %v3109 = vld [vmem:[#allocation3 + $0x378] sm:$0xff]
        %v3110 = vld [vmem:[#allocation3 + $0x380] sm:$0xff]
        %v3111 = vld [vmem:[#allocation3 + $0x388] sm:$0xff]
        %v3112 = vld [vmem:[#allocation3 + $0x390] sm:$0xff]
        %v3113 = vld [vmem:[#allocation3 + $0x398] sm:$0xff]
        %v3114 = vld [vmem:[#allocation3 + $0x3a0] sm:$0xff]
        %v3115 = vld [vmem:[#allocation3 + $0x3a8] sm:$0xff]
        %v3116 = vld [vmem:[#allocation3 + $0x3b0] sm:$0xff]
        %v3117 = vld [vmem:[#allocation3 + $0x3b8] sm:$0xff]
        %v3118 = vld [vmem:[#allocation3 + $0x3c0] sm:$0xff]
        %v3119 = vld [vmem:[#allocation3 + $0x3c8] sm:$0xff]
        %v3120 = vld [vmem:[#allocation3 + $0x3d0] sm:$0xff]
        %v3121 = vld [vmem:[#allocation3 + $0x3d8] sm:$0xff]
        %v3122 = vld [vmem:[#allocation3 + $0x3e0] sm:$0xff]
        %v3123 = vld [vmem:[#allocation3 + $0x3e8] sm:$0xff]
        %v3124 = vld [vmem:[#allocation3 + $0x3f0] sm:$0xff]
        %v3125 = vld [vmem:[#allocation3 + $0x3f8] sm:$0xff]
        %v3126 = vld [vmem:[#allocation3 + $0x400] sm:$0xff]
        %v3127 = vld [vmem:[#allocation3 + $0x408] sm:$0xff]
        %v3128 = vld [vmem:[#allocation3 + $0x410] sm:$0xff]
        %v3129 = vld [vmem:[#allocation3 + $0x418] sm:$0xff]
        %v3130 = vld [vmem:[#allocation3 + $0x420] sm:$0xff]
        %v3131 = vld [vmem:[#allocation3 + $0x428] sm:$0xff]
        %v3132 = vld [vmem:[#allocation3 + $0x430] sm:$0xff]
        %v3133 = vld [vmem:[#allocation3 + $0x438] sm:$0xff]
        %v3134 = vld [vmem:[#allocation3 + $0x440] sm:$0xff]
        %v3135 = vld [vmem:[#allocation3 + $0x448] sm:$0xff]
        %v3136 = vld [vmem:[#allocation3 + $0x450] sm:$0xff]
        %v3137 = vld [vmem:[#allocation3 + $0x458] sm:$0xff]
        %v3138 = vld [vmem:[#allocation3 + $0x460] sm:$0xff]
        %v3139 = vld [vmem:[#allocation3 + $0x468] sm:$0xff]
        %v3140 = vld [vmem:[#allocation3 + $0x470] sm:$0xff]
        %v3141 = vld [vmem:[#allocation3 + $0x478] sm:$0xff]
        %v3142 = vld [vmem:[#allocation3 + $0x480] sm:$0xff]
        %v3143 = vld [vmem:[#allocation3 + $0x488] sm:$0xff]
        %v3144 = vld [vmem:[#allocation3 + $0x490] sm:$0xff]
        %v3145 = vld [vmem:[#allocation3 + $0x498] sm:$0xff]
        %v3146 = vld [vmem:[#allocation3 + $0x4a0] sm:$0xff]
        %v3147 = vld [vmem:[#allocation3 + $0x4a8] sm:$0xff]
        %v3148 = vld [vmem:[#allocation3 + $0x4b0] sm:$0xff]
        %v3149 = vld [vmem:[#allocation3 + $0x4b8] sm:$0xff]
        %v3150 = vld [vmem:[#allocation3 + $0x4c0] sm:$0xff]
        %v3151 = vld [vmem:[#allocation3 + $0x4c8] sm:$0xff]
        %v3152 = vld [vmem:[#allocation3 + $0x4d0] sm:$0xff]
        %v3153 = vld [vmem:[#allocation3 + $0x4d8] sm:$0xff]
        %v3154 = vld [vmem:[#allocation3 + $0x4e0] sm:$0xff]
        %v3155 = vld [vmem:[#allocation3 + $0x4e8] sm:$0xff]
        %v3156 = vld [vmem:[#allocation3 + $0x4f0] sm:$0xff]
        %v3157 = vld [vmem:[#allocation3 + $0x4f8] sm:$0xff]
        %v3158 = vld [vmem:[#allocation3 + $0x500] sm:$0xff]
        %v3159 = vld [vmem:[#allocation3 + $0x508] sm:$0xff]
        %v3160 = vld [vmem:[#allocation3 + $0x510] sm:$0xff]
        %v3161 = vld [vmem:[#allocation3 + $0x518] sm:$0xff]
        %v3162 = vld [vmem:[#allocation3 + $0x520] sm:$0xff]
        %v3163 = vld [vmem:[#allocation3 + $0x528] sm:$0xff]
        %v3164 = vld [vmem:[#allocation3 + $0x530] sm:$0xff]
        %v3165 = vld [vmem:[#allocation3 + $0x538] sm:$0xff]
        %v3166 = vld [vmem:[#allocation3 + $0x540] sm:$0xff]
        %v3167 = vld [vmem:[#allocation3 + $0x548] sm:$0xff]
        %v3168 = vld [vmem:[#allocation3 + $0x550] sm:$0xff]
        %v3169 = vld [vmem:[#allocation3 + $0x558] sm:$0xff]
        %v3170 = vld [vmem:[#allocation3 + $0x560] sm:$0xff]
        %v3171 = vld [vmem:[#allocation3 + $0x568] sm:$0xff]
        %v3172 = vld [vmem:[#allocation3 + $0x570] sm:$0xff]
        %v3173 = vld [vmem:[#allocation3 + $0x578] sm:$0xff]
        %v3174 = vld [vmem:[#allocation3 + $0x580] sm:$0xff]
        %v3175 = vld [vmem:[#allocation3 + $0x588] sm:$0xff]
        %v3176 = vld [vmem:[#allocation3 + $0x590] sm:$0xff]
        %v3177 = vld [vmem:[#allocation3 + $0x598] sm:$0xff]
        %v3178 = vld [vmem:[#allocation3 + $0x5a0] sm:$0xff]
        %v3179 = vld [vmem:[#allocation3 + $0x5a8] sm:$0xff]
        %v3180 = vld [vmem:[#allocation3 + $0x5b0] sm:$0xff]
        %v3181 = vld [vmem:[#allocation3 + $0x5b8] sm:$0xff]
        %v3182 = vld [vmem:[#allocation3 + $0x5c0] sm:$0xff]
        %v3183 = vld [vmem:[#allocation3 + $0x5c8] sm:$0xff]
        %v3184 = vld [vmem:[#allocation3 + $0x5d0] sm:$0xff]
        %v3185 = vld [vmem:[#allocation3 + $0x5d8] sm:$0xff]
        %v3186 = vld [vmem:[#allocation3 + $0x5e0] sm:$0xff]
        %v3187 = vld [vmem:[#allocation3 + $0x5e8] sm:$0xff]
        %v3188 = vld [vmem:[#allocation3 + $0x5f0] sm:$0xff]
        %v3189 = vld [vmem:[#allocation3 + $0x5f8] sm:$0xff]
        %v3190 = vld [vmem:[#allocation3 + $0x600] sm:$0xff]
        %v3191 = vld [vmem:[#allocation3 + $0x608] sm:$0xff]
        %v3192 = vld [vmem:[#allocation3 + $0x610] sm:$0xff]
        %v3193 = vld [vmem:[#allocation3 + $0x618] sm:$0xff]
        %v3194 = vld [vmem:[#allocation3 + $0x620] sm:$0xff]
        %v3195 = vld [vmem:[#allocation3 + $0x628] sm:$0xff]
        %v3196 = vld [vmem:[#allocation3 + $0x630] sm:$0xff]
        %v3197 = vld [vmem:[#allocation3 + $0x638] sm:$0xff]
        %v3198 = vld [vmem:[#allocation3 + $0x640] sm:$0xff]
        %v3199 = vld [vmem:[#allocation3 + $0x648] sm:$0xff]
        %v3200 = vld [vmem:[#allocation3 + $0x650] sm:$0xff]
        %v3201 = vld [vmem:[#allocation3 + $0x658] sm:$0xff]
        %v3202 = vld [vmem:[#allocation3 + $0x660] sm:$0xff]
        %v3203 = vld [vmem:[#allocation3 + $0x668] sm:$0xff]
        %v3204 = vld [vmem:[#allocation3 + $0x670] sm:$0xff]
        %v3205 = vld [vmem:[#allocation3 + $0x678] sm:$0xff]
        %v3206 = vld [vmem:[#allocation3 + $0x680] sm:$0xff]
        %v3207 = vld [vmem:[#allocation3 + $0x688] sm:$0xff]
        %v3208 = vld [vmem:[#allocation3 + $0x690] sm:$0xff]
        %v3209 = vld [vmem:[#allocation3 + $0x698] sm:$0xff]
        %v3210 = vld [vmem:[#allocation3 + $0x6a0] sm:$0xff]
        %v3211 = vld [vmem:[#allocation3 + $0x6a8] sm:$0xff]
        %v3212 = vld [vmem:[#allocation3 + $0x6b0] sm:$0xff]
        %v3213 = vld [vmem:[#allocation3 + $0x6b8] sm:$0xff]
        %v3214 = vld [vmem:[#allocation3 + $0x6c0] sm:$0xff]
        %v3215 = vld [vmem:[#allocation3 + $0x6c8] sm:$0xff]
        %v3216 = vld [vmem:[#allocation3 + $0x6d0] sm:$0xff]
        %v3217 = vld [vmem:[#allocation3 + $0x6d8] sm:$0xff]
        %v3218 = vld [vmem:[#allocation3 + $0x6e0] sm:$0xff]
        %v3219 = vld [vmem:[#allocation3 + $0x6e8] sm:$0xff]
        %v3220 = vld [vmem:[#allocation3 + $0x6f0] sm:$0xff]
        %v3221 = vld [vmem:[#allocation3 + $0x6f8] sm:$0xff]
        %v3222 = vld [vmem:[#allocation3 + $0x700] sm:$0xff]
        %v3223 = vld [vmem:[#allocation3 + $0x708] sm:$0xff]
        %v3224 = vld [vmem:[#allocation3 + $0x710] sm:$0xff]
        %v3225 = vld [vmem:[#allocation3 + $0x718] sm:$0xff]
        %v3226 = vld [vmem:[#allocation3 + $0x720] sm:$0xff]
        %v3227 = vld [vmem:[#allocation3 + $0x728] sm:$0xff]
        %v3228 = vld [vmem:[#allocation3 + $0x730] sm:$0xff]
        %v3229 = vld [vmem:[#allocation3 + $0x738] sm:$0xff]
        %v3230 = vld [vmem:[#allocation3 + $0x740] sm:$0xff]
        %v3231 = vld [vmem:[#allocation3 + $0x748] sm:$0xff]
        %v3232 = vld [vmem:[#allocation3 + $0x750] sm:$0xff]
        %v3233 = vld [vmem:[#allocation3 + $0x758] sm:$0xff]
        %v3234 = vld [vmem:[#allocation3 + $0x760] sm:$0xff]
        %v3235 = vld [vmem:[#allocation3 + $0x768] sm:$0xff]
        %v3236 = vld [vmem:[#allocation3 + $0x770] sm:$0xff]
        %v3237 = vld [vmem:[#allocation3 + $0x778] sm:$0xff]
        %v3238 = vld [vmem:[#allocation3 + $0x780] sm:$0xff]
        %v3239 = vld [vmem:[#allocation3 + $0x788] sm:$0xff]
        %v3240 = vld [vmem:[#allocation3 + $0x790] sm:$0xff]
        %v3241 = vld [vmem:[#allocation3 + $0x798] sm:$0xff]
        %v3242 = vld [vmem:[#allocation3 + $0x7a0] sm:$0xff]
        %v3243 = vld [vmem:[#allocation3 + $0x7a8] sm:$0xff]
        %v3244 = vld [vmem:[#allocation3 + $0x7b0] sm:$0xff]
        %v3245 = vld [vmem:[#allocation3 + $0x7b8] sm:$0xff]
        %v3246 = vld [vmem:[#allocation3 + $0x7c0] sm:$0xff]
        %v3247 = vld [vmem:[#allocation3 + $0x7c8] sm:$0xff]
        %v3248 = vld [vmem:[#allocation3 + $0x7d0] sm:$0xff]
        %v3249 = vld [vmem:[#allocation3 + $0x7d8] sm:$0xff]
        %v3250 = vld [vmem:[#allocation3 + $0x7e0] sm:$0xff]
        %v3251 = vld [vmem:[#allocation3 + $0x7e8] sm:$0xff]
        %v3252 = vld [vmem:[#allocation3 + $0x7f0] sm:$0xff]
        %v3253 = vld [vmem:[#allocation3 + $0x7f8] sm:$0xff]
        %v3254 = vld [vmem:[#allocation3 + $0x800] sm:$0xff]
        %v3255 = vld [vmem:[#allocation3 + $0x808] sm:$0xff]
        %v3256 = vld [vmem:[#allocation3 + $0x810] sm:$0xff]
        %v3257 = vld [vmem:[#allocation3 + $0x818] sm:$0xff]
        %v3258 = vld [vmem:[#allocation3 + $0x820] sm:$0xff]
        %v3259 = vld [vmem:[#allocation3 + $0x828] sm:$0xff]
        %v3260 = vld [vmem:[#allocation3 + $0x830] sm:$0xff]
        %v3261 = vld [vmem:[#allocation3 + $0x838] sm:$0xff]
        %v3262 = vld [vmem:[#allocation3 + $0x840] sm:$0xff]
        %v3263 = vld [vmem:[#allocation3 + $0x848] sm:$0xff]
        %v3264 = vld [vmem:[#allocation3 + $0x850] sm:$0xff]
        %v3265 = vld [vmem:[#allocation3 + $0x858] sm:$0xff]
        %v3266 = vld [vmem:[#allocation3 + $0x860] sm:$0xff]
        %v3267 = vld [vmem:[#allocation3 + $0x868] sm:$0xff]
        %v3268 = vld [vmem:[#allocation3 + $0x870] sm:$0xff]
        %v3269 = vld [vmem:[#allocation3 + $0x878] sm:$0xff]
        %v3270 = vld [vmem:[#allocation3 + $0x880] sm:$0xff]
        %v3271 = vld [vmem:[#allocation3 + $0x888] sm:$0xff]
        %v3272 = vld [vmem:[#allocation3 + $0x890] sm:$0xff]
        %v3273 = vld [vmem:[#allocation3 + $0x898] sm:$0xff]
        %v3274 = vld [vmem:[#allocation3 + $0x8a0] sm:$0xff]
        %v3275 = vld [vmem:[#allocation3 + $0x8a8] sm:$0xff]
        %v3276 = vld [vmem:[#allocation3 + $0x8b0] sm:$0xff]
        %v3277 = vld [vmem:[#allocation3 + $0x8b8] sm:$0xff]
        %v3278 = vld [vmem:[#allocation3 + $0x8c0] sm:$0xff]
        %v3279 = vld [vmem:[#allocation3 + $0x8c8] sm:$0xff]
        %v3280 = vld [vmem:[#allocation3 + $0x8d0] sm:$0xff]
        %v3281 = vld [vmem:[#allocation3 + $0x8d8] sm:$0xff]
        %v3282 = vld [vmem:[#allocation3 + $0x8e0] sm:$0xff]
        %v3283 = vld [vmem:[#allocation3 + $0x8e8] sm:$0xff]
        %v3284 = vld [vmem:[#allocation3 + $0x8f0] sm:$0xff]
        %v3285 = vld [vmem:[#allocation3 + $0x8f8] sm:$0xff]
        %v3286 = vld [vmem:[#allocation9] sm:$0xff]
        %v3287 = vld [vmem:[#allocation9 + $0x8] sm:$0xff]
        %v3288 = vld [vmem:[#allocation9 + $0x10] sm:$0xff]
        %v3289 = vld [vmem:[#allocation9 + $0x18] sm:$0xff]
        %v3290 = vld [vmem:[#allocation9 + $0x20] sm:$0xff]
        %v3291 = vld [vmem:[#allocation9 + $0x28] sm:$0xff]
        %v3292 = vld [vmem:[#allocation9 + $0x30] sm:$0xff]
        %v3293 = vld [vmem:[#allocation9 + $0x38] sm:$0xff]
        %v3294 = vld [vmem:[#allocation9 + $0x40] sm:$0xff]
        %v3295 = vld [vmem:[#allocation9 + $0x48] sm:$0xff]
        %v3296 = vld [vmem:[#allocation9 + $0x50] sm:$0xff]
        %v3297 = vld [vmem:[#allocation9 + $0x58] sm:$0xff]
        %v3298 = vld [vmem:[#allocation9 + $0x60] sm:$0xff]
        %v3299 = vld [vmem:[#allocation9 + $0x68] sm:$0xff]
        %v3300 = vld [vmem:[#allocation9 + $0x70] sm:$0xff]
        %v3301 = vld [vmem:[#allocation9 + $0x78] sm:$0xff]
        %v3302 = vld [vmem:[#allocation9 + $0x80] sm:$0xff]
        %v3303 = vld [vmem:[#allocation9 + $0x88] sm:$0xff]
        %v3304 = vld [vmem:[#allocation9 + $0x90] sm:$0xff]
        %v3305 = vld [vmem:[#allocation9 + $0x98] sm:$0xff]
        %v3306 = vld [vmem:[#allocation9 + $0xa0] sm:$0xff]
        %v3307 = vld [vmem:[#allocation9 + $0xa8] sm:$0xff]
        %v3308 = vld [vmem:[#allocation9 + $0xb0] sm:$0xff]
        %v3309 = vld [vmem:[#allocation9 + $0xb8] sm:$0xff]
        %v3310 = vld [vmem:[#allocation9 + $0xc0] sm:$0xff]
        %v3311 = vld [vmem:[#allocation9 + $0xc8] sm:$0xff]
        %v3312 = vld [vmem:[#allocation9 + $0xd0] sm:$0xff]
        %v3313 = vld [vmem:[#allocation9 + $0xd8] sm:$0xff]
        %v3314 = vld [vmem:[#allocation9 + $0xe0] sm:$0xff]
        %v3315 = vld [vmem:[#allocation9 + $0xe8] sm:$0xff]
        %v3316 = vld [vmem:[#allocation9 + $0xf0] sm:$0xff]
        %v3317 = vld [vmem:[#allocation9 + $0xf8] sm:$0xff]
        %v3318 = vld [vmem:[#allocation9 + $0x100] sm:$0xff]
        %v3319 = vld [vmem:[#allocation9 + $0x108] sm:$0xff]
        %v3320 = vld [vmem:[#allocation9 + $0x110] sm:$0xff]
        %v3321 = vld [vmem:[#allocation9 + $0x118] sm:$0xff]
        %v3322 = vld [vmem:[#allocation9 + $0x120] sm:$0xff]
        %v3323 = vld [vmem:[#allocation9 + $0x128] sm:$0xff]
        %v3324 = vld [vmem:[#allocation9 + $0x130] sm:$0xff]
        %v3325 = vld [vmem:[#allocation9 + $0x138] sm:$0xff]
        %v3326 = vld [vmem:[#allocation9 + $0x140] sm:$0xff]
        %v3327 = vld [vmem:[#allocation9 + $0x148] sm:$0xff]
        %v3328 = vld [vmem:[#allocation9 + $0x150] sm:$0xff]
        %v3329 = vld [vmem:[#allocation9 + $0x158] sm:$0xff]
        %v3330 = vld [vmem:[#allocation9 + $0x160] sm:$0xff]
        %v3331 = vld [vmem:[#allocation9 + $0x168] sm:$0xff]
        %v3332 = vld [vmem:[#allocation9 + $0x170] sm:$0xff]
        %v3333 = vld [vmem:[#allocation9 + $0x178] sm:$0xff]
        %v3334 = vld [vmem:[#allocation9 + $0x180] sm:$0xff]
        %v3335 = vld [vmem:[#allocation9 + $0x188] sm:$0xff]
        %v3336 = vld [vmem:[#allocation9 + $0x190] sm:$0xff]
        %v3337 = vld [vmem:[#allocation9 + $0x198] sm:$0xff]
        %v3338 = vld [vmem:[#allocation9 + $0x1a0] sm:$0xff]
        %v3339 = vld [vmem:[#allocation9 + $0x1a8] sm:$0xff]
        %v3340 = vld [vmem:[#allocation9 + $0x1b0] sm:$0xff]
        %v3341 = vld [vmem:[#allocation9 + $0x1b8] sm:$0xff]
        %v3342 = vld [vmem:[#allocation9 + $0x1c0] sm:$0xff]
        %v3343 = vld [vmem:[#allocation9 + $0x1c8] sm:$0xff]
        %v3344 = vld [vmem:[#allocation9 + $0x1d0] sm:$0xff]
        %v3345 = vld [vmem:[#allocation9 + $0x1d8] sm:$0xff]
        %v3346 = vld [vmem:[#allocation9 + $0x1e0] sm:$0xff]
        %v3347 = vld [vmem:[#allocation9 + $0x1e8] sm:$0xff]
        %v3348 = vld [vmem:[#allocation9 + $0x1f0] sm:$0xff]
        %v3349 = vld [vmem:[#allocation9 + $0x1f8] sm:$0xff]
        %v3350 = vld [vmem:[#allocation9 + $0x200] sm:$0xff]
        %v3351 = vld [vmem:[#allocation9 + $0x208] sm:$0xff]
        %v3352 = vld [vmem:[#allocation9 + $0x210] sm:$0xff]
        %v3353 = vld [vmem:[#allocation9 + $0x218] sm:$0xff]
        %v3354 = vld [vmem:[#allocation9 + $0x220] sm:$0xff]
        %v3355 = vld [vmem:[#allocation9 + $0x228] sm:$0xff]
        %v3356 = vld [vmem:[#allocation9 + $0x230] sm:$0xff]
        %v3357 = vld [vmem:[#allocation9 + $0x238] sm:$0xff]
        %v3358 = vld [vmem:[#allocation9 + $0x240] sm:$0xff]
        %v3359 = vld [vmem:[#allocation9 + $0x248] sm:$0xff]
        %v3360 = vld [vmem:[#allocation9 + $0x250] sm:$0xff]
        %v3361 = vld [vmem:[#allocation9 + $0x258] sm:$0xff]
        %v3362 = vld [vmem:[#allocation9 + $0x260] sm:$0xff]
        %v3363 = vld [vmem:[#allocation9 + $0x268] sm:$0xff]
        %v3364 = vld [vmem:[#allocation9 + $0x270] sm:$0xff]
        %v3365 = vld [vmem:[#allocation9 + $0x278] sm:$0xff]
        %v3366 = vld [vmem:[#allocation9 + $0x280] sm:$0xff]
        %v3367 = vld [vmem:[#allocation9 + $0x288] sm:$0xff]
        %v3368 = vld [vmem:[#allocation9 + $0x290] sm:$0xff]
        %v3369 = vld [vmem:[#allocation9 + $0x298] sm:$0xff]
        %v3370 = vld [vmem:[#allocation9 + $0x2a0] sm:$0xff]
        %v3371 = vld [vmem:[#allocation9 + $0x2a8] sm:$0xff]
        %v3372 = vld [vmem:[#allocation9 + $0x2b0] sm:$0xff]
        %v3373 = vld [vmem:[#allocation9 + $0x2b8] sm:$0xff]
        %v3374 = vld [vmem:[#allocation9 + $0x2c0] sm:$0xff]
        %v3375 = vld [vmem:[#allocation9 + $0x2c8] sm:$0xff]
        %v3376 = vld [vmem:[#allocation9 + $0x2d0] sm:$0xff]
        %v3377 = vld [vmem:[#allocation9 + $0x2d8] sm:$0xff]
        %v3378 = vld [vmem:[#allocation9 + $0x2e0] sm:$0xff]
        %v3379 = vld [vmem:[#allocation9 + $0x2e8] sm:$0xff]
        %v3380 = vld [vmem:[#allocation9 + $0x2f0] sm:$0xff]
        %v3381 = vld [vmem:[#allocation9 + $0x2f8] sm:$0xff]
        %v3382 = vld [vmem:[#allocation9 + $0x300] sm:$0xff]
        %v3383 = vld [vmem:[#allocation9 + $0x308] sm:$0xff]
        %v3384 = vld [vmem:[#allocation9 + $0x310] sm:$0xff]
        %v3385 = vld [vmem:[#allocation9 + $0x318] sm:$0xff]
        %v3386 = vld [vmem:[#allocation9 + $0x320] sm:$0xff]
        %v3387 = vld [vmem:[#allocation9 + $0x328] sm:$0xff]
        %v3388 = vld [vmem:[#allocation9 + $0x330] sm:$0xff]
        %v3389 = vld [vmem:[#allocation9 + $0x338] sm:$0xff]
        %v3390 = vld [vmem:[#allocation9 + $0x340] sm:$0xff]
        %v3391 = vld [vmem:[#allocation9 + $0x348] sm:$0xff]
        %v3392 = vld [vmem:[#allocation9 + $0x350] sm:$0xff]
        %v3393 = vld [vmem:[#allocation9 + $0x358] sm:$0xff]
        %v3394 = vld [vmem:[#allocation9 + $0x360] sm:$0xff]
        %v3395 = vld [vmem:[#allocation9 + $0x368] sm:$0xff]
        %v3396 = vld [vmem:[#allocation9 + $0x370] sm:$0xff]
        %v3397 = vld [vmem:[#allocation9 + $0x378] sm:$0xff]
        %v3398 = vld [vmem:[#allocation9 + $0x380] sm:$0xff]
        %v3399 = vld [vmem:[#allocation9 + $0x388] sm:$0xff]
        %v3400 = vld [vmem:[#allocation9 + $0x390] sm:$0xff]
        %v3401 = vld [vmem:[#allocation9 + $0x398] sm:$0xff]
        %v3402 = vld [vmem:[#allocation9 + $0x3a0] sm:$0xff]
        %v3403 = vld [vmem:[#allocation9 + $0x3a8] sm:$0xff]
        %v3404 = vld [vmem:[#allocation9 + $0x3b0] sm:$0xff]
        %v3405 = vld [vmem:[#allocation9 + $0x3b8] sm:$0xff]
        %v3406 = vld [vmem:[#allocation9 + $0x3c0] sm:$0xff]
        %v3407 = vld [vmem:[#allocation9 + $0x3c8] sm:$0xff]
        %v3408 = vld [vmem:[#allocation9 + $0x3d0] sm:$0xff]
        %v3409 = vld [vmem:[#allocation9 + $0x3d8] sm:$0xff]
        %v3410 = vld [vmem:[#allocation9 + $0x3e0] sm:$0xff]
        %v3411 = vld [vmem:[#allocation9 + $0x3e8] sm:$0xff]
        %v3412 = vld [vmem:[#allocation9 + $0x3f0] sm:$0xff]
        %v3413 = vld [vmem:[#allocation9 + $0x3f8] sm:$0xff]
        %v3414 = vld [vmem:[#allocation9 + $0x400] sm:$0xff]
        %v3415 = vld [vmem:[#allocation9 + $0x408] sm:$0xff]
        %v3416 = vld [vmem:[#allocation9 + $0x410] sm:$0xff]
        %v3417 = vld [vmem:[#allocation9 + $0x418] sm:$0xff]
        %v3418 = vld [vmem:[#allocation9 + $0x420] sm:$0xff]
        %v3419 = vld [vmem:[#allocation9 + $0x428] sm:$0xff]
        %v3420 = vld [vmem:[#allocation9 + $0x430] sm:$0xff]
        %v3421 = vld [vmem:[#allocation9 + $0x438] sm:$0xff]
        %v3422 = vld [vmem:[#allocation9 + $0x440] sm:$0xff]
        %v3423 = vld [vmem:[#allocation9 + $0x448] sm:$0xff]
        %v3424 = vld [vmem:[#allocation9 + $0x450] sm:$0xff]
        %v3425 = vld [vmem:[#allocation9 + $0x458] sm:$0xff]
        %v3426 = vld [vmem:[#allocation9 + $0x460] sm:$0xff]
        %v3427 = vld [vmem:[#allocation9 + $0x468] sm:$0xff]
        %v3428 = vld [vmem:[#allocation9 + $0x470] sm:$0xff]
        %v3429 = vld [vmem:[#allocation9 + $0x478] sm:$0xff]
        %3430 = vmatpush.msra.mxu0 %v3301
        %3431 = vmatpush.msra.mxu0 %v3300
        %3432 = vmatpush.msra.mxu0 %v3299
        %3433 = vmatpush.msra.mxu0 %v3298
        %3434 = vmatpush.msra.mxu0 %v3297
        %3435 = vmatpush.msra.mxu0 %v3296
        %3436 = vmatpush.msra.mxu0 %v3295
        %3437 = vmatpush.msra.mxu0 %v3294
        %3438 = vmatpush.msra.mxu0 %v3293
        %3439 = vmatpush.msra.mxu0 %v3292
        %3440 = vmatpush.msra.mxu0 %v3291
        %3441 = vmatpush.msra.mxu0 %v3290
        %3442 = vmatpush.msra.mxu0 %v3289
        %3443 = vmatpush.msra.mxu0 %v3288
        %3444 = vmatpush.msra.mxu0 %v3287
        %3445 = vmatpush.msra.mxu0 %v3286
        %3446 = vmatmul.f32.gmra.mxu0 %v2998
        %v3447 = vpop.f32.mrf.mxu0
        %v3448 = vadd.f32 0.0, %v3447
        %3449 = vmatmul.f32.gmra.mxu0 %v3007
        %v3450 = vpop.f32.mrf.mxu0
        %v3451 = vadd.f32 0.0, %v3450
        %3452 = vmatmul.f32.gmra.mxu0 %v3016
        %v3453 = vpop.f32.mrf.mxu0
        %v3454 = vadd.f32 0.0, %v3453
        %3455 = vmatmul.f32.gmra.mxu0 %v3025
        %v3456 = vpop.f32.mrf.mxu0
        %v3457 = vadd.f32 0.0, %v3456
        %3458 = vmatmul.f32.gmra.mxu0 %v3034
        %v3459 = vpop.f32.mrf.mxu0
        %v3460 = vadd.f32 0.0, %v3459
        %3461 = vmatmul.f32.gmra.mxu0 %v3043
        %v3462 = vpop.f32.mrf.mxu0
        %v3463 = vadd.f32 0.0, %v3462
        %3464 = vmatmul.f32.gmra.mxu0 %v3052
        %v3465 = vpop.f32.mrf.mxu0
        %v3466 = vadd.f32 0.0, %v3465
        %3467 = vmatmul.f32.gmra.mxu0 %v3061
        %v3468 = vpop.f32.mrf.mxu0
        %v3469 = vadd.f32 0.0, %v3468
        %3470 = vmatmul.f32.gmra.mxu0 %v3070
        %v3471 = vpop.f32.mrf.mxu0
        %v3472 = vadd.f32 0.0, %v3471
        %3473 = vmatmul.f32.gmra.mxu0 %v3079
        %v3474 = vpop.f32.mrf.mxu0
        %v3475 = vadd.f32 0.0, %v3474
        %3476 = vmatmul.f32.gmra.mxu0 %v3088
        %v3477 = vpop.f32.mrf.mxu0
        %v3478 = vadd.f32 0.0, %v3477
        %3479 = vmatmul.f32.gmra.mxu0 %v3097
        %v3480 = vpop.f32.mrf.mxu0
        %v3481 = vadd.f32 0.0, %v3480
        %3482 = vmatmul.f32.gmra.mxu0 %v3106
        %v3483 = vpop.f32.mrf.mxu0
        %v3484 = vadd.f32 0.0, %v3483
        %3485 = vmatmul.f32.gmra.mxu0 %v3115
        %v3486 = vpop.f32.mrf.mxu0
        %v3487 = vadd.f32 0.0, %v3486
        %3488 = vmatmul.f32.gmra.mxu0 %v3124
        %v3489 = vpop.f32.mrf.mxu0
        %v3490 = vadd.f32 0.0, %v3489
        %3491 = vmatmul.f32.gmra.mxu0 %v3133
        %v3492 = vpop.f32.mrf.mxu0
        %v3493 = vadd.f32 0.0, %v3492
        %3494 = vmatmul.f32.gmra.mxu0 %v3142
        %v3495 = vpop.f32.mrf.mxu0
        %v3496 = vadd.f32 0.0, %v3495
        %3497 = vmatmul.f32.gmra.mxu0 %v3151
        %v3498 = vpop.f32.mrf.mxu0
        %v3499 = vadd.f32 0.0, %v3498
        %3500 = vmatmul.f32.gmra.mxu0 %v3160
        %v3501 = vpop.f32.mrf.mxu0
        %v3502 = vadd.f32 0.0, %v3501
        %3503 = vmatmul.f32.gmra.mxu0 %v3169
        %v3504 = vpop.f32.mrf.mxu0
        %v3505 = vadd.f32 0.0, %v3504
        %3506 = vmatmul.f32.gmra.mxu0 %v3178
        %v3507 = vpop.f32.mrf.mxu0
        %v3508 = vadd.f32 0.0, %v3507
        %3509 = vmatmul.f32.gmra.mxu0 %v3187
        %v3510 = vpop.f32.mrf.mxu0
        %v3511 = vadd.f32 0.0, %v3510
        %3512 = vmatmul.f32.gmra.mxu0 %v3196
        %v3513 = vpop.f32.mrf.mxu0
        %v3514 = vadd.f32 0.0, %v3513
        %3515 = vmatmul.f32.gmra.mxu0 %v3205
        %v3516 = vpop.f32.mrf.mxu0
        %v3517 = vadd.f32 0.0, %v3516
        %3518 = vmatmul.f32.gmra.mxu0 %v3214
        %v3519 = vpop.f32.mrf.mxu0
        %v3520 = vadd.f32 0.0, %v3519
        %3521 = vmatmul.f32.gmra.mxu0 %v3223
        %v3522 = vpop.f32.mrf.mxu0
        %v3523 = vadd.f32 0.0, %v3522
        %3524 = vmatmul.f32.gmra.mxu0 %v3232
        %v3525 = vpop.f32.mrf.mxu0
        %v3526 = vadd.f32 0.0, %v3525
        %3527 = vmatmul.f32.gmra.mxu0 %v3241
        %v3528 = vpop.f32.mrf.mxu0
        %v3529 = vadd.f32 0.0, %v3528
        %3530 = vmatmul.f32.gmra.mxu0 %v3250
        %v3531 = vpop.f32.mrf.mxu0
        %v3532 = vadd.f32 0.0, %v3531
        %3533 = vmatmul.f32.gmra.mxu0 %v3259
        %v3534 = vpop.f32.mrf.mxu0
        %v3535 = vadd.f32 0.0, %v3534
        %3536 = vmatmul.f32.gmra.mxu0 %v3268
        %v3537 = vpop.f32.mrf.mxu0
        %v3538 = vadd.f32 0.0, %v3537
        %3539 = vmatmul.f32.gmra.mxu0 %v3277
        %v3540 = vpop.f32.mrf.mxu0
        %v3541 = vadd.f32 0.0, %v3540
        %3542 = vdwg.mxu0
        %3543 = vmatpush.msra.mxu0 %v3317
        %3544 = vmatpush.msra.mxu0 %v3316
        %3545 = vmatpush.msra.mxu0 %v3315
        %3546 = vmatpush.msra.mxu0 %v3314
        %3547 = vmatpush.msra.mxu0 %v3313
        %3548 = vmatpush.msra.mxu0 %v3312
        %3549 = vmatpush.msra.mxu0 %v3311
        %3550 = vmatpush.msra.mxu0 %v3310
        %3551 = vmatpush.msra.mxu0 %v3309
        %3552 = vmatpush.msra.mxu0 %v3308
        %3553 = vmatpush.msra.mxu0 %v3307
        %3554 = vmatpush.msra.mxu0 %v3306
        %3555 = vmatpush.msra.mxu0 %v3305
        %3556 = vmatpush.msra.mxu0 %v3304
        %3557 = vmatpush.msra.mxu0 %v3303
        %3558 = vmatpush.msra.mxu0 %v3302
        %3559 = vmatmul.f32.gmra.mxu0 %v2999
        %v3560 = vpop.f32.mrf.mxu0
        %v3561 = vadd.f32 %v3448, %v3560
        %3562 = vmatmul.f32.gmra.mxu0 %v3008
        %v3563 = vpop.f32.mrf.mxu0
        %v3564 = vadd.f32 %v3451, %v3563
        %3565 = vmatmul.f32.gmra.mxu0 %v3017
        %v3566 = vpop.f32.mrf.mxu0
        %v3567 = vadd.f32 %v3454, %v3566
        %3568 = vmatmul.f32.gmra.mxu0 %v3026
        %v3569 = vpop.f32.mrf.mxu0
        %v3570 = vadd.f32 %v3457, %v3569
        %3571 = vmatmul.f32.gmra.mxu0 %v3035
        %v3572 = vpop.f32.mrf.mxu0
        %v3573 = vadd.f32 %v3460, %v3572
        %3574 = vmatmul.f32.gmra.mxu0 %v3044
        %v3575 = vpop.f32.mrf.mxu0
        %v3576 = vadd.f32 %v3463, %v3575
        %3577 = vmatmul.f32.gmra.mxu0 %v3053
        %v3578 = vpop.f32.mrf.mxu0
        %v3579 = vadd.f32 %v3466, %v3578
        %3580 = vmatmul.f32.gmra.mxu0 %v3062
        %v3581 = vpop.f32.mrf.mxu0
        %v3582 = vadd.f32 %v3469, %v3581
        %3583 = vmatmul.f32.gmra.mxu0 %v3071
        %v3584 = vpop.f32.mrf.mxu0
        %v3585 = vadd.f32 %v3472, %v3584
        %3586 = vmatmul.f32.gmra.mxu0 %v3080
        %v3587 = vpop.f32.mrf.mxu0
        %v3588 = vadd.f32 %v3475, %v3587
        %3589 = vmatmul.f32.gmra.mxu0 %v3089
        %v3590 = vpop.f32.mrf.mxu0
        %v3591 = vadd.f32 %v3478, %v3590
        %3592 = vmatmul.f32.gmra.mxu0 %v3098
        %v3593 = vpop.f32.mrf.mxu0
        %v3594 = vadd.f32 %v3481, %v3593
        %3595 = vmatmul.f32.gmra.mxu0 %v3107
        %v3596 = vpop.f32.mrf.mxu0
        %v3597 = vadd.f32 %v3484, %v3596
        %3598 = vmatmul.f32.gmra.mxu0 %v3116
        %v3599 = vpop.f32.mrf.mxu0
        %v3600 = vadd.f32 %v3487, %v3599
        %3601 = vmatmul.f32.gmra.mxu0 %v3125
        %v3602 = vpop.f32.mrf.mxu0
        %v3603 = vadd.f32 %v3490, %v3602
        %3604 = vmatmul.f32.gmra.mxu0 %v3134
        %v3605 = vpop.f32.mrf.mxu0
        %v3606 = vadd.f32 %v3493, %v3605
        %3607 = vmatmul.f32.gmra.mxu0 %v3143
        %v3608 = vpop.f32.mrf.mxu0
        %v3609 = vadd.f32 %v3496, %v3608
        %3610 = vmatmul.f32.gmra.mxu0 %v3152
        %v3611 = vpop.f32.mrf.mxu0
        %v3612 = vadd.f32 %v3499, %v3611
        %3613 = vmatmul.f32.gmra.mxu0 %v3161
        %v3614 = vpop.f32.mrf.mxu0
        %v3615 = vadd.f32 %v3502, %v3614
        %3616 = vmatmul.f32.gmra.mxu0 %v3170
        %v3617 = vpop.f32.mrf.mxu0
        %v3618 = vadd.f32 %v3505, %v3617
        %3619 = vmatmul.f32.gmra.mxu0 %v3179
        %v3620 = vpop.f32.mrf.mxu0
        %v3621 = vadd.f32 %v3508, %v3620
        %3622 = vmatmul.f32.gmra.mxu0 %v3188
        %v3623 = vpop.f32.mrf.mxu0
        %v3624 = vadd.f32 %v3511, %v3623
        %3625 = vmatmul.f32.gmra.mxu0 %v3197
        %v3626 = vpop.f32.mrf.mxu0
        %v3627 = vadd.f32 %v3514, %v3626
        %3628 = vmatmul.f32.gmra.mxu0 %v3206
        %v3629 = vpop.f32.mrf.mxu0
        %v3630 = vadd.f32 %v3517, %v3629
        %3631 = vmatmul.f32.gmra.mxu0 %v3215
        %v3632 = vpop.f32.mrf.mxu0
        %v3633 = vadd.f32 %v3520, %v3632
        %3634 = vmatmul.f32.gmra.mxu0 %v3224
        %v3635 = vpop.f32.mrf.mxu0
        %v3636 = vadd.f32 %v3523, %v3635
        %3637 = vmatmul.f32.gmra.mxu0 %v3233
        %v3638 = vpop.f32.mrf.mxu0
        %v3639 = vadd.f32 %v3526, %v3638
        %3640 = vmatmul.f32.gmra.mxu0 %v3242
        %v3641 = vpop.f32.mrf.mxu0
        %v3642 = vadd.f32 %v3529, %v3641
        %3643 = vmatmul.f32.gmra.mxu0 %v3251
        %v3644 = vpop.f32.mrf.mxu0
        %v3645 = vadd.f32 %v3532, %v3644
        %3646 = vmatmul.f32.gmra.mxu0 %v3260
        %v3647 = vpop.f32.mrf.mxu0
        %v3648 = vadd.f32 %v3535, %v3647
        %3649 = vmatmul.f32.gmra.mxu0 %v3269
        %v3650 = vpop.f32.mrf.mxu0
        %v3651 = vadd.f32 %v3538, %v3650
        %3652 = vmatmul.f32.gmra.mxu0 %v3278
        %v3653 = vpop.f32.mrf.mxu0
        %v3654 = vadd.f32 %v3541, %v3653
        %3655 = vdwg.mxu0
        %3656 = vmatpush.msra.mxu0 %v3333
        %3657 = vmatpush.msra.mxu0 %v3332
        %3658 = vmatpush.msra.mxu0 %v3331
        %3659 = vmatpush.msra.mxu0 %v3330
        %3660 = vmatpush.msra.mxu0 %v3329
        %3661 = vmatpush.msra.mxu0 %v3328
        %3662 = vmatpush.msra.mxu0 %v3327
        %3663 = vmatpush.msra.mxu0 %v3326
        %3664 = vmatpush.msra.mxu0 %v3325
        %3665 = vmatpush.msra.mxu0 %v3324
        %3666 = vmatpush.msra.mxu0 %v3323
        %3667 = vmatpush.msra.mxu0 %v3322
        %3668 = vmatpush.msra.mxu0 %v3321
        %3669 = vmatpush.msra.mxu0 %v3320
        %3670 = vmatpush.msra.mxu0 %v3319
        %3671 = vmatpush.msra.mxu0 %v3318
        %3672 = vmatmul.f32.gmra.mxu0 %v3000
        %v3673 = vpop.f32.mrf.mxu0
        %v3674 = vadd.f32 %v3561, %v3673
        %3675 = vmatmul.f32.gmra.mxu0 %v3009
        %v3676 = vpop.f32.mrf.mxu0
        %v3677 = vadd.f32 %v3564, %v3676
        %3678 = vmatmul.f32.gmra.mxu0 %v3018
        %v3679 = vpop.f32.mrf.mxu0
        %v3680 = vadd.f32 %v3567, %v3679
        %3681 = vmatmul.f32.gmra.mxu0 %v3027
        %v3682 = vpop.f32.mrf.mxu0
        %v3683 = vadd.f32 %v3570, %v3682
        %3684 = vmatmul.f32.gmra.mxu0 %v3036
        %v3685 = vpop.f32.mrf.mxu0
        %v3686 = vadd.f32 %v3573, %v3685
        %3687 = vmatmul.f32.gmra.mxu0 %v3045
        %v3688 = vpop.f32.mrf.mxu0
        %v3689 = vadd.f32 %v3576, %v3688
        %3690 = vmatmul.f32.gmra.mxu0 %v3054
        %v3691 = vpop.f32.mrf.mxu0
        %v3692 = vadd.f32 %v3579, %v3691
        %3693 = vmatmul.f32.gmra.mxu0 %v3063
        %v3694 = vpop.f32.mrf.mxu0
        %v3695 = vadd.f32 %v3582, %v3694
        %3696 = vmatmul.f32.gmra.mxu0 %v3072
        %v3697 = vpop.f32.mrf.mxu0
        %v3698 = vadd.f32 %v3585, %v3697
        %3699 = vmatmul.f32.gmra.mxu0 %v3081
        %v3700 = vpop.f32.mrf.mxu0
        %v3701 = vadd.f32 %v3588, %v3700
        %3702 = vmatmul.f32.gmra.mxu0 %v3090
        %v3703 = vpop.f32.mrf.mxu0
        %v3704 = vadd.f32 %v3591, %v3703
        %3705 = vmatmul.f32.gmra.mxu0 %v3099
        %v3706 = vpop.f32.mrf.mxu0
        %v3707 = vadd.f32 %v3594, %v3706
        %3708 = vmatmul.f32.gmra.mxu0 %v3108
        %v3709 = vpop.f32.mrf.mxu0
        %v3710 = vadd.f32 %v3597, %v3709
        %3711 = vmatmul.f32.gmra.mxu0 %v3117
        %v3712 = vpop.f32.mrf.mxu0
        %v3713 = vadd.f32 %v3600, %v3712
        %3714 = vmatmul.f32.gmra.mxu0 %v3126
        %v3715 = vpop.f32.mrf.mxu0
        %v3716 = vadd.f32 %v3603, %v3715
        %3717 = vmatmul.f32.gmra.mxu0 %v3135
        %v3718 = vpop.f32.mrf.mxu0
        %v3719 = vadd.f32 %v3606, %v3718
        %3720 = vmatmul.f32.gmra.mxu0 %v3144
        %v3721 = vpop.f32.mrf.mxu0
        %v3722 = vadd.f32 %v3609, %v3721
        %3723 = vmatmul.f32.gmra.mxu0 %v3153
        %v3724 = vpop.f32.mrf.mxu0
        %v3725 = vadd.f32 %v3612, %v3724
        %3726 = vmatmul.f32.gmra.mxu0 %v3162
        %v3727 = vpop.f32.mrf.mxu0
        %v3728 = vadd.f32 %v3615, %v3727
        %3729 = vmatmul.f32.gmra.mxu0 %v3171
        %v3730 = vpop.f32.mrf.mxu0
        %v3731 = vadd.f32 %v3618, %v3730
        %3732 = vmatmul.f32.gmra.mxu0 %v3180
        %v3733 = vpop.f32.mrf.mxu0
        %v3734 = vadd.f32 %v3621, %v3733
        %3735 = vmatmul.f32.gmra.mxu0 %v3189
        %v3736 = vpop.f32.mrf.mxu0
        %v3737 = vadd.f32 %v3624, %v3736
        %3738 = vmatmul.f32.gmra.mxu0 %v3198
        %v3739 = vpop.f32.mrf.mxu0
        %v3740 = vadd.f32 %v3627, %v3739
        %3741 = vmatmul.f32.gmra.mxu0 %v3207
        %v3742 = vpop.f32.mrf.mxu0
        %v3743 = vadd.f32 %v3630, %v3742
        %3744 = vmatmul.f32.gmra.mxu0 %v3216
        %v3745 = vpop.f32.mrf.mxu0
        %v3746 = vadd.f32 %v3633, %v3745
        %3747 = vmatmul.f32.gmra.mxu0 %v3225
        %v3748 = vpop.f32.mrf.mxu0
        %v3749 = vadd.f32 %v3636, %v3748
        %3750 = vmatmul.f32.gmra.mxu0 %v3234
        %v3751 = vpop.f32.mrf.mxu0
        %v3752 = vadd.f32 %v3639, %v3751
        %3753 = vmatmul.f32.gmra.mxu0 %v3243
        %v3754 = vpop.f32.mrf.mxu0
        %v3755 = vadd.f32 %v3642, %v3754
        %3756 = vmatmul.f32.gmra.mxu0 %v3252
        %v3757 = vpop.f32.mrf.mxu0
        %v3758 = vadd.f32 %v3645, %v3757
        %3759 = vmatmul.f32.gmra.mxu0 %v3261
        %v3760 = vpop.f32.mrf.mxu0
        %v3761 = vadd.f32 %v3648, %v3760
        %3762 = vmatmul.f32.gmra.mxu0 %v3270
        %v3763 = vpop.f32.mrf.mxu0
        %v3764 = vadd.f32 %v3651, %v3763
        %3765 = vmatmul.f32.gmra.mxu0 %v3279
        %v3766 = vpop.f32.mrf.mxu0
        %v3767 = vadd.f32 %v3654, %v3766
        %3768 = vdwg.mxu0
        %3769 = vmatpush.msra.mxu0 %v3349
        %3770 = vmatpush.msra.mxu0 %v3348
        %3771 = vmatpush.msra.mxu0 %v3347
        %3772 = vmatpush.msra.mxu0 %v3346
        %3773 = vmatpush.msra.mxu0 %v3345
        %3774 = vmatpush.msra.mxu0 %v3344
        %3775 = vmatpush.msra.mxu0 %v3343
        %3776 = vmatpush.msra.mxu0 %v3342
        %3777 = vmatpush.msra.mxu0 %v3341
        %3778 = vmatpush.msra.mxu0 %v3340
        %3779 = vmatpush.msra.mxu0 %v3339
        %3780 = vmatpush.msra.mxu0 %v3338
        %3781 = vmatpush.msra.mxu0 %v3337
        %3782 = vmatpush.msra.mxu0 %v3336
        %3783 = vmatpush.msra.mxu0 %v3335
        %3784 = vmatpush.msra.mxu0 %v3334
        %3785 = vmatmul.f32.gmra.mxu0 %v3001
        %v3786 = vpop.f32.mrf.mxu0
        %v3787 = vadd.f32 %v3674, %v3786
        %3788 = vmatmul.f32.gmra.mxu0 %v3010
        %v3789 = vpop.f32.mrf.mxu0
        %v3790 = vadd.f32 %v3677, %v3789
        %3791 = vmatmul.f32.gmra.mxu0 %v3019
        %v3792 = vpop.f32.mrf.mxu0
        %v3793 = vadd.f32 %v3680, %v3792
        %3794 = vmatmul.f32.gmra.mxu0 %v3028
        %v3795 = vpop.f32.mrf.mxu0
        %v3796 = vadd.f32 %v3683, %v3795
        %3797 = vmatmul.f32.gmra.mxu0 %v3037
        %v3798 = vpop.f32.mrf.mxu0
        %v3799 = vadd.f32 %v3686, %v3798
        %3800 = vmatmul.f32.gmra.mxu0 %v3046
        %v3801 = vpop.f32.mrf.mxu0
        %v3802 = vadd.f32 %v3689, %v3801
        %3803 = vmatmul.f32.gmra.mxu0 %v3055
        %v3804 = vpop.f32.mrf.mxu0
        %v3805 = vadd.f32 %v3692, %v3804
        %3806 = vmatmul.f32.gmra.mxu0 %v3064
        %v3807 = vpop.f32.mrf.mxu0
        %v3808 = vadd.f32 %v3695, %v3807
        %3809 = vmatmul.f32.gmra.mxu0 %v3073
        %v3810 = vpop.f32.mrf.mxu0
        %v3811 = vadd.f32 %v3698, %v3810
        %3812 = vmatmul.f32.gmra.mxu0 %v3082
        %v3813 = vpop.f32.mrf.mxu0
        %v3814 = vadd.f32 %v3701, %v3813
        %3815 = vmatmul.f32.gmra.mxu0 %v3091
        %v3816 = vpop.f32.mrf.mxu0
        %v3817 = vadd.f32 %v3704, %v3816
        %3818 = vmatmul.f32.gmra.mxu0 %v3100
        %v3819 = vpop.f32.mrf.mxu0
        %v3820 = vadd.f32 %v3707, %v3819
        %3821 = vmatmul.f32.gmra.mxu0 %v3109
        %v3822 = vpop.f32.mrf.mxu0
        %v3823 = vadd.f32 %v3710, %v3822
        %3824 = vmatmul.f32.gmra.mxu0 %v3118
        %v3825 = vpop.f32.mrf.mxu0
        %v3826 = vadd.f32 %v3713, %v3825
        %3827 = vmatmul.f32.gmra.mxu0 %v3127
        %v3828 = vpop.f32.mrf.mxu0
        %v3829 = vadd.f32 %v3716, %v3828
        %3830 = vmatmul.f32.gmra.mxu0 %v3136
        %v3831 = vpop.f32.mrf.mxu0
        %v3832 = vadd.f32 %v3719, %v3831
        %3833 = vmatmul.f32.gmra.mxu0 %v3145
        %v3834 = vpop.f32.mrf.mxu0
        %v3835 = vadd.f32 %v3722, %v3834
        %3836 = vmatmul.f32.gmra.mxu0 %v3154
        %v3837 = vpop.f32.mrf.mxu0
        %v3838 = vadd.f32 %v3725, %v3837
        %3839 = vmatmul.f32.gmra.mxu0 %v3163
        %v3840 = vpop.f32.mrf.mxu0
        %v3841 = vadd.f32 %v3728, %v3840
        %3842 = vmatmul.f32.gmra.mxu0 %v3172
        %v3843 = vpop.f32.mrf.mxu0
        %v3844 = vadd.f32 %v3731, %v3843
        %3845 = vmatmul.f32.gmra.mxu0 %v3181
        %v3846 = vpop.f32.mrf.mxu0
        %v3847 = vadd.f32 %v3734, %v3846
        %3848 = vmatmul.f32.gmra.mxu0 %v3190
        %v3849 = vpop.f32.mrf.mxu0
        %v3850 = vadd.f32 %v3737, %v3849
        %3851 = vmatmul.f32.gmra.mxu0 %v3199
        %v3852 = vpop.f32.mrf.mxu0
        %v3853 = vadd.f32 %v3740, %v3852
        %3854 = vmatmul.f32.gmra.mxu0 %v3208
        %v3855 = vpop.f32.mrf.mxu0
        %v3856 = vadd.f32 %v3743, %v3855
        %3857 = vmatmul.f32.gmra.mxu0 %v3217
        %v3858 = vpop.f32.mrf.mxu0
        %v3859 = vadd.f32 %v3746, %v3858
        %3860 = vmatmul.f32.gmra.mxu0 %v3226
        %v3861 = vpop.f32.mrf.mxu0
        %v3862 = vadd.f32 %v3749, %v3861
        %3863 = vmatmul.f32.gmra.mxu0 %v3235
        %v3864 = vpop.f32.mrf.mxu0
        %v3865 = vadd.f32 %v3752, %v3864
        %3866 = vmatmul.f32.gmra.mxu0 %v3244
        %v3867 = vpop.f32.mrf.mxu0
        %v3868 = vadd.f32 %v3755, %v3867
        %3869 = vmatmul.f32.gmra.mxu0 %v3253
        %v3870 = vpop.f32.mrf.mxu0
        %v3871 = vadd.f32 %v3758, %v3870
        %3872 = vmatmul.f32.gmra.mxu0 %v3262
        %v3873 = vpop.f32.mrf.mxu0
        %v3874 = vadd.f32 %v3761, %v3873
        %3875 = vmatmul.f32.gmra.mxu0 %v3271
        %v3876 = vpop.f32.mrf.mxu0
        %v3877 = vadd.f32 %v3764, %v3876
        %3878 = vmatmul.f32.gmra.mxu0 %v3280
        %v3879 = vpop.f32.mrf.mxu0
        %v3880 = vadd.f32 %v3767, %v3879
        %3881 = vdwg.mxu0
        %3882 = vmatpush.msra.mxu0 %v3365
        %3883 = vmatpush.msra.mxu0 %v3364
        %3884 = vmatpush.msra.mxu0 %v3363
        %3885 = vmatpush.msra.mxu0 %v3362
        %3886 = vmatpush.msra.mxu0 %v3361
        %3887 = vmatpush.msra.mxu0 %v3360
        %3888 = vmatpush.msra.mxu0 %v3359
        %3889 = vmatpush.msra.mxu0 %v3358
        %3890 = vmatpush.msra.mxu0 %v3357
        %3891 = vmatpush.msra.mxu0 %v3356
        %3892 = vmatpush.msra.mxu0 %v3355
        %3893 = vmatpush.msra.mxu0 %v3354
        %3894 = vmatpush.msra.mxu0 %v3353
        %3895 = vmatpush.msra.mxu0 %v3352
        %3896 = vmatpush.msra.mxu0 %v3351
        %3897 = vmatpush.msra.mxu0 %v3350
        %3898 = vmatmul.f32.gmra.mxu0 %v3002
        %v3899 = vpop.f32.mrf.mxu0
        %v3900 = vadd.f32 %v3787, %v3899
        %3901 = vmatmul.f32.gmra.mxu0 %v3011
        %v3902 = vpop.f32.mrf.mxu0
        %v3903 = vadd.f32 %v3790, %v3902
        %3904 = vmatmul.f32.gmra.mxu0 %v3020
        %v3905 = vpop.f32.mrf.mxu0
        %v3906 = vadd.f32 %v3793, %v3905
        %3907 = vmatmul.f32.gmra.mxu0 %v3029
        %v3908 = vpop.f32.mrf.mxu0
        %v3909 = vadd.f32 %v3796, %v3908
        %3910 = vmatmul.f32.gmra.mxu0 %v3038
        %v3911 = vpop.f32.mrf.mxu0
        %v3912 = vadd.f32 %v3799, %v3911
        %3913 = vmatmul.f32.gmra.mxu0 %v3047
        %v3914 = vpop.f32.mrf.mxu0
        %v3915 = vadd.f32 %v3802, %v3914
        %3916 = vmatmul.f32.gmra.mxu0 %v3056
        %v3917 = vpop.f32.mrf.mxu0
        %v3918 = vadd.f32 %v3805, %v3917
        %3919 = vmatmul.f32.gmra.mxu0 %v3065
        %v3920 = vpop.f32.mrf.mxu0
        %v3921 = vadd.f32 %v3808, %v3920
        %3922 = vmatmul.f32.gmra.mxu0 %v3074
        %v3923 = vpop.f32.mrf.mxu0
        %v3924 = vadd.f32 %v3811, %v3923
        %3925 = vmatmul.f32.gmra.mxu0 %v3083
        %v3926 = vpop.f32.mrf.mxu0
        %v3927 = vadd.f32 %v3814, %v3926
        %3928 = vmatmul.f32.gmra.mxu0 %v3092
        %v3929 = vpop.f32.mrf.mxu0
        %v3930 = vadd.f32 %v3817, %v3929
        %3931 = vmatmul.f32.gmra.mxu0 %v3101
        %v3932 = vpop.f32.mrf.mxu0
        %v3933 = vadd.f32 %v3820, %v3932
        %3934 = vmatmul.f32.gmra.mxu0 %v3110
        %v3935 = vpop.f32.mrf.mxu0
        %v3936 = vadd.f32 %v3823, %v3935
        %3937 = vmatmul.f32.gmra.mxu0 %v3119
        %v3938 = vpop.f32.mrf.mxu0
        %v3939 = vadd.f32 %v3826, %v3938
        %3940 = vmatmul.f32.gmra.mxu0 %v3128
        %v3941 = vpop.f32.mrf.mxu0
        %v3942 = vadd.f32 %v3829, %v3941
        %3943 = vmatmul.f32.gmra.mxu0 %v3137
        %v3944 = vpop.f32.mrf.mxu0
        %v3945 = vadd.f32 %v3832, %v3944
        %3946 = vmatmul.f32.gmra.mxu0 %v3146
        %v3947 = vpop.f32.mrf.mxu0
        %v3948 = vadd.f32 %v3835, %v3947
        %3949 = vmatmul.f32.gmra.mxu0 %v3155
        %v3950 = vpop.f32.mrf.mxu0
        %v3951 = vadd.f32 %v3838, %v3950
        %3952 = vmatmul.f32.gmra.mxu0 %v3164
        %v3953 = vpop.f32.mrf.mxu0
        %v3954 = vadd.f32 %v3841, %v3953
        %3955 = vmatmul.f32.gmra.mxu0 %v3173
        %v3956 = vpop.f32.mrf.mxu0
        %v3957 = vadd.f32 %v3844, %v3956
        %3958 = vmatmul.f32.gmra.mxu0 %v3182
        %v3959 = vpop.f32.mrf.mxu0
        %v3960 = vadd.f32 %v3847, %v3959
        %3961 = vmatmul.f32.gmra.mxu0 %v3191
        %v3962 = vpop.f32.mrf.mxu0
        %v3963 = vadd.f32 %v3850, %v3962
        %3964 = vmatmul.f32.gmra.mxu0 %v3200
        %v3965 = vpop.f32.mrf.mxu0
        %v3966 = vadd.f32 %v3853, %v3965
        %3967 = vmatmul.f32.gmra.mxu0 %v3209
        %v3968 = vpop.f32.mrf.mxu0
        %v3969 = vadd.f32 %v3856, %v3968
        %3970 = vmatmul.f32.gmra.mxu0 %v3218
        %v3971 = vpop.f32.mrf.mxu0
        %v3972 = vadd.f32 %v3859, %v3971
        %3973 = vmatmul.f32.gmra.mxu0 %v3227
        %v3974 = vpop.f32.mrf.mxu0
        %v3975 = vadd.f32 %v3862, %v3974
        %3976 = vmatmul.f32.gmra.mxu0 %v3236
        %v3977 = vpop.f32.mrf.mxu0
        %v3978 = vadd.f32 %v3865, %v3977
        %3979 = vmatmul.f32.gmra.mxu0 %v3245
        %v3980 = vpop.f32.mrf.mxu0
        %v3981 = vadd.f32 %v3868, %v3980
        %3982 = vmatmul.f32.gmra.mxu0 %v3254
        %v3983 = vpop.f32.mrf.mxu0
        %v3984 = vadd.f32 %v3871, %v3983
        %3985 = vmatmul.f32.gmra.mxu0 %v3263
        %v3986 = vpop.f32.mrf.mxu0
        %v3987 = vadd.f32 %v3874, %v3986
        %3988 = vmatmul.f32.gmra.mxu0 %v3272
        %v3989 = vpop.f32.mrf.mxu0
        %v3990 = vadd.f32 %v3877, %v3989
        %3991 = vmatmul.f32.gmra.mxu0 %v3281
        %v3992 = vpop.f32.mrf.mxu0
        %v3993 = vadd.f32 %v3880, %v3992
        %3994 = vdwg.mxu0
        %3995 = vmatpush.msra.mxu0 %v3381
        %3996 = vmatpush.msra.mxu0 %v3380
        %3997 = vmatpush.msra.mxu0 %v3379
        %3998 = vmatpush.msra.mxu0 %v3378
        %3999 = vmatpush.msra.mxu0 %v3377
        %4000 = vmatpush.msra.mxu0 %v3376
        %4001 = vmatpush.msra.mxu0 %v3375
        %4002 = vmatpush.msra.mxu0 %v3374
        %4003 = vmatpush.msra.mxu0 %v3373
        %4004 = vmatpush.msra.mxu0 %v3372
        %4005 = vmatpush.msra.mxu0 %v3371
        %4006 = vmatpush.msra.mxu0 %v3370
        %4007 = vmatpush.msra.mxu0 %v3369
        %4008 = vmatpush.msra.mxu0 %v3368
        %4009 = vmatpush.msra.mxu0 %v3367
        %4010 = vmatpush.msra.mxu0 %v3366
        %4011 = vmatmul.f32.gmra.mxu0 %v3003
        %v4012 = vpop.f32.mrf.mxu0
        %v4013 = vadd.f32 %v3900, %v4012
        %4014 = vmatmul.f32.gmra.mxu0 %v3012
        %v4015 = vpop.f32.mrf.mxu0
        %v4016 = vadd.f32 %v3903, %v4015
        %4017 = vmatmul.f32.gmra.mxu0 %v3021
        %v4018 = vpop.f32.mrf.mxu0
        %v4019 = vadd.f32 %v3906, %v4018
        %4020 = vmatmul.f32.gmra.mxu0 %v3030
        %v4021 = vpop.f32.mrf.mxu0
        %v4022 = vadd.f32 %v3909, %v4021
        %4023 = vmatmul.f32.gmra.mxu0 %v3039
        %v4024 = vpop.f32.mrf.mxu0
        %v4025 = vadd.f32 %v3912, %v4024
        %4026 = vmatmul.f32.gmra.mxu0 %v3048
        %v4027 = vpop.f32.mrf.mxu0
        %v4028 = vadd.f32 %v3915, %v4027
        %4029 = vmatmul.f32.gmra.mxu0 %v3057
        %v4030 = vpop.f32.mrf.mxu0
        %v4031 = vadd.f32 %v3918, %v4030
        %4032 = vmatmul.f32.gmra.mxu0 %v3066
        %v4033 = vpop.f32.mrf.mxu0
        %v4034 = vadd.f32 %v3921, %v4033
        %4035 = vmatmul.f32.gmra.mxu0 %v3075
        %v4036 = vpop.f32.mrf.mxu0
        %v4037 = vadd.f32 %v3924, %v4036
        %4038 = vmatmul.f32.gmra.mxu0 %v3084
        %v4039 = vpop.f32.mrf.mxu0
        %v4040 = vadd.f32 %v3927, %v4039
        %4041 = vmatmul.f32.gmra.mxu0 %v3093
        %v4042 = vpop.f32.mrf.mxu0
        %v4043 = vadd.f32 %v3930, %v4042
        %4044 = vmatmul.f32.gmra.mxu0 %v3102
        %v4045 = vpop.f32.mrf.mxu0
        %v4046 = vadd.f32 %v3933, %v4045
        %4047 = vmatmul.f32.gmra.mxu0 %v3111
        %v4048 = vpop.f32.mrf.mxu0
        %v4049 = vadd.f32 %v3936, %v4048
        %4050 = vmatmul.f32.gmra.mxu0 %v3120
        %v4051 = vpop.f32.mrf.mxu0
        %v4052 = vadd.f32 %v3939, %v4051
        %4053 = vmatmul.f32.gmra.mxu0 %v3129
        %v4054 = vpop.f32.mrf.mxu0
        %v4055 = vadd.f32 %v3942, %v4054
        %4056 = vmatmul.f32.gmra.mxu0 %v3138
        %v4057 = vpop.f32.mrf.mxu0
        %v4058 = vadd.f32 %v3945, %v4057
        %4059 = vmatmul.f32.gmra.mxu0 %v3147
        %v4060 = vpop.f32.mrf.mxu0
        %v4061 = vadd.f32 %v3948, %v4060
        %4062 = vmatmul.f32.gmra.mxu0 %v3156
        %v4063 = vpop.f32.mrf.mxu0
        %v4064 = vadd.f32 %v3951, %v4063
        %4065 = vmatmul.f32.gmra.mxu0 %v3165
        %v4066 = vpop.f32.mrf.mxu0
        %v4067 = vadd.f32 %v3954, %v4066
        %4068 = vmatmul.f32.gmra.mxu0 %v3174
        %v4069 = vpop.f32.mrf.mxu0
        %v4070 = vadd.f32 %v3957, %v4069
        %4071 = vmatmul.f32.gmra.mxu0 %v3183
        %v4072 = vpop.f32.mrf.mxu0
        %v4073 = vadd.f32 %v3960, %v4072
        %4074 = vmatmul.f32.gmra.mxu0 %v3192
        %v4075 = vpop.f32.mrf.mxu0
        %v4076 = vadd.f32 %v3963, %v4075
        %4077 = vmatmul.f32.gmra.mxu0 %v3201
        %v4078 = vpop.f32.mrf.mxu0
        %v4079 = vadd.f32 %v3966, %v4078
        %4080 = vmatmul.f32.gmra.mxu0 %v3210
        %v4081 = vpop.f32.mrf.mxu0
        %v4082 = vadd.f32 %v3969, %v4081
        %4083 = vmatmul.f32.gmra.mxu0 %v3219
        %v4084 = vpop.f32.mrf.mxu0
        %v4085 = vadd.f32 %v3972, %v4084
        %4086 = vmatmul.f32.gmra.mxu0 %v3228
        %v4087 = vpop.f32.mrf.mxu0
        %v4088 = vadd.f32 %v3975, %v4087
        %4089 = vmatmul.f32.gmra.mxu0 %v3237
        %v4090 = vpop.f32.mrf.mxu0
        %v4091 = vadd.f32 %v3978, %v4090
        %4092 = vmatmul.f32.gmra.mxu0 %v3246
        %v4093 = vpop.f32.mrf.mxu0
        %v4094 = vadd.f32 %v3981, %v4093
        %4095 = vmatmul.f32.gmra.mxu0 %v3255
        %v4096 = vpop.f32.mrf.mxu0
        %v4097 = vadd.f32 %v3984, %v4096
        %4098 = vmatmul.f32.gmra.mxu0 %v3264
        %v4099 = vpop.f32.mrf.mxu0
        %v4100 = vadd.f32 %v3987, %v4099
        %4101 = vmatmul.f32.gmra.mxu0 %v3273
        %v4102 = vpop.f32.mrf.mxu0
        %v4103 = vadd.f32 %v3990, %v4102
        %4104 = vmatmul.f32.gmra.mxu0 %v3282
        %v4105 = vpop.f32.mrf.mxu0
        %v4106 = vadd.f32 %v3993, %v4105
        %4107 = vdwg.mxu0
        %4108 = vmatpush.msra.mxu0 %v3397
        %4109 = vmatpush.msra.mxu0 %v3396
        %4110 = vmatpush.msra.mxu0 %v3395
        %4111 = vmatpush.msra.mxu0 %v3394
        %4112 = vmatpush.msra.mxu0 %v3393
        %4113 = vmatpush.msra.mxu0 %v3392
        %4114 = vmatpush.msra.mxu0 %v3391
        %4115 = vmatpush.msra.mxu0 %v3390
        %4116 = vmatpush.msra.mxu0 %v3389
        %4117 = vmatpush.msra.mxu0 %v3388
        %4118 = vmatpush.msra.mxu0 %v3387
        %4119 = vmatpush.msra.mxu0 %v3386
        %4120 = vmatpush.msra.mxu0 %v3385
        %4121 = vmatpush.msra.mxu0 %v3384
        %4122 = vmatpush.msra.mxu0 %v3383
        %4123 = vmatpush.msra.mxu0 %v3382
        %4124 = vmatmul.f32.gmra.mxu0 %v3004
        %v4125 = vpop.f32.mrf.mxu0
        %v4126 = vadd.f32 %v4013, %v4125
        %4127 = vmatmul.f32.gmra.mxu0 %v3013
        %v4128 = vpop.f32.mrf.mxu0
        %v4129 = vadd.f32 %v4016, %v4128
        %4130 = vmatmul.f32.gmra.mxu0 %v3022
        %v4131 = vpop.f32.mrf.mxu0
        %v4132 = vadd.f32 %v4019, %v4131
        %4133 = vmatmul.f32.gmra.mxu0 %v3031
        %v4134 = vpop.f32.mrf.mxu0
        %v4135 = vadd.f32 %v4022, %v4134
        %4136 = vmatmul.f32.gmra.mxu0 %v3040
        %v4137 = vpop.f32.mrf.mxu0
        %v4138 = vadd.f32 %v4025, %v4137
        %4139 = vmatmul.f32.gmra.mxu0 %v3049
        %v4140 = vpop.f32.mrf.mxu0
        %v4141 = vadd.f32 %v4028, %v4140
        %4142 = vmatmul.f32.gmra.mxu0 %v3058
        %v4143 = vpop.f32.mrf.mxu0
        %v4144 = vadd.f32 %v4031, %v4143
        %4145 = vmatmul.f32.gmra.mxu0 %v3067
        %v4146 = vpop.f32.mrf.mxu0
        %v4147 = vadd.f32 %v4034, %v4146
        %4148 = vmatmul.f32.gmra.mxu0 %v3076
        %v4149 = vpop.f32.mrf.mxu0
        %v4150 = vadd.f32 %v4037, %v4149
        %4151 = vmatmul.f32.gmra.mxu0 %v3085
        %v4152 = vpop.f32.mrf.mxu0
        %v4153 = vadd.f32 %v4040, %v4152
        %4154 = vmatmul.f32.gmra.mxu0 %v3094
        %v4155 = vpop.f32.mrf.mxu0
        %v4156 = vadd.f32 %v4043, %v4155
        %4157 = vmatmul.f32.gmra.mxu0 %v3103
        %v4158 = vpop.f32.mrf.mxu0
        %v4159 = vadd.f32 %v4046, %v4158
        %4160 = vmatmul.f32.gmra.mxu0 %v3112
        %v4161 = vpop.f32.mrf.mxu0
        %v4162 = vadd.f32 %v4049, %v4161
        %4163 = vmatmul.f32.gmra.mxu0 %v3121
        %v4164 = vpop.f32.mrf.mxu0
        %v4165 = vadd.f32 %v4052, %v4164
        %4166 = vmatmul.f32.gmra.mxu0 %v3130
        %v4167 = vpop.f32.mrf.mxu0
        %v4168 = vadd.f32 %v4055, %v4167
        %4169 = vmatmul.f32.gmra.mxu0 %v3139
        %v4170 = vpop.f32.mrf.mxu0
        %v4171 = vadd.f32 %v4058, %v4170
        %4172 = vmatmul.f32.gmra.mxu0 %v3148
        %v4173 = vpop.f32.mrf.mxu0
        %v4174 = vadd.f32 %v4061, %v4173
        %4175 = vmatmul.f32.gmra.mxu0 %v3157
        %v4176 = vpop.f32.mrf.mxu0
        %v4177 = vadd.f32 %v4064, %v4176
        %4178 = vmatmul.f32.gmra.mxu0 %v3166
        %v4179 = vpop.f32.mrf.mxu0
        %v4180 = vadd.f32 %v4067, %v4179
        %4181 = vmatmul.f32.gmra.mxu0 %v3175
        %v4182 = vpop.f32.mrf.mxu0
        %v4183 = vadd.f32 %v4070, %v4182
        %4184 = vmatmul.f32.gmra.mxu0 %v3184
        %v4185 = vpop.f32.mrf.mxu0
        %v4186 = vadd.f32 %v4073, %v4185
        %4187 = vmatmul.f32.gmra.mxu0 %v3193
        %v4188 = vpop.f32.mrf.mxu0
        %v4189 = vadd.f32 %v4076, %v4188
        %4190 = vmatmul.f32.gmra.mxu0 %v3202
        %v4191 = vpop.f32.mrf.mxu0
        %v4192 = vadd.f32 %v4079, %v4191
        %4193 = vmatmul.f32.gmra.mxu0 %v3211
        %v4194 = vpop.f32.mrf.mxu0
        %v4195 = vadd.f32 %v4082, %v4194
        %4196 = vmatmul.f32.gmra.mxu0 %v3220
        %v4197 = vpop.f32.mrf.mxu0
        %v4198 = vadd.f32 %v4085, %v4197
        %4199 = vmatmul.f32.gmra.mxu0 %v3229
        %v4200 = vpop.f32.mrf.mxu0
        %v4201 = vadd.f32 %v4088, %v4200
        %4202 = vmatmul.f32.gmra.mxu0 %v3238
        %v4203 = vpop.f32.mrf.mxu0
        %v4204 = vadd.f32 %v4091, %v4203
        %4205 = vmatmul.f32.gmra.mxu0 %v3247
        %v4206 = vpop.f32.mrf.mxu0
        %v4207 = vadd.f32 %v4094, %v4206
        %4208 = vmatmul.f32.gmra.mxu0 %v3256
        %v4209 = vpop.f32.mrf.mxu0
        %v4210 = vadd.f32 %v4097, %v4209
        %4211 = vmatmul.f32.gmra.mxu0 %v3265
        %v4212 = vpop.f32.mrf.mxu0
        %v4213 = vadd.f32 %v4100, %v4212
        %4214 = vmatmul.f32.gmra.mxu0 %v3274
        %v4215 = vpop.f32.mrf.mxu0
        %v4216 = vadd.f32 %v4103, %v4215
        %4217 = vmatmul.f32.gmra.mxu0 %v3283
        %v4218 = vpop.f32.mrf.mxu0
        %v4219 = vadd.f32 %v4106, %v4218
        %4220 = vdwg.mxu0
        %4221 = vmatpush.msra.mxu0 %v3413
        %4222 = vmatpush.msra.mxu0 %v3412
        %4223 = vmatpush.msra.mxu0 %v3411
        %4224 = vmatpush.msra.mxu0 %v3410
        %4225 = vmatpush.msra.mxu0 %v3409
        %4226 = vmatpush.msra.mxu0 %v3408
        %4227 = vmatpush.msra.mxu0 %v3407
        %4228 = vmatpush.msra.mxu0 %v3406
        %4229 = vmatpush.msra.mxu0 %v3405
        %4230 = vmatpush.msra.mxu0 %v3404
        %4231 = vmatpush.msra.mxu0 %v3403
        %4232 = vmatpush.msra.mxu0 %v3402
        %4233 = vmatpush.msra.mxu0 %v3401
        %4234 = vmatpush.msra.mxu0 %v3400
        %4235 = vmatpush.msra.mxu0 %v3399
        %4236 = vmatpush.msra.mxu0 %v3398
        %4237 = vmatmul.f32.gmra.mxu0 %v3005
        %v4238 = vpop.f32.mrf.mxu0
        %v4239 = vadd.f32 %v4126, %v4238
        %4240 = vmatmul.f32.gmra.mxu0 %v3014
        %v4241 = vpop.f32.mrf.mxu0
        %v4242 = vadd.f32 %v4129, %v4241
        %4243 = vmatmul.f32.gmra.mxu0 %v3023
        %v4244 = vpop.f32.mrf.mxu0
        %v4245 = vadd.f32 %v4132, %v4244
        %4246 = vmatmul.f32.gmra.mxu0 %v3032
        %v4247 = vpop.f32.mrf.mxu0
        %v4248 = vadd.f32 %v4135, %v4247
        %4249 = vmatmul.f32.gmra.mxu0 %v3041
        %v4250 = vpop.f32.mrf.mxu0
        %v4251 = vadd.f32 %v4138, %v4250
        %4252 = vmatmul.f32.gmra.mxu0 %v3050
        %v4253 = vpop.f32.mrf.mxu0
        %v4254 = vadd.f32 %v4141, %v4253
        %4255 = vmatmul.f32.gmra.mxu0 %v3059
        %v4256 = vpop.f32.mrf.mxu0
        %v4257 = vadd.f32 %v4144, %v4256
        %4258 = vmatmul.f32.gmra.mxu0 %v3068
        %v4259 = vpop.f32.mrf.mxu0
        %v4260 = vadd.f32 %v4147, %v4259
        %4261 = vmatmul.f32.gmra.mxu0 %v3077
        %v4262 = vpop.f32.mrf.mxu0
        %v4263 = vadd.f32 %v4150, %v4262
        %4264 = vmatmul.f32.gmra.mxu0 %v3086
        %v4265 = vpop.f32.mrf.mxu0
        %v4266 = vadd.f32 %v4153, %v4265
        %4267 = vmatmul.f32.gmra.mxu0 %v3095
        %v4268 = vpop.f32.mrf.mxu0
        %v4269 = vadd.f32 %v4156, %v4268
        %4270 = vmatmul.f32.gmra.mxu0 %v3104
        %v4271 = vpop.f32.mrf.mxu0
        %v4272 = vadd.f32 %v4159, %v4271
        %4273 = vmatmul.f32.gmra.mxu0 %v3113
        %v4274 = vpop.f32.mrf.mxu0
        %v4275 = vadd.f32 %v4162, %v4274
        %4276 = vmatmul.f32.gmra.mxu0 %v3122
        %v4277 = vpop.f32.mrf.mxu0
        %v4278 = vadd.f32 %v4165, %v4277
        %4279 = vmatmul.f32.gmra.mxu0 %v3131
        %v4280 = vpop.f32.mrf.mxu0
        %v4281 = vadd.f32 %v4168, %v4280
        %4282 = vmatmul.f32.gmra.mxu0 %v3140
        %v4283 = vpop.f32.mrf.mxu0
        %v4284 = vadd.f32 %v4171, %v4283
        %4285 = vmatmul.f32.gmra.mxu0 %v3149
        %v4286 = vpop.f32.mrf.mxu0
        %v4287 = vadd.f32 %v4174, %v4286
        %4288 = vmatmul.f32.gmra.mxu0 %v3158
        %v4289 = vpop.f32.mrf.mxu0
        %v4290 = vadd.f32 %v4177, %v4289
        %4291 = vmatmul.f32.gmra.mxu0 %v3167
        %v4292 = vpop.f32.mrf.mxu0
        %v4293 = vadd.f32 %v4180, %v4292
        %4294 = vmatmul.f32.gmra.mxu0 %v3176
        %v4295 = vpop.f32.mrf.mxu0
        %v4296 = vadd.f32 %v4183, %v4295
        %4297 = vmatmul.f32.gmra.mxu0 %v3185
        %v4298 = vpop.f32.mrf.mxu0
        %v4299 = vadd.f32 %v4186, %v4298
        %4300 = vmatmul.f32.gmra.mxu0 %v3194
        %v4301 = vpop.f32.mrf.mxu0
        %v4302 = vadd.f32 %v4189, %v4301
        %4303 = vmatmul.f32.gmra.mxu0 %v3203
        %v4304 = vpop.f32.mrf.mxu0
        %v4305 = vadd.f32 %v4192, %v4304
        %4306 = vmatmul.f32.gmra.mxu0 %v3212
        %v4307 = vpop.f32.mrf.mxu0
        %v4308 = vadd.f32 %v4195, %v4307
        %4309 = vmatmul.f32.gmra.mxu0 %v3221
        %v4310 = vpop.f32.mrf.mxu0
        %v4311 = vadd.f32 %v4198, %v4310
        %4312 = vmatmul.f32.gmra.mxu0 %v3230
        %v4313 = vpop.f32.mrf.mxu0
        %v4314 = vadd.f32 %v4201, %v4313
        %4315 = vmatmul.f32.gmra.mxu0 %v3239
        %v4316 = vpop.f32.mrf.mxu0
        %v4317 = vadd.f32 %v4204, %v4316
        %4318 = vmatmul.f32.gmra.mxu0 %v3248
        %v4319 = vpop.f32.mrf.mxu0
        %v4320 = vadd.f32 %v4207, %v4319
        %4321 = vmatmul.f32.gmra.mxu0 %v3257
        %v4322 = vpop.f32.mrf.mxu0
        %v4323 = vadd.f32 %v4210, %v4322
        %4324 = vmatmul.f32.gmra.mxu0 %v3266
        %v4325 = vpop.f32.mrf.mxu0
        %v4326 = vadd.f32 %v4213, %v4325
        %4327 = vmatmul.f32.gmra.mxu0 %v3275
        %v4328 = vpop.f32.mrf.mxu0
        %v4329 = vadd.f32 %v4216, %v4328
        %4330 = vmatmul.f32.gmra.mxu0 %v3284
        %v4331 = vpop.f32.mrf.mxu0
        %v4332 = vadd.f32 %v4219, %v4331
        %4333 = vdwg.mxu0
        %4334 = vmatpush.msra.mxu0 %v3429
        %4335 = vmatpush.msra.mxu0 %v3428
        %4336 = vmatpush.msra.mxu0 %v3427
        %4337 = vmatpush.msra.mxu0 %v3426
        %4338 = vmatpush.msra.mxu0 %v3425
        %4339 = vmatpush.msra.mxu0 %v3424
        %4340 = vmatpush.msra.mxu0 %v3423
        %4341 = vmatpush.msra.mxu0 %v3422
        %4342 = vmatpush.msra.mxu0 %v3421
        %4343 = vmatpush.msra.mxu0 %v3420
        %4344 = vmatpush.msra.mxu0 %v3419
        %4345 = vmatpush.msra.mxu0 %v3418
        %4346 = vmatpush.msra.mxu0 %v3417
        %4347 = vmatpush.msra.mxu0 %v3416
        %4348 = vmatpush.msra.mxu0 %v3415
        %4349 = vmatpush.msra.mxu0 %v3414
        %4350 = vmatmul.f32.gmra.mxu0 %v3006
        %v4351 = vpop.f32.mrf.mxu0
        %v4352 = vadd.f32 %v4239, %v4351
        %4353 = vmatmul.f32.gmra.mxu0 %v3015
        %v4354 = vpop.f32.mrf.mxu0
        %v4355 = vadd.f32 %v4242, %v4354
        %4356 = vmatmul.f32.gmra.mxu0 %v3024
        %v4357 = vpop.f32.mrf.mxu0
        %v4358 = vadd.f32 %v4245, %v4357
        %4359 = vmatmul.f32.gmra.mxu0 %v3033
        %v4360 = vpop.f32.mrf.mxu0
        %v4361 = vadd.f32 %v4248, %v4360
        %4362 = vmatmul.f32.gmra.mxu0 %v3042
        %v4363 = vpop.f32.mrf.mxu0
        %v4364 = vadd.f32 %v4251, %v4363
        %4365 = vmatmul.f32.gmra.mxu0 %v3051
        %v4366 = vpop.f32.mrf.mxu0
        %v4367 = vadd.f32 %v4254, %v4366
        %4368 = vmatmul.f32.gmra.mxu0 %v3060
        %v4369 = vpop.f32.mrf.mxu0
        %v4370 = vadd.f32 %v4257, %v4369
        %4371 = vmatmul.f32.gmra.mxu0 %v3069
        %v4372 = vpop.f32.mrf.mxu0
        %v4373 = vadd.f32 %v4260, %v4372
        %4374 = vmatmul.f32.gmra.mxu0 %v3078
        %v4375 = vpop.f32.mrf.mxu0
        %v4376 = vadd.f32 %v4263, %v4375
        %4377 = vmatmul.f32.gmra.mxu0 %v3087
        %v4378 = vpop.f32.mrf.mxu0
        %v4379 = vadd.f32 %v4266, %v4378
        %4380 = vmatmul.f32.gmra.mxu0 %v3096
        %v4381 = vpop.f32.mrf.mxu0
        %v4382 = vadd.f32 %v4269, %v4381
        %4383 = vmatmul.f32.gmra.mxu0 %v3105
        %v4384 = vpop.f32.mrf.mxu0
        %v4385 = vadd.f32 %v4272, %v4384
        %4386 = vmatmul.f32.gmra.mxu0 %v3114
        %v4387 = vpop.f32.mrf.mxu0
        %v4388 = vadd.f32 %v4275, %v4387
        %4389 = vmatmul.f32.gmra.mxu0 %v3123
        %v4390 = vpop.f32.mrf.mxu0
        %v4391 = vadd.f32 %v4278, %v4390
        %4392 = vmatmul.f32.gmra.mxu0 %v3132
        %v4393 = vpop.f32.mrf.mxu0
        %v4394 = vadd.f32 %v4281, %v4393
        %4395 = vmatmul.f32.gmra.mxu0 %v3141
        %v4396 = vpop.f32.mrf.mxu0
        %v4397 = vadd.f32 %v4284, %v4396
        %4398 = vmatmul.f32.gmra.mxu0 %v3150
        %v4399 = vpop.f32.mrf.mxu0
        %v4400 = vadd.f32 %v4287, %v4399
        %4401 = vmatmul.f32.gmra.mxu0 %v3159
        %v4402 = vpop.f32.mrf.mxu0
        %v4403 = vadd.f32 %v4290, %v4402
        %4404 = vmatmul.f32.gmra.mxu0 %v3168
        %v4405 = vpop.f32.mrf.mxu0
        %v4406 = vadd.f32 %v4293, %v4405
        %4407 = vmatmul.f32.gmra.mxu0 %v3177
        %v4408 = vpop.f32.mrf.mxu0
        %v4409 = vadd.f32 %v4296, %v4408
        %4410 = vmatmul.f32.gmra.mxu0 %v3186
        %v4411 = vpop.f32.mrf.mxu0
        %v4412 = vadd.f32 %v4299, %v4411
        %4413 = vmatmul.f32.gmra.mxu0 %v3195
        %v4414 = vpop.f32.mrf.mxu0
        %v4415 = vadd.f32 %v4302, %v4414
        %4416 = vmatmul.f32.gmra.mxu0 %v3204
        %v4417 = vpop.f32.mrf.mxu0
        %v4418 = vadd.f32 %v4305, %v4417
        %4419 = vmatmul.f32.gmra.mxu0 %v3213
        %v4420 = vpop.f32.mrf.mxu0
        %v4421 = vadd.f32 %v4308, %v4420
        %4422 = vmatmul.f32.gmra.mxu0 %v3222
        %v4423 = vpop.f32.mrf.mxu0
        %v4424 = vadd.f32 %v4311, %v4423
        %4425 = vmatmul.f32.gmra.mxu0 %v3231
        %v4426 = vpop.f32.mrf.mxu0
        %v4427 = vadd.f32 %v4314, %v4426
        %4428 = vmatmul.f32.gmra.mxu0 %v3240
        %v4429 = vpop.f32.mrf.mxu0
        %v4430 = vadd.f32 %v4317, %v4429
        %4431 = vmatmul.f32.gmra.mxu0 %v3249
        %v4432 = vpop.f32.mrf.mxu0
        %v4433 = vadd.f32 %v4320, %v4432
        %4434 = vmatmul.f32.gmra.mxu0 %v3258
        %v4435 = vpop.f32.mrf.mxu0
        %v4436 = vadd.f32 %v4323, %v4435
        %4437 = vmatmul.f32.gmra.mxu0 %v3267
        %v4438 = vpop.f32.mrf.mxu0
        %v4439 = vadd.f32 %v4326, %v4438
        %4440 = vmatmul.f32.gmra.mxu0 %v3276
        %v4441 = vpop.f32.mrf.mxu0
        %v4442 = vadd.f32 %v4329, %v4441
        %4443 = vmatmul.f32.gmra.mxu0 %v3285
        %v4444 = vpop.f32.mrf.mxu0
        %v4445 = vadd.f32 %v4332, %v4444
        %4446 = vdwg.mxu0
        %v4447 = vld [vmem:[%s190] sm:$0xff]
        %v4448 = vld [vmem:[%s190 + $0x8] sm:$0xff]
        %v4449 = vld [vmem:[%s190 + $0x10] sm:$0xff]
        %v4450 = vld [vmem:[%s190 + $0x18] sm:$0xff]
        %v4451 = vld [vmem:[%s190 + $0x20] sm:$0xff]
        %v4452 = vld [vmem:[%s190 + $0x28] sm:$0xff]
        %v4453 = vld [vmem:[%s190 + $0x30] sm:$0xff]
        %v4454 = vld [vmem:[%s190 + $0x38] sm:$0xff]
        %v4455 = vld [vmem:[%s190 + $0x40] sm:$0xff]
        %v4456 = vld [vmem:[%s190 + $0x48] sm:$0xff]
        %v4457 = vld [vmem:[%s190 + $0x50] sm:$0xff]
        %v4458 = vld [vmem:[%s190 + $0x58] sm:$0xff]
        %v4459 = vld [vmem:[%s190 + $0x60] sm:$0xff]
        %v4460 = vld [vmem:[%s190 + $0x68] sm:$0xff]
        %v4461 = vld [vmem:[%s190 + $0x70] sm:$0xff]
        %v4462 = vld [vmem:[%s190 + $0x78] sm:$0xff]
        %v4463 = vld [vmem:[%s190 + $0x80] sm:$0xff]
        %v4464 = vld [vmem:[%s190 + $0x88] sm:$0xff]
        %v4465 = vld [vmem:[%s190 + $0x90] sm:$0xff]
        %v4466 = vld [vmem:[%s190 + $0x98] sm:$0xff]
        %v4467 = vld [vmem:[%s190 + $0xa0] sm:$0xff]
        %v4468 = vld [vmem:[%s190 + $0xa8] sm:$0xff]
        %v4469 = vld [vmem:[%s190 + $0xb0] sm:$0xff]
        %v4470 = vld [vmem:[%s190 + $0xb8] sm:$0xff]
        %v4471 = vld [vmem:[%s190 + $0xc0] sm:$0xff]
        %v4472 = vld [vmem:[%s190 + $0xc8] sm:$0xff]
        %v4473 = vld [vmem:[%s190 + $0xd0] sm:$0xff]
        %v4474 = vld [vmem:[%s190 + $0xd8] sm:$0xff]
        %v4475 = vld [vmem:[%s190 + $0xe0] sm:$0xff]
        %v4476 = vld [vmem:[%s190 + $0xe8] sm:$0xff]
        %v4477 = vld [vmem:[%s190 + $0xf0] sm:$0xff]
        %v4478 = vld [vmem:[%s190 + $0xf8] sm:$0xff]
        %v4479 = vadd.f32 %v4352, %v4447
        %v4480 = vadd.f32 %v4355, %v4448
        %v4481 = vadd.f32 %v4358, %v4449
        %v4482 = vadd.f32 %v4361, %v4450
        %v4483 = vadd.f32 %v4364, %v4451
        %v4484 = vadd.f32 %v4367, %v4452
        %v4485 = vadd.f32 %v4370, %v4453
        %v4486 = vadd.f32 %v4373, %v4454
        %v4487 = vadd.f32 %v4376, %v4455
        %v4488 = vadd.f32 %v4379, %v4456
        %v4489 = vadd.f32 %v4382, %v4457
        %v4490 = vadd.f32 %v4385, %v4458
        %v4491 = vadd.f32 %v4388, %v4459
        %v4492 = vadd.f32 %v4391, %v4460
        %v4493 = vadd.f32 %v4394, %v4461
        %v4494 = vadd.f32 %v4397, %v4462
        %v4495 = vadd.f32 %v4400, %v4463
        %v4496 = vadd.f32 %v4403, %v4464
        %v4497 = vadd.f32 %v4406, %v4465
        %v4498 = vadd.f32 %v4409, %v4466
        %v4499 = vadd.f32 %v4412, %v4467
        %v4500 = vadd.f32 %v4415, %v4468
        %v4501 = vadd.f32 %v4418, %v4469
        %v4502 = vadd.f32 %v4421, %v4470
        %v4503 = vadd.f32 %v4424, %v4471
        %v4504 = vadd.f32 %v4427, %v4472
        %v4505 = vadd.f32 %v4430, %v4473
        %v4506 = vadd.f32 %v4433, %v4474
        %v4507 = vadd.f32 %v4436, %v4475
        %v4508 = vadd.f32 %v4439, %v4476
        %v4509 = vadd.f32 %v4442, %v4477
        %v4510 = vadd.f32 %v4445, %v4478
        %v4511 = vmax.f32 %v4479, 0.0
        %v4512 = vmax.f32 %v4480, 0.0
        %v4513 = vmax.f32 %v4481, 0.0
        %v4514 = vmax.f32 %v4482, 0.0
        %v4515 = vmax.f32 %v4483, 0.0
        %v4516 = vmax.f32 %v4484, 0.0
        %v4517 = vmax.f32 %v4485, 0.0
        %v4518 = vmax.f32 %v4486, 0.0
        %v4519 = vmax.f32 %v4487, 0.0
        %v4520 = vmax.f32 %v4488, 0.0
        %v4521 = vmax.f32 %v4489, 0.0
        %v4522 = vmax.f32 %v4490, 0.0
        %v4523 = vmax.f32 %v4491, 0.0
        %v4524 = vmax.f32 %v4492, 0.0
        %v4525 = vmax.f32 %v4493, 0.0
        %v4526 = vmax.f32 %v4494, 0.0
        %v4527 = vmax.f32 %v4495, 0.0
        %v4528 = vmax.f32 %v4496, 0.0
        %v4529 = vmax.f32 %v4497, 0.0
        %v4530 = vmax.f32 %v4498, 0.0
        %v4531 = vmax.f32 %v4499, 0.0
        %v4532 = vmax.f32 %v4500, 0.0
        %v4533 = vmax.f32 %v4501, 0.0
        %v4534 = vmax.f32 %v4502, 0.0
        %v4535 = vmax.f32 %v4503, 0.0
        %v4536 = vmax.f32 %v4504, 0.0
        %v4537 = vmax.f32 %v4505, 0.0
        %v4538 = vmax.f32 %v4506, 0.0
        %v4539 = vmax.f32 %v4507, 0.0
        %v4540 = vmax.f32 %v4508, 0.0
        %v4541 = vmax.f32 %v4509, 0.0
        %v4542 = vmax.f32 %v4510, 0.0
        %4543 = vst [vmem:[%s223] sm:$0xff] %v4511
        %4544 = vst [vmem:[%s223 + $0x8] sm:$0xff] %v4512
        %4545 = vst [vmem:[%s223 + $0x10] sm:$0xff] %v4513
        %4546 = vst [vmem:[%s223 + $0x18] sm:$0xff] %v4514
        %4547 = vst [vmem:[%s223 + $0x20] sm:$0xff] %v4515
        %4548 = vst [vmem:[%s223 + $0x28] sm:$0xff] %v4516
        %4549 = vst [vmem:[%s223 + $0x30] sm:$0xff] %v4517
        %4550 = vst [vmem:[%s223 + $0x38] sm:$0xff] %v4518
        %4551 = vst [vmem:[%s223 + $0x40] sm:$0xff] %v4519
        %4552 = vst [vmem:[%s223 + $0x48] sm:$0xff] %v4520
        %4553 = vst [vmem:[%s223 + $0x50] sm:$0xff] %v4521
        %4554 = vst [vmem:[%s223 + $0x58] sm:$0xff] %v4522
        %4555 = vst [vmem:[%s223 + $0x60] sm:$0xff] %v4523
        %4556 = vst [vmem:[%s223 + $0x68] sm:$0xff] %v4524
        %4557 = vst [vmem:[%s223 + $0x70] sm:$0xff] %v4525
        %4558 = vst [vmem:[%s223 + $0x78] sm:$0xff] %v4526
        %4559 = vst [vmem:[%s223 + $0x80] sm:$0xff] %v4527
        %4560 = vst [vmem:[%s223 + $0x88] sm:$0xff] %v4528
        %4561 = vst [vmem:[%s223 + $0x90] sm:$0xff] %v4529
        %4562 = vst [vmem:[%s223 + $0x98] sm:$0xff] %v4530
        %4563 = vst [vmem:[%s223 + $0xa0] sm:$0xff] %v4531
        %4564 = vst [vmem:[%s223 + $0xa8] sm:$0xff] %v4532
        %4565 = vst [vmem:[%s223 + $0xb0] sm:$0xff] %v4533
        %4566 = vst [vmem:[%s223 + $0xb8] sm:$0xff] %v4534
        %4567 = vst [vmem:[%s223 + $0xc0] sm:$0xff] %v4535
        %4568 = vst [vmem:[%s223 + $0xc8] sm:$0xff] %v4536
        %4569 = vst [vmem:[%s223 + $0xd0] sm:$0xff] %v4537
        %4570 = vst [vmem:[%s223 + $0xd8] sm:$0xff] %v4538
        %4571 = vst [vmem:[%s223 + $0xe0] sm:$0xff] %v4539
        %4572 = vst [vmem:[%s223 + $0xe8] sm:$0xff] %v4540
        %4573 = vst [vmem:[%s223 + $0xf0] sm:$0xff] %v4541
        %4574 = vst [vmem:[%s223 + $0xf8] sm:$0xff] %v4542
        %s4575 = sand.u32 %s97, 1
        %s4576 = scalar_lea.sflag [#allocation6], %s4575
        %s4577 = sand.u32 %s97, 1
        %s4578 = smul.addr %s4577, 256
        %s4579 = scalar_lea.vmem [#allocation10], %s4578
        // Predicated region
        $region45: #{tpu_custom_call.1} parent=31 // pred_check
          %p4580 = pneg %p107
        $region46: #{tpu_custom_call.1} parent=31 // pred_check_branch
          %4582 = sbr.rel (%p4580) target = $region48
        $region47: #{tpu_custom_call.1} parent=31 // pred_region
          %4584 = vsyncadd %s4576, 0
          %s4585 = smul.addr %s21, 32
          %s4586 = smul.addr %s4585, 8
          %s4587 = scalar_lea.hbm %s3, %s4586
          %s4588 = sshll.u32 %s4579, 4
          %s4589 = int_to_ptr.vmem [resolvable:$true] %s4588
          %s4590 = sshll.u32 %s4587, 4
          %s4591 = int_to_ptr.hbm [resolvable:$true] %s4590
          %4596 = dma.vmem_to_hbm [thread:$0]  %s4589, 4096, %s4591, %s4576, 128, 128, 8
        $region48: #{tpu_custom_call.1} parent=31 // pred_fallthru
          _
      $region32: #{tpu_custom_call.1} parent=5 // pred_fallthru
        _
      %p4597 = scmp.le.s32.totalorder 2, %s16
      // Predicated region
      $region49: #{tpu_custom_call.1} parent=5 // pred_check
        %p4598 = pneg %p4597
      $region50: #{tpu_custom_call.1} parent=5 // pred_check_branch
        %4600 = sbr.rel (%p4598) target = $region52
      $region51: #{tpu_custom_call.1} parent=5 // pred_region
        %s4601 = ssub.s32 %s16, 2
        // Predicated region
        $region53: #{tpu_custom_call.1} parent=51 // pred_check
          %p4602 = pneg %p113
        $region54: #{tpu_custom_call.1} parent=51 // pred_check_branch
          %4604 = sbr.rel (%p4602) target = $region56
        $region55: #{tpu_custom_call.1} parent=51 // pred_region
          %s4605 = sand.u32 %s98, 1
          %s4606 = scalar_lea.sflag [#allocation6], %s4605
          %s4607 = sand.u32 %s98, 1
          %s4608 = smul.addr %s4607, 256
          %s4609 = scalar_lea.vmem [#allocation10], %s4608
          %4611 = dma.done %s4606, 4096
        $region56: #{tpu_custom_call.1} parent=51 // pred_fallthru
          _
      $region52: #{tpu_custom_call.1} parent=5 // pred_fallthru
        _
    $region6: #{tpu_custom_call.1} parent=1 // loop_footer
      %s20 = sadd.s32 1, %s16
    $region7: #{tpu_custom_call.1} parent=1 // loop_footer_branch
      %15 = sbr.rel target = $region3
    $region8: #{tpu_custom_call.1} parent=1 // loop_exit
      _
    %4612 = vsyncpa [#allocation5], 1
    %s4613 = scalar_lea.sflag [#allocation5], 1
    %4614 = vsyncpa %s4613, 1
    %4615 = vsyncpa [#allocation8], 1
    %4616 = vsyncpa [#allocation6], 1
    %s4617 = scalar_lea.sflag [#allocation6], 1
    %4618 = vsyncpa %s4617, 1

</llo_original>
